<compile_context>
chip_gen: v7x
topology: tpu7x:2x2x1
jax: 0.10.0
libtpu: 0.0.40
codegen_flags: <defaults>
</compile_context>

<pallas_src>
import jax
import jax.numpy as jnp
from jax.experimental import pallas as pl
from jax.experimental.pallas import tpu as pltpu

LANE = 128


def _round_up(v, m):
    return ((v + m - 1) // m) * m


def _largest_divisor_leq(b, cap):
    g = 1
    for d in range(1, b + 1):
        if b % d == 0 and d <= cap:
            g = d
    return g


def _pick_group(b, per_item_bytes, budget_bytes):
    # Largest divisor of b whose per-grid-step footprint stays under budget; keep >= 2
    # grid steps when possible so a v7x megacore "parallel" split has work for both TCs.
    cap = max(1, budget_bytes // max(1, per_item_bytes))
    if b > 1:
        cap = min(cap, max(1, b // 2))
    return _largest_divisor_leq(b, cap)


def _fc1_tiling(k):
    # (tk, padded_K): K tile and zero-padded K so the fc1 accumulator pipeline engages even
    # when K (= N*N, e.g. 40000) is not a multiple of 128 / 2048.
    if k <= 2048:
        tk = _round_up(k, LANE)
        return tk, tk
    tk = 2048
    return tk, _round_up(k, tk)


# ----------------------------- Fused VGAE encoder kernel -----------------------------


def _encoder_kernel(a_ref, x_ref,
                    w11_ref, b11_ref, w12_ref, b12_ref,
                    w21_ref, b21_ref, w22_ref, b22_ref,
                    wc_ref, bc_ref, o_ref):
    # gin1 -> ReLU -> gin2 -> fused GCN(mu|logstd) for a group of G graphs; A read once,
    # intermediates stay in VMEM.  All matmuls bf16 operands, f32 accumulation.
    a = a_ref[...]                                  # (G, N, N) bf16, binary

    def gmm(adj_bf, feat_f32):
        # per-graph A @ H (batched dot_general, no explicit transpose)
        return jax.lax.dot_general(
            adj_bf, feat_f32.astype(jnp.bfloat16),
            (((2,), (1,)), ((0,), (0,))), preferred_element_type=jnp.float32)

    def fmm(feat_f32, w_bf):
        # shared-weight matmul; flatten (G,N,Cin)->(G*N,Cin) so the MXU M dim is filled
        gg, nn, cin = feat_f32.shape
        y = jnp.dot(feat_f32.reshape(gg * nn, cin).astype(jnp.bfloat16), w_bf,
                    preferred_element_type=jnp.float32)
        return y.reshape(gg, nn, w_bf.shape[1])

    def gin(feat, w1, b1, w2, b2):
        agg = gmm(a, feat) + feat                   # GINConv, eps = 0
        t = jnp.maximum(fmm(agg, w1[...]) + b1[...], 0.0)
        return fmm(t, w2[...]) + b2[...]

    h = x_ref[...]                                  # (G, N, Cp) f32
    h = jnp.maximum(gin(h, w11_ref, b11_ref, w12_ref, b12_ref), 0.0)   # inter-layer ReLU
    h = gin(h, w21_ref, b21_ref, w22_ref, b22_ref)                      # JK='last'

    # Fused conv_mu | conv_logstd GCN with algebraic symmetric normalization:
    #   y = d * (A @ (d * hw)) + (d*d) * hw,   d = rsqrt(rowsum(A) + 1)
    deg = jnp.sum(a.astype(jnp.float32), axis=2, keepdims=True) + 1.0   # (G, N, 1)
    d = jax.lax.rsqrt(deg)
    hw = fmm(h, wc_ref[...])                                            # (G, N, Cat)
    y = d * gmm(a, d * hw) + (d * d) * hw + bc_ref[...]
    o_ref[...] = jnp.maximum(y, 0.0)        # spec's VGAE applies .relu() to mu and logstd


def encoder_batched(adj_bf, x3, params):
    bg, n, cp = x3.shape
    cat = params["mu_ls_w"].shape[1]
    # per-graph VMEM estimate: bf16 A + a few f32 (N,Cp) live temporaries + f32 (N,Cat) out
    per_graph = n * n * 2 + 5 * n * cp * 4 + 2 * n * cat * 4
    g = _pick_group(bg, per_graph, 12 << 20)

    rep = lambda shape: pl.BlockSpec(shape, lambda i: (0, 0))
    return pl.pallas_call(
        _encoder_kernel,
        out_shape=jax.ShapeDtypeStruct((bg, n, cat), jnp.float32),
        grid=(bg // g,),
        in_specs=[
            pl.BlockSpec((g, n, n), lambda i: (i, 0, 0)),
            pl.BlockSpec((g, n, cp), lambda i: (i, 0, 0)),
            rep((cp, cp)), rep((1, cp)), rep((cp, cp)), rep((1, cp)),
            rep((cp, cp)), rep((1, cp)), rep((cp, cp)), rep((1, cp)),
            rep((cp, cat)), rep((1, cat)),
        ],
        out_specs=pl.BlockSpec((g, n, cat), lambda i: (i, 0, 0)),
        compiler_params=pltpu.CompilerParams(dimension_semantics=("parallel",)),
    )(adj_bf, x3,
      params["gin1_w1"], params["gin1_b1"], params["gin1_w2"], params["gin1_b2"],
      params["gin2_w1"], params["gin2_b1"], params["gin2_w2"], params["gin2_b2"],
      params["mu_ls_w"], params["mu_ls_b"])


# ----------------------------- z z^T kernel -----------------------------


def _zzt_kernel(z_ref, o_ref):
    z = z_ref[...].astype(jnp.bfloat16)             # (G, N, N)
    o_ref[...] = jax.lax.dot_general(
        z, z, (((2,), (2,)), ((0,), (0,))), preferred_element_type=jnp.float32)


def batched_zzt(z3):
    b, n, _ = z3.shape
    g = _pick_group(b, n * n * 16, 8 << 20)          # VMEM-budget derived group size
    return pl.pallas_call(
        _zzt_kernel,
        out_shape=jax.ShapeDtypeStruct((b, n, n), jnp.float32),
        grid=(b // g,),
        in_specs=[pl.BlockSpec((g, n, n), lambda i: (i, 0, 0))],
        out_specs=pl.BlockSpec((g, n, n), lambda i: (i, 0, 0)),
        compiler_params=pltpu.CompilerParams(dimension_semantics=("parallel",)),
    )(z3)


# ----------------------------- GraphClassifier kernels -----------------------------


def _fc1_masked_kernel(x_ref, m_ref, w_ref, b_ref, g_ref, beta_ref, o_ref, acc_ref):
    # grid = (H1 tiles [parallel], K tiles [arbitrary]);  acc += (x*mask) @ W over K,
    # finalize: BN_eval(relu(acc + b)).
    @pl.when(pl.program_id(1) == 0)
    def _():
        acc_ref[...] = jnp.zeros_like(acc_ref)

    m = m_ref[...].astype(jnp.float32).astype(jnp.bfloat16)   # int8 {0,1} -> bf16
    xm = x_ref[...] * m                                        # bf16
    acc_ref[...] += jnp.dot(xm, w_ref[...], preferred_element_type=jnp.float32)

    @pl.when(pl.program_id(1) == pl.num_programs(1) - 1)
    def _():
        y = jnp.maximum(acc_ref[...] + b_ref[...], 0.0)
        o_ref[...] = y * g_ref[...] + beta_ref[...]


def fc1_masked(x_bf, mask_i8, w_bf, b, g, beta):
    m, kp = x_bf.shape
    h1 = w_bf.shape[1]
    tk = 2048 if kp > 2048 else kp                   # kp is already a multiple of tk
    # Two column groups when possible -> v7x's 2 TCs each stream x/mask once.
    tn = h1 // 2 if (h1 % 2 == 0 and (h1 // 2) % LANE == 0) else h1
    return pl.pallas_call(
        _fc1_masked_kernel,
        out_shape=jax.ShapeDtypeStruct((m, h1), jnp.float32),
        grid=(h1 // tn, kp // tk),
        in_specs=[
            pl.BlockSpec((m, tk), lambda nn, kk: (0, kk)),
            pl.BlockSpec((m, tk), lambda nn, kk: (0, kk)),
            pl.BlockSpec((tk, tn), lambda nn, kk: (kk, nn)),
            pl.BlockSpec((1, tn), lambda nn, kk: (0, nn)),
            pl.BlockSpec((1, tn), lambda nn, kk: (0, nn)),
            pl.BlockSpec((1, tn), lambda nn, kk: (0, nn)),
        ],
        out_specs=pl.BlockSpec((m, tn), lambda nn, kk: (0, nn)),
        scratch_shapes=[pltpu.VMEM((m, tn), jnp.float32)],
        compiler_params=pltpu.CompilerParams(
            dimension_semantics=("parallel", "arbitrary")),
    )(x_bf, mask_i8, w_bf, b, g, beta)


def _head_kernel(x_ref, w2_ref, b2_ref, g2_ref, bt2_ref, w3_ref, b3_ref, o_ref):
    # fc2 + ReLU + BN2 + fc3 + log_softmax in one kernel (all operands tiny).
    h = jnp.dot(x_ref[...].astype(jnp.bfloat16), w2_ref[...],
                preferred_element_type=jnp.float32) + b2_ref[...]
    h = jnp.maximum(h, 0.0) * g2_ref[...] + bt2_ref[...]
    y = jnp.dot(h.astype(jnp.bfloat16), w3_ref[...],
                preferred_element_type=jnp.float32) + b3_ref[...]
    mx = jnp.max(y, axis=-1, keepdims=True)
    s = y - mx
    o_ref[...] = s - jnp.log(jnp.sum(jnp.exp(s), axis=-1, keepdims=True))


def mlp_head(x, w2, b2, g2, bt2, w3, b3):
    m, h1 = x.shape
    h2 = w2.shape[1]
    out = w3.shape[1]
    full = lambda shape: pl.BlockSpec(shape, lambda i: (0, 0))
    return pl.pallas_call(
        _head_kernel,
        out_shape=jax.ShapeDtypeStruct((m, out), jnp.float32),
        grid=(1,),
        in_specs=[full((m, h1)), full((h1, h2)), full((1, h2)), full((1, h2)),
                  full((1, h2)), full((h2, out)), full((1, out))],
        out_specs=full((m, out)),
    )(x, w2, b2, g2, bt2, w3, b3)


# ----------------------------- Parameters -----------------------------


def init_params(key, c, cp, cat, n, h1, h2, out_channels):
    ks = jax.random.split(key, 9)

    def w(k, shape):
        return jax.random.normal(k, shape, jnp.float32) * 0.1

    def pad_bf16(m_, rows, cols):
        # Zero-pad to a lane-dense shape then cast to bf16 (padded rows/cols contribute
        # exactly 0; all matmuls run bf16 on the MXU with f32 accumulation).
        full = jnp.zeros((rows, cols), jnp.float32).at[: m_.shape[0], : m_.shape[1]].set(m_)
        return full.astype(jnp.bfloat16)

    mu_w = w(ks[4], (c, c))
    ls_w = w(ks[5], (c, c))
    # Fused mu | logstd weight: columns [0:C] = mu, [C:2C] = logstd, rest zero padding.
    w_cat = jnp.zeros((cp, cat), jnp.float32).at[:c, :c].set(mu_w).at[:c, c:2 * c].set(ls_w)

    kfc1 = n * n
    _, kp = _fc1_tiling(kfc1)
    fc1_w = jnp.zeros((kp, h1), jnp.float32).at[:kfc1].set(w(ks[6], (kfc1, h1)))

    return {
        # VGAE.conv_base: 2 GIN layers (gnn_type='gin', JK='last'), lane-padded to Cp, bf16.
        "gin1_w1": pad_bf16(w(ks[0], (c, c)), cp, cp), "gin1_b1": jnp.zeros((1, cp), jnp.float32),
        "gin1_w2": pad_bf16(w(ks[1], (c, c)), cp, cp), "gin1_b2": jnp.zeros((1, cp), jnp.float32),
        "gin2_w1": pad_bf16(w(ks[2], (c, c)), cp, cp), "gin2_b1": jnp.zeros((1, cp), jnp.float32),
        "gin2_w2": pad_bf16(w(ks[3], (c, c)), cp, cp), "gin2_b2": jnp.zeros((1, cp), jnp.float32),
        # Fused VGAE.conv_mu / conv_logstd (GCNConv), bf16.
        "mu_ls_w": w_cat.astype(jnp.bfloat16), "mu_ls_b": jnp.zeros((1, cat), jnp.float32),
        # GraphClassifier MLP head; fc1 rows zero-padded K=N*N -> Kp (multiple of K tile).
        "fc1_w": fc1_w.astype(jnp.bfloat16), "fc1_b": jnp.zeros((1, h1), jnp.float32),
        "bn1_g": jnp.ones((1, h1), jnp.float32), "bn1_b": jnp.zeros((1, h1), jnp.float32),
        "fc2_w": w(ks[7], (h1, h2)).astype(jnp.bfloat16), "fc2_b": jnp.zeros((1, h2), jnp.float32),
        "bn2_g": jnp.ones((1, h2), jnp.float32), "bn2_b": jnp.zeros((1, h2), jnp.float32),
        "fc3_w": w(ks[8], (h2, out_channels)).astype(jnp.bfloat16),
        "fc3_b": jnp.zeros((1, out_channels), jnp.float32),
    }


# ----------------------------- Forward -----------------------------


def neurosparse_forward(params, x, adj_dense, noise_key):
    """x: (B*N, C) with C == N, adj_dense: (B, N, N) binary float32."""
    bg, n, _ = adj_dense.shape
    c = x.shape[1]
    assert c == n, "NeuroSparse requires in_channels == nodes-per-graph (z.view(-1, N, N))"
    cp = params["gin1_w1"].shape[0]

    # Lane-dense zero-padded per-graph features; binary adjacency as bf16 (exact for {0,1}).
    x3 = jnp.zeros((bg, n, cp), jnp.float32).at[:, :, :c].set(x.reshape(bg, n, c))
    adj_bf = adj_dense.astype(jnp.bfloat16)

    # ---- VGAE encoder: gin1 -> ReLU -> gin2 -> fused GCN(mu|logstd), ONE fused kernel ----
    # TODO(synk): the original GNN class (edge_attr embedding, per-layer BN / dropout) is
    # approximated by two plain GIN layers (eval-mode dropout/BN = identity), JK='last'.
    ms = encoder_batched(adj_bf, x3, params)
    m = ms[..., :c].reshape(bg * n, c)
    s = ms[..., c:2 * c].reshape(bg * n, c)
    z = m + jax.random.normal(noise_key, s.shape, jnp.float32) * jnp.exp(s)

    adj_logits = batched_zzt(z.reshape(bg, n, n))      # Pallas: grouped z_b @ z_b^T
    edge_dense_org = (adj_dense > 0).astype(jnp.float32)

    # ---- GraphClassifier ----
    num_elements = int(0.3 * n * n)
    flat_abs = jnp.abs(adj_logits).reshape(bg, n * n)
    # TODO(synk): exact per-graph top-k (incl. tie handling) has no clean Pallas equivalent;
    # done with lax.top_k + scatter, the {0,1} mask is streamed as int8 and the multiply is
    # fused into the fc1 kernel.
    topv, topi = jax.lax.top_k(flat_abs, num_elements)
    mask = jnp.zeros((bg, n * n), jnp.int8)
    mask = mask.at[jnp.arange(bg)[:, None], topi].set((topv != 0).astype(jnp.int8))

    kp = params["fc1_w"].shape[0]
    pad_k = kp - n * n
    xf = jnp.pad(x.reshape(bg, n * n), ((0, 0), (0, pad_k))).astype(jnp.bfloat16)
    mask = jnp.pad(mask, ((0, 0), (0, pad_k)))

    # BatchNorm1d eval with default running stats (mean 0, var 1): fold 1/sqrt(var + eps).
    inv_std = (1.0 + 1e-5) ** -0.5
    xy = fc1_masked(xf, mask, params["fc1_w"], params["fc1_b"],
                    params["bn1_g"] * inv_std, params["bn1_b"])
    # dropout p=0.6 skipped (eval mode)
    xy = mlp_head(xy, params["fc2_w"], params["fc2_b"],
                  params["bn2_g"] * inv_std, params["bn2_b"],
                  params["fc3_w"], params["fc3_b"])

    return xy, edge_dense_org, adj_logits, z


# ----------------------------- Main -----------------------------

if __name__ == "__main__":
    B, N = 8, 16          # graphs, nodes per graph (original: 100, 200)
    C = N                 # in_channels == nodes per graph (required by the views)
    CP = max(LANE, _round_up(C, LANE))        # lane-dense padded feature width
    CAT = max(LANE, _round_up(2 * C, LANE))   # lane-dense width of fused mu|logstd output
    H1, H2, OUT = 128, 256, 2

    key = jax.random.PRNGKey(0)
    k_x, k_adj, k_p, k_noise = jax.random.split(key, 4)

    x = jax.random.normal(k_x, (B * N, C), jnp.float32)             # data.x
    u = jax.random.uniform(k_adj, (B, N, N))
    adj = jnp.triu((u > 0.7).astype(jnp.float32), 1)
    adj = adj + jnp.transpose(adj, (0, 2, 1))                       # symmetric, no self loops

    params = init_params(k_p, C, CP, CAT, N, H1, H2, OUT)

    fwd = jax.jit(neurosparse_forward)
    xy, edge_dense_org, adj_logits, z = jax.block_until_ready(
        fwd(params, x, adj, k_noise))

    assert xy.shape == (B, OUT)
    assert edge_dense_org.shape == (B, N, N)
    assert adj_logits.shape == (B, N, N)
    assert z.shape == (B * N, C)
    print("KERNEL_OK")
</pallas_src>

<mosaic_0001>
module attributes {stable_mosaic.version = 11 : i64} {
  func.func @_encoder_kernel(%arg0: i32, %arg1: memref<4x16x16xbf16, #tpu.memory_space<vmem>>, %arg2: memref<4x16x128xf32, #tpu.memory_space<vmem>>, %arg3: memref<128x128xbf16, #tpu.memory_space<vmem>>, %arg4: memref<1x128xf32, #tpu.memory_space<vmem>>, %arg5: memref<128x128xbf16, #tpu.memory_space<vmem>>, %arg6: memref<1x128xf32, #tpu.memory_space<vmem>>, %arg7: memref<128x128xbf16, #tpu.memory_space<vmem>>, %arg8: memref<1x128xf32, #tpu.memory_space<vmem>>, %arg9: memref<128x128xbf16, #tpu.memory_space<vmem>>, %arg10: memref<1x128xf32, #tpu.memory_space<vmem>>, %arg11: memref<128x128xbf16, #tpu.memory_space<vmem>>, %arg12: memref<1x128xf32, #tpu.memory_space<vmem>>, %arg13: memref<4x16x128xf32, #tpu.memory_space<vmem>>) attributes {dimension_semantics = [#tpu.dimension_semantics<parallel>], iteration_bounds = array<i64: 2>, scalar_prefetch = 0 : i64, scratch_operands = 0 : i64, tpu.core_type = #tpu.core_type<tc>, window_params = [{transform_indices = @transform_0, window_bounds = array<i64: 4, 16, 16>}, {transform_indices = @transform_1, window_bounds = array<i64: 4, 16, 128>}, {pipeline_mode = #tpu.pipeline_mode<synchronous>, transform_indices = @transform_2, window_bounds = array<i64: 128, 128>}, {pipeline_mode = #tpu.pipeline_mode<synchronous>, transform_indices = @transform_3, window_bounds = array<i64: 1, 128>}, {pipeline_mode = #tpu.pipeline_mode<synchronous>, transform_indices = @transform_4, window_bounds = array<i64: 128, 128>}, {pipeline_mode = #tpu.pipeline_mode<synchronous>, transform_indices = @transform_5, window_bounds = array<i64: 1, 128>}, {pipeline_mode = #tpu.pipeline_mode<synchronous>, transform_indices = @transform_6, window_bounds = array<i64: 128, 128>}, {pipeline_mode = #tpu.pipeline_mode<synchronous>, transform_indices = @transform_7, window_bounds = array<i64: 1, 128>}, {pipeline_mode = #tpu.pipeline_mode<synchronous>, transform_indices = @transform_8, window_bounds = array<i64: 128, 128>}, {pipeline_mode = #tpu.pipeline_mode<synchronous>, transform_indices = @transform_9, window_bounds = array<i64: 1, 128>}, {pipeline_mode = #tpu.pipeline_mode<synchronous>, transform_indices = @transform_10, window_bounds = array<i64: 128, 128>}, {pipeline_mode = #tpu.pipeline_mode<synchronous>, transform_indices = @transform_11, window_bounds = array<i64: 1, 128>}, {transform_indices = @transform_12, window_bounds = array<i64: 4, 16, 128>}]} {
    %c0 = arith.constant 0 : index
    %c0_0 = arith.constant 0 : index
    %c0_1 = arith.constant 0 : index
    %0 = vector.load %arg1[%c0, %c0_0, %c0_1] : memref<4x16x16xbf16, #tpu.memory_space<vmem>>, vector<4x16x16xbf16>
    %c0_2 = arith.constant 0 : index
    %c0_3 = arith.constant 0 : index
    %c0_4 = arith.constant 0 : index
    %1 = vector.load %arg2[%c0_2, %c0_3, %c0_4] : memref<4x16x128xf32, #tpu.memory_space<vmem>>, vector<4x16x128xf32>
    %2 = arith.truncf %1 : vector<4x16x128xf32> to vector<4x16x128xbf16>
    %cst = arith.constant dense<0.000000e+00> : vector<4x16x128xf32>
    %3 = tpu.matmul %0, %2, %cst {dimension_numbers = #tpu.dot_dimension_numbers<[2], [1], [1], [2], [0, 0, 0, 1, 1, 2], [0], [0]>} : vector<4x16x16xbf16>, vector<4x16x128xbf16>, vector<4x16x128xf32> -> vector<4x16x128xf32>
    %4 = arith.addf %3, %1 : vector<4x16x128xf32>
    %c0_5 = arith.constant 0 : index
    %c0_6 = arith.constant 0 : index
    %5 = vector.load %arg3[%c0_5, %c0_6] : memref<128x128xbf16, #tpu.memory_space<vmem>>, vector<128x128xbf16>
    %6 = vector.shape_cast %4 : vector<4x16x128xf32> to vector<64x128xf32>
    %7 = arith.truncf %6 : vector<64x128xf32> to vector<64x128xbf16>
    %cst_7 = arith.constant dense<0.000000e+00> : vector<64x128xf32>
    %8 = tpu.matmul %7, %5, %cst_7 {dimension_numbers = #tpu.dot_dimension_numbers<[1], [0], [0], [1], [0, 0, 1, 1], [], []>} : vector<64x128xbf16>, vector<128x128xbf16>, vector<64x128xf32> -> vector<64x128xf32>
    %9 = vector.shape_cast %8 : vector<64x128xf32> to vector<4x16x128xf32>
    %c0_8 = arith.constant 0 : index
    %c0_9 = arith.constant 0 : index
    %10 = vector.load %arg4[%c0_8, %c0_9] : memref<1x128xf32, #tpu.memory_space<vmem>>, vector<1x128xf32>
    %11 = vector.shape_cast %10 : vector<1x128xf32> to vector<1x1x128xf32>
    %12 = vector.broadcast %11 : vector<1x1x128xf32> to vector<4x16x128xf32>
    %13 = arith.addf %9, %12 : vector<4x16x128xf32>
    %cst_10 = arith.constant 0.000000e+00 : f32
    %14 = vector.broadcast %cst_10 : f32 to vector<4x16x128xf32>
    %15 = arith.maximumf %13, %14 : vector<4x16x128xf32>
    %c0_11 = arith.constant 0 : index
    %c0_12 = arith.constant 0 : index
    %16 = vector.load %arg5[%c0_11, %c0_12] : memref<128x128xbf16, #tpu.memory_space<vmem>>, vector<128x128xbf16>
    %17 = vector.shape_cast %15 : vector<4x16x128xf32> to vector<64x128xf32>
    %18 = arith.truncf %17 : vector<64x128xf32> to vector<64x128xbf16>
    %cst_13 = arith.constant dense<0.000000e+00> : vector<64x128xf32>
    %19 = tpu.matmul %18, %16, %cst_13 {dimension_numbers = #tpu.dot_dimension_numbers<[1], [0], [0], [1], [0, 0, 1, 1], [], []>} : vector<64x128xbf16>, vector<128x128xbf16>, vector<64x128xf32> -> vector<64x128xf32>
    %20 = vector.shape_cast %19 : vector<64x128xf32> to vector<4x16x128xf32>
    %c0_14 = arith.constant 0 : index
    %c0_15 = arith.constant 0 : index
    %21 = vector.load %arg6[%c0_14, %c0_15] : memref<1x128xf32, #tpu.memory_space<vmem>>, vector<1x128xf32>
    %22 = vector.shape_cast %21 : vector<1x128xf32> to vector<1x1x128xf32>
    %23 = vector.broadcast %22 : vector<1x1x128xf32> to vector<4x16x128xf32>
    %24 = arith.addf %20, %23 : vector<4x16x128xf32>
    %cst_16 = arith.constant 0.000000e+00 : f32
    %25 = vector.broadcast %cst_16 : f32 to vector<4x16x128xf32>
    %26 = arith.maximumf %24, %25 : vector<4x16x128xf32>
    %27 = arith.truncf %26 : vector<4x16x128xf32> to vector<4x16x128xbf16>
    %cst_17 = arith.constant dense<0.000000e+00> : vector<4x16x128xf32>
    %28 = tpu.matmul %0, %27, %cst_17 {dimension_numbers = #tpu.dot_dimension_numbers<[2], [1], [1], [2], [0, 0, 0, 1, 1, 2], [0], [0]>} : vector<4x16x16xbf16>, vector<4x16x128xbf16>, vector<4x16x128xf32> -> vector<4x16x128xf32>
    %29 = arith.addf %28, %26 : vector<4x16x128xf32>
    %c0_18 = arith.constant 0 : index
    %c0_19 = arith.constant 0 : index
    %30 = vector.load %arg7[%c0_18, %c0_19] : memref<128x128xbf16, #tpu.memory_space<vmem>>, vector<128x128xbf16>
    %31 = vector.shape_cast %29 : vector<4x16x128xf32> to vector<64x128xf32>
    %32 = arith.truncf %31 : vector<64x128xf32> to vector<64x128xbf16>
    %cst_20 = arith.constant dense<0.000000e+00> : vector<64x128xf32>
    %33 = tpu.matmul %32, %30, %cst_20 {dimension_numbers = #tpu.dot_dimension_numbers<[1], [0], [0], [1], [0, 0, 1, 1], [], []>} : vector<64x128xbf16>, vector<128x128xbf16>, vector<64x128xf32> -> vector<64x128xf32>
    %34 = vector.shape_cast %33 : vector<64x128xf32> to vector<4x16x128xf32>
    %c0_21 = arith.constant 0 : index
    %c0_22 = arith.constant 0 : index
    %35 = vector.load %arg8[%c0_21, %c0_22] : memref<1x128xf32, #tpu.memory_space<vmem>>, vector<1x128xf32>
    %36 = vector.shape_cast %35 : vector<1x128xf32> to vector<1x1x128xf32>
    %37 = vector.broadcast %36 : vector<1x1x128xf32> to vector<4x16x128xf32>
    %38 = arith.addf %34, %37 : vector<4x16x128xf32>
    %cst_23 = arith.constant 0.000000e+00 : f32
    %39 = vector.broadcast %cst_23 : f32 to vector<4x16x128xf32>
    %40 = arith.maximumf %38, %39 : vector<4x16x128xf32>
    %c0_24 = arith.constant 0 : index
    %c0_25 = arith.constant 0 : index
    %41 = vector.load %arg9[%c0_24, %c0_25] : memref<128x128xbf16, #tpu.memory_space<vmem>>, vector<128x128xbf16>
    %42 = vector.shape_cast %40 : vector<4x16x128xf32> to vector<64x128xf32>
    %43 = arith.truncf %42 : vector<64x128xf32> to vector<64x128xbf16>
    %cst_26 = arith.constant dense<0.000000e+00> : vector<64x128xf32>
    %44 = tpu.matmul %43, %41, %cst_26 {dimension_numbers = #tpu.dot_dimension_numbers<[1], [0], [0], [1], [0, 0, 1, 1], [], []>} : vector<64x128xbf16>, vector<128x128xbf16>, vector<64x128xf32> -> vector<64x128xf32>
    %45 = vector.shape_cast %44 : vector<64x128xf32> to vector<4x16x128xf32>
    %c0_27 = arith.constant 0 : index
    %c0_28 = arith.constant 0 : index
    %46 = vector.load %arg10[%c0_27, %c0_28] : memref<1x128xf32, #tpu.memory_space<vmem>>, vector<1x128xf32>
    %47 = vector.shape_cast %46 : vector<1x128xf32> to vector<1x1x128xf32>
    %48 = vector.broadcast %47 : vector<1x1x128xf32> to vector<4x16x128xf32>
    %49 = arith.addf %45, %48 : vector<4x16x128xf32>
    %50 = arith.extf %0 : vector<4x16x16xbf16> to vector<4x16x16xf32>
    %cst_29 = arith.constant dense<0.000000e+00> : vector<4x16xf32>
    %51 = vector.multi_reduction <add>, %50, %cst_29 [2] : vector<4x16x16xf32> to vector<4x16xf32>
    %52 = vector.shape_cast %51 : vector<4x16xf32> to vector<4x16x1xf32>
    %cst_30 = arith.constant 1.000000e+00 : f32
    %53 = vector.broadcast %cst_30 : f32 to vector<4x16x1xf32>
    %54 = arith.addf %52, %53 : vector<4x16x1xf32>
    %55 = math.rsqrt %54 : vector<4x16x1xf32>
    %c0_31 = arith.constant 0 : index
    %c0_32 = arith.constant 0 : index
    %56 = vector.load %arg11[%c0_31, %c0_32] : memref<128x128xbf16, #tpu.memory_space<vmem>>, vector<128x128xbf16>
    %57 = vector.shape_cast %49 : vector<4x16x128xf32> to vector<64x128xf32>
    %58 = arith.truncf %57 : vector<64x128xf32> to vector<64x128xbf16>
    %cst_33 = arith.constant dense<0.000000e+00> : vector<64x128xf32>
    %59 = tpu.matmul %58, %56, %cst_33 {dimension_numbers = #tpu.dot_dimension_numbers<[1], [0], [0], [1], [0, 0, 1, 1], [], []>} : vector<64x128xbf16>, vector<128x128xbf16>, vector<64x128xf32> -> vector<64x128xf32>
    %60 = vector.shape_cast %59 : vector<64x128xf32> to vector<4x16x128xf32>
    %61 = vector.broadcast %55 : vector<4x16x1xf32> to vector<4x16x128xf32>
    %62 = arith.mulf %61, %60 : vector<4x16x128xf32>
    %63 = arith.truncf %62 : vector<4x16x128xf32> to vector<4x16x128xbf16>
    %cst_34 = arith.constant dense<0.000000e+00> : vector<4x16x128xf32>
    %64 = tpu.matmul %0, %63, %cst_34 {dimension_numbers = #tpu.dot_dimension_numbers<[2], [1], [1], [2], [0, 0, 0, 1, 1, 2], [0], [0]>} : vector<4x16x16xbf16>, vector<4x16x128xbf16>, vector<4x16x128xf32> -> vector<4x16x128xf32>
    %65 = vector.broadcast %55 : vector<4x16x1xf32> to vector<4x16x128xf32>
    %66 = arith.mulf %65, %64 : vector<4x16x128xf32>
    %67 = arith.mulf %55, %55 : vector<4x16x1xf32>
    %68 = vector.broadcast %67 : vector<4x16x1xf32> to vector<4x16x128xf32>
    %69 = arith.mulf %68, %60 : vector<4x16x128xf32>
    %70 = arith.addf %66, %69 : vector<4x16x128xf32>
    %c0_35 = arith.constant 0 : index
    %c0_36 = arith.constant 0 : index
    %71 = vector.load %arg12[%c0_35, %c0_36] : memref<1x128xf32, #tpu.memory_space<vmem>>, vector<1x128xf32>
    %72 = vector.shape_cast %71 : vector<1x128xf32> to vector<1x1x128xf32>
    %73 = vector.broadcast %72 : vector<1x1x128xf32> to vector<4x16x128xf32>
    %74 = arith.addf %70, %73 : vector<4x16x128xf32>
    %cst_37 = arith.constant 0.000000e+00 : f32
    %75 = vector.broadcast %cst_37 : f32 to vector<4x16x128xf32>
    %76 = arith.maximumf %74, %75 : vector<4x16x128xf32>
    %c0_38 = arith.constant 0 : index
    %c0_39 = arith.constant 0 : index
    %c0_40 = arith.constant 0 : index
    %77 = vector.load %arg13[%c0_38, %c0_39, %c0_40] : memref<4x16x128xf32, #tpu.memory_space<vmem>>, vector<4x16x128xf32>
    tpu.vector_store %arg13[%c0_38, %c0_39, %c0_40], %76 {strides = array<i32>} : memref<4x16x128xf32, #tpu.memory_space<vmem>>, vector<4x16x128xf32>,
    return
  }
  func.func @transform_0(%arg0: i32) -> (i32, i32, i32) {
    %c0_i32 = arith.constant 0 : i32
    %c0_i32_0 = arith.constant 0 : i32
    %c0_i32_1 = arith.constant 0 : i32
    return %arg0, %c0_i32, %c0_i32_0 : i32, i32, i32
  }
  func.func @transform_1(%arg0: i32) -> (i32, i32, i32) {
    %c0_i32 = arith.constant 0 : i32
    %c0_i32_0 = arith.constant 0 : i32
    %c0_i32_1 = arith.constant 0 : i32
    return %arg0, %c0_i32, %c0_i32_0 : i32, i32, i32
  }
  func.func @transform_2(%arg0: i32) -> (i32, i32) {
    %c0_i32 = arith.constant 0 : i32
    %c0_i32_0 = arith.constant 0 : i32
    %c0_i32_1 = arith.constant 0 : i32
    return %c0_i32, %c0_i32_0 : i32, i32
  }
  func.func @transform_3(%arg0: i32) -> (i32, i32) {
    %c0_i32 = arith.constant 0 : i32
    %c0_i32_0 = arith.constant 0 : i32
    %c0_i32_1 = arith.constant 0 : i32
    return %c0_i32, %c0_i32_0 : i32, i32
  }
  func.func @transform_4(%arg0: i32) -> (i32, i32) {
    %c0_i32 = arith.constant 0 : i32
    %c0_i32_0 = arith.constant 0 : i32
    %c0_i32_1 = arith.constant 0 : i32
    return %c0_i32, %c0_i32_0 : i32, i32
  }
  func.func @transform_5(%arg0: i32) -> (i32, i32) {
    %c0_i32 = arith.constant 0 : i32
    %c0_i32_0 = arith.constant 0 : i32
    %c0_i32_1 = arith.constant 0 : i32
    return %c0_i32, %c0_i32_0 : i32, i32
  }
  func.func @transform_6(%arg0: i32) -> (i32, i32) {
    %c0_i32 = arith.constant 0 : i32
    %c0_i32_0 = arith.constant 0 : i32
    %c0_i32_1 = arith.constant 0 : i32
    return %c0_i32, %c0_i32_0 : i32, i32
  }
  func.func @transform_7(%arg0: i32) -> (i32, i32) {
    %c0_i32 = arith.constant 0 : i32
    %c0_i32_0 = arith.constant 0 : i32
    %c0_i32_1 = arith.constant 0 : i32
    return %c0_i32, %c0_i32_0 : i32, i32
  }
  func.func @transform_8(%arg0: i32) -> (i32, i32) {
    %c0_i32 = arith.constant 0 : i32
    %c0_i32_0 = arith.constant 0 : i32
    %c0_i32_1 = arith.constant 0 : i32
    return %c0_i32, %c0_i32_0 : i32, i32
  }
  func.func @transform_9(%arg0: i32) -> (i32, i32) {
    %c0_i32 = arith.constant 0 : i32
    %c0_i32_0 = arith.constant 0 : i32
    %c0_i32_1 = arith.constant 0 : i32
    return %c0_i32, %c0_i32_0 : i32, i32
  }
  func.func @transform_10(%arg0: i32) -> (i32, i32) {
    %c0_i32 = arith.constant 0 : i32
    %c0_i32_0 = arith.constant 0 : i32
    %c0_i32_1 = arith.constant 0 : i32
    return %c0_i32, %c0_i32_0 : i32, i32
  }
  func.func @transform_11(%arg0: i32) -> (i32, i32) {
    %c0_i32 = arith.constant 0 : i32
    %c0_i32_0 = arith.constant 0 : i32
    %c0_i32_1 = arith.constant 0 : i32
    return %c0_i32, %c0_i32_0 : i32, i32
  }
  func.func @transform_12(%arg0: i32) -> (i32, i32, i32) {
    %c0_i32 = arith.constant 0 : i32
    %c0_i32_0 = arith.constant 0 : i32
    %c0_i32_1 = arith.constant 0 : i32
    return %arg0, %c0_i32, %c0_i32_0 : i32, i32, i32
  }
}

module attributes {stable_mosaic.version = 11 : i64} {
  func.func @_zzt_kernel(%arg0: i32, %arg1: memref<4x16x16xf32, #tpu.memory_space<vmem>>, %arg2: memref<4x16x16xf32, #tpu.memory_space<vmem>>) attributes {dimension_semantics = [#tpu.dimension_semantics<parallel>], iteration_bounds = array<i64: 2>, scalar_prefetch = 0 : i64, scratch_operands = 0 : i64, tpu.core_type = #tpu.core_type<tc>, window_params = [{transform_indices = @transform_0, window_bounds = array<i64: 4, 16, 16>}, {transform_indices = @transform_1, window_bounds = array<i64: 4, 16, 16>}]} {
    %c0 = arith.constant 0 : index
    %c0_0 = arith.constant 0 : index
    %c0_1 = arith.constant 0 : index
    %0 = vector.load %arg1[%c0, %c0_0, %c0_1] : memref<4x16x16xf32, #tpu.memory_space<vmem>>, vector<4x16x16xf32>
    %1 = arith.truncf %0 : vector<4x16x16xf32> to vector<4x16x16xbf16>
    %cst = arith.constant dense<0.000000e+00> : vector<4x16x16xf32>
    %2 = tpu.matmul %1, %1, %cst {dimension_numbers = #tpu.dot_dimension_numbers<[2], [2], [1], [1], [0, 0, 0, 1, 1, 1], [0], [0]>} : vector<4x16x16xbf16>, vector<4x16x16xbf16>, vector<4x16x16xf32> -> vector<4x16x16xf32>
    %c0_2 = arith.constant 0 : index
    %c0_3 = arith.constant 0 : index
    %c0_4 = arith.constant 0 : index
    %3 = vector.load %arg2[%c0_2, %c0_3, %c0_4] : memref<4x16x16xf32, #tpu.memory_space<vmem>>, vector<4x16x16xf32>
    tpu.vector_store %arg2[%c0_2, %c0_3, %c0_4], %2 {strides = array<i32>} : memref<4x16x16xf32, #tpu.memory_space<vmem>>, vector<4x16x16xf32>,
    return
  }
  func.func @transform_0(%arg0: i32) -> (i32, i32, i32) {
    %c0_i32 = arith.constant 0 : i32
    %c0_i32_0 = arith.constant 0 : i32
    %c0_i32_1 = arith.constant 0 : i32
    return %arg0, %c0_i32, %c0_i32_0 : i32, i32, i32
  }
  func.func @transform_1(%arg0: i32) -> (i32, i32, i32) {
    %c0_i32 = arith.constant 0 : i32
    %c0_i32_0 = arith.constant 0 : i32
    %c0_i32_1 = arith.constant 0 : i32
    return %arg0, %c0_i32, %c0_i32_0 : i32, i32, i32
  }
}

module attributes {stable_mosaic.version = 11 : i64} {
  func.func @_fc1_masked_kernel(%arg0: i32, %arg1: i32, %arg2: memref<8x256xbf16, #tpu.memory_space<vmem>>, %arg3: memref<8x256xi8, #tpu.memory_space<vmem>>, %arg4: memref<256x128xbf16, #tpu.memory_space<vmem>>, %arg5: memref<1x128xf32, #tpu.memory_space<vmem>>, %arg6: memref<1x128xf32, #tpu.memory_space<vmem>>, %arg7: memref<1x128xf32, #tpu.memory_space<vmem>>, %arg8: memref<8x128xf32, #tpu.memory_space<vmem>>, %arg9: memref<8x128xf32, #tpu.memory_space<vmem>>) attributes {dimension_semantics = [#tpu.dimension_semantics<parallel>, #tpu.dimension_semantics<arbitrary>], iteration_bounds = array<i64: 1, 1>, scalar_prefetch = 0 : i64, scratch_operands = 1 : i64, tpu.core_type = #tpu.core_type<tc>, window_params = [{transform_indices = @transform_0, window_bounds = array<i64: 8, 256>}, {transform_indices = @transform_1, window_bounds = array<i64: 8, 256>}, {transform_indices = @transform_2, window_bounds = array<i64: 256, 128>}, {transform_indices = @transform_3, window_bounds = array<i64: 1, 128>}, {transform_indices = @transform_4, window_bounds = array<i64: 1, 128>}, {transform_indices = @transform_5, window_bounds = array<i64: 1, 128>}, {transform_indices = @transform_6, window_bounds = array<i64: 8, 128>}]} {
    %c0_i32 = arith.constant 0 : i32
    %0 = arith.cmpi eq, %arg1, %c0_i32 : i32
    %1 = arith.extui %0 : i1 to i32
    %c0_i32_0 = arith.constant 0 : i32
    %2 = arith.cmpi ne, %1, %c0_i32_0 : i32
    scf.if %2 {
      %cst_12 = arith.constant 0.000000e+00 : f32
      %16 = vector.broadcast %cst_12 : f32 to vector<8x128xf32>
      %c0_13 = arith.constant 0 : index
      %c0_14 = arith.constant 0 : index
      %17 = vector.load %arg9[%c0_13, %c0_14] : memref<8x128xf32, #tpu.memory_space<vmem>>, vector<8x128xf32>
      tpu.vector_store %arg9[%c0_13, %c0_14], %16 {strides = array<i32>} : memref<8x128xf32, #tpu.memory_space<vmem>>, vector<8x128xf32>,
    } else {
    }
    %c0 = arith.constant 0 : index
    %c0_1 = arith.constant 0 : index
    %3 = vector.load %arg3[%c0, %c0_1] : memref<8x256xi8, #tpu.memory_space<vmem>>, vector<8x256xi8>
    %4 = arith.sitofp %3 : vector<8x256xi8> to vector<8x256xf32>
    %5 = arith.truncf %4 : vector<8x256xf32> to vector<8x256xbf16>
    %c0_2 = arith.constant 0 : index
    %c0_3 = arith.constant 0 : index
    %6 = vector.load %arg2[%c0_2, %c0_3] : memref<8x256xbf16, #tpu.memory_space<vmem>>, vector<8x256xbf16>
    %7 = arith.mulf %6, %5 : vector<8x256xbf16>
    %c0_4 = arith.constant 0 : index
    %c0_5 = arith.constant 0 : index
    %8 = vector.load %arg9[%c0_4, %c0_5] : memref<8x128xf32, #tpu.memory_space<vmem>>, vector<8x128xf32>
    %c0_6 = arith.constant 0 : index
    %c0_7 = arith.constant 0 : index
    %9 = vector.load %arg4[%c0_6, %c0_7] : memref<256x128xbf16, #tpu.memory_space<vmem>>, vector<256x128xbf16>
    %cst = arith.constant dense<0.000000e+00> : vector<8x128xf32>
    %10 = tpu.matmul %7, %9, %cst {dimension_numbers = #tpu.dot_dimension_numbers<[1], [0], [0], [1], [0, 0, 1, 1], [], []>} : vector<8x256xbf16>, vector<256x128xbf16>, vector<8x128xf32> -> vector<8x128xf32>
    %11 = arith.addf %8, %10 : vector<8x128xf32>
    %c0_8 = arith.constant 0 : index
    %c0_9 = arith.constant 0 : index
    %12 = vector.load %arg9[%c0_8, %c0_9] : memref<8x128xf32, #tpu.memory_space<vmem>>, vector<8x128xf32>
    tpu.vector_store %arg9[%c0_8, %c0_9], %11 {strides = array<i32>} : memref<8x128xf32, #tpu.memory_space<vmem>>, vector<8x128xf32>,
    %c0_i32_10 = arith.constant 0 : i32
    %13 = arith.cmpi eq, %arg1, %c0_i32_10 : i32
    %14 = arith.extui %13 : i1 to i32
    %c0_i32_11 = arith.constant 0 : i32
    %15 = arith.cmpi ne, %14, %c0_i32_11 : i32
    scf.if %15 {
      %c0_12 = arith.constant 0 : index
      %c0_13 = arith.constant 0 : index
      %16 = vector.load %arg9[%c0_12, %c0_13] : memref<8x128xf32, #tpu.memory_space<vmem>>, vector<8x128xf32>
      %c0_14 = arith.constant 0 : index
      %c0_15 = arith.constant 0 : index
      %17 = vector.load %arg5[%c0_14, %c0_15] : memref<1x128xf32, #tpu.memory_space<vmem>>, vector<1x128xf32>
      %18 = vector.broadcast %17 : vector<1x128xf32> to vector<8x128xf32>
      %19 = arith.addf %16, %18 : vector<8x128xf32>
      %cst_16 = arith.constant 0.000000e+00 : f32
      %20 = vector.broadcast %cst_16 : f32 to vector<8x128xf32>
      %21 = arith.maximumf %19, %20 : vector<8x128xf32>
      %c0_17 = arith.constant 0 : index
      %c0_18 = arith.constant 0 : index
      %22 = vector.load %arg6[%c0_17, %c0_18] : memref<1x128xf32, #tpu.memory_space<vmem>>, vector<1x128xf32>
      %23 = vector.broadcast %22 : vector<1x128xf32> to vector<8x128xf32>
      %24 = arith.mulf %21, %23 : vector<8x128xf32>
      %c0_19 = arith.constant 0 : index
      %c0_20 = arith.constant 0 : index
      %25 = vector.load %arg7[%c0_19, %c0_20] : memref<1x128xf32, #tpu.memory_space<vmem>>, vector<1x128xf32>
      %26 = vector.broadcast %25 : vector<1x128xf32> to vector<8x128xf32>
      %27 = arith.addf %24, %26 : vector<8x128xf32>
      %c0_21 = arith.constant 0 : index
      %c0_22 = arith.constant 0 : index
      %28 = vector.load %arg8[%c0_21, %c0_22] : memref<8x128xf32, #tpu.memory_space<vmem>>, vector<8x128xf32>
      tpu.vector_store %arg8[%c0_21, %c0_22], %27 {strides = array<i32>} : memref<8x128xf32, #tpu.memory_space<vmem>>, vector<8x128xf32>,
    } else {
    }
    return
  }
  func.func @transform_0(%arg0: i32, %arg1: i32) -> (i32, i32) {
    %c0_i32 = arith.constant 0 : i32
    %c0_i32_0 = arith.constant 0 : i32
    return %c0_i32, %arg1 : i32, i32
  }
  func.func @transform_1(%arg0: i32, %arg1: i32) -> (i32, i32) {
    %c0_i32 = arith.constant 0 : i32
    %c0_i32_0 = arith.constant 0 : i32
    return %c0_i32, %arg1 : i32, i32
  }
  func.func @transform_2(%arg0: i32, %arg1: i32) -> (i32, i32) {
    %c0_i32 = arith.constant 0 : i32
    return %arg1, %arg0 : i32, i32
  }
  func.func @transform_3(%arg0: i32, %arg1: i32) -> (i32, i32) {
    %c0_i32 = arith.constant 0 : i32
    %c0_i32_0 = arith.constant 0 : i32
    return %c0_i32, %arg0 : i32, i32
  }
  func.func @transform_4(%arg0: i32, %arg1: i32) -> (i32, i32) {
    %c0_i32 = arith.constant 0 : i32
    %c0_i32_0 = arith.constant 0 : i32
    return %c0_i32, %arg0 : i32, i32
  }
  func.func @transform_5(%arg0: i32, %arg1: i32) -> (i32, i32) {
    %c0_i32 = arith.constant 0 : i32
    %c0_i32_0 = arith.constant 0 : i32
    return %c0_i32, %arg0 : i32, i32
  }
  func.func @transform_6(%arg0: i32, %arg1: i32) -> (i32, i32) {
    %c0_i32 = arith.constant 0 : i32
    %c0_i32_0 = arith.constant 0 : i32
    return %c0_i32, %arg0 : i32, i32
  }
}

module attributes {stable_mosaic.version = 11 : i64} {
  func.func @_head_kernel(%arg0: i32, %arg1: memref<8x128xf32, #tpu.memory_space<vmem>>, %arg2: memref<128x256xbf16, #tpu.memory_space<vmem>>, %arg3: memref<1x256xf32, #tpu.memory_space<vmem>>, %arg4: memref<1x256xf32, #tpu.memory_space<vmem>>, %arg5: memref<1x256xf32, #tpu.memory_space<vmem>>, %arg6: memref<256x2xbf16, #tpu.memory_space<vmem>>, %arg7: memref<1x2xf32, #tpu.memory_space<vmem>>, %arg8: memref<8x2xf32, #tpu.memory_space<vmem>>) attributes {dimension_semantics = [#tpu.dimension_semantics<arbitrary>], iteration_bounds = array<i64: 1>, scalar_prefetch = 0 : i64, scratch_operands = 0 : i64, tpu.core_type = #tpu.core_type<tc>, window_params = [{pipeline_mode = #tpu.pipeline_mode<synchronous>, transform_indices = @transform_0, window_bounds = array<i64: 8, 128>}, {pipeline_mode = #tpu.pipeline_mode<synchronous>, transform_indices = @transform_1, window_bounds = array<i64: 128, 256>}, {pipeline_mode = #tpu.pipeline_mode<synchronous>, transform_indices = @transform_2, window_bounds = array<i64: 1, 256>}, {pipeline_mode = #tpu.pipeline_mode<synchronous>, transform_indices = @transform_3, window_bounds = array<i64: 1, 256>}, {pipeline_mode = #tpu.pipeline_mode<synchronous>, transform_indices = @transform_4, window_bounds = array<i64: 1, 256>}, {pipeline_mode = #tpu.pipeline_mode<synchronous>, transform_indices = @transform_5, window_bounds = array<i64: 256, 2>}, {pipeline_mode = #tpu.pipeline_mode<synchronous>, transform_indices = @transform_6, window_bounds = array<i64: 1, 2>}, {pipeline_mode = #tpu.pipeline_mode<synchronous>, transform_indices = @transform_7, window_bounds = array<i64: 8, 2>}]} {
    %c0 = arith.constant 0 : index
    %c0_0 = arith.constant 0 : index
    %0 = vector.load %arg1[%c0, %c0_0] : memref<8x128xf32, #tpu.memory_space<vmem>>, vector<8x128xf32>
    %1 = arith.truncf %0 : vector<8x128xf32> to vector<8x128xbf16>
    %c0_1 = arith.constant 0 : index
    %c0_2 = arith.constant 0 : index
    %2 = vector.load %arg2[%c0_1, %c0_2] : memref<128x256xbf16, #tpu.memory_space<vmem>>, vector<128x256xbf16>
    %cst = arith.constant dense<0.000000e+00> : vector<8x256xf32>
    %3 = tpu.matmul %1, %2, %cst {dimension_numbers = #tpu.dot_dimension_numbers<[1], [0], [0], [1], [0, 0, 1, 1], [], []>} : vector<8x128xbf16>, vector<128x256xbf16>, vector<8x256xf32> -> vector<8x256xf32>
    %c0_3 = arith.constant 0 : index
    %c0_4 = arith.constant 0 : index
    %4 = vector.load %arg3[%c0_3, %c0_4] : memref<1x256xf32, #tpu.memory_space<vmem>>, vector<1x256xf32>
    %5 = vector.broadcast %4 : vector<1x256xf32> to vector<8x256xf32>
    %6 = arith.addf %3, %5 : vector<8x256xf32>
    %cst_5 = arith.constant 0.000000e+00 : f32
    %7 = vector.broadcast %cst_5 : f32 to vector<8x256xf32>
    %8 = arith.maximumf %6, %7 : vector<8x256xf32>
    %c0_6 = arith.constant 0 : index
    %c0_7 = arith.constant 0 : index
    %9 = vector.load %arg4[%c0_6, %c0_7] : memref<1x256xf32, #tpu.memory_space<vmem>>, vector<1x256xf32>
    %10 = vector.broadcast %9 : vector<1x256xf32> to vector<8x256xf32>
    %11 = arith.mulf %8, %10 : vector<8x256xf32>
    %c0_8 = arith.constant 0 : index
    %c0_9 = arith.constant 0 : index
    %12 = vector.load %arg5[%c0_8, %c0_9] : memref<1x256xf32, #tpu.memory_space<vmem>>, vector<1x256xf32>
    %13 = vector.broadcast %12 : vector<1x256xf32> to vector<8x256xf32>
    %14 = arith.addf %11, %13 : vector<8x256xf32>
    %15 = arith.truncf %14 : vector<8x256xf32> to vector<8x256xbf16>
    %c0_10 = arith.constant 0 : index
    %c0_11 = arith.constant 0 : index
    %16 = vector.load %arg6[%c0_10, %c0_11] : memref<256x2xbf16, #tpu.memory_space<vmem>>, vector<256x2xbf16>
    %cst_12 = arith.constant dense<0.000000e+00> : vector<8x2xf32>
    %17 = tpu.matmul %15, %16, %cst_12 {dimension_numbers = #tpu.dot_dimension_numbers<[1], [0], [0], [1], [0, 0, 1, 1], [], []>} : vector<8x256xbf16>, vector<256x2xbf16>, vector<8x2xf32> -> vector<8x2xf32>
    %c0_13 = arith.constant 0 : index
    %c0_14 = arith.constant 0 : index
    %18 = vector.load %arg7[%c0_13, %c0_14] : memref<1x2xf32, #tpu.memory_space<vmem>>, vector<1x2xf32>
    %19 = vector.broadcast %18 : vector<1x2xf32> to vector<8x2xf32>
    %20 = arith.addf %17, %19 : vector<8x2xf32>
    %cst_15 = arith.constant dense<0xFF800000> : vector<8xf32>
    %21 = vector.multi_reduction <maximumf>, %20, %cst_15 [1] : vector<8x2xf32> to vector<8xf32>
    %22 = vector.shape_cast %21 : vector<8xf32> to vector<8x1xf32>
    %23 = vector.broadcast %22 : vector<8x1xf32> to vector<8x2xf32>
    %24 = arith.subf %20, %23 : vector<8x2xf32>
    %25 = math.exp %24 : vector<8x2xf32>
    %cst_16 = arith.constant dense<0.000000e+00> : vector<8xf32>
    %26 = vector.multi_reduction <add>, %25, %cst_16 [1] : vector<8x2xf32> to vector<8xf32>
    %27 = vector.shape_cast %26 : vector<8xf32> to vector<8x1xf32>
    %28 = math.log %27 : vector<8x1xf32>
    %29 = vector.broadcast %28 : vector<8x1xf32> to vector<8x2xf32>
    %30 = arith.subf %24, %29 : vector<8x2xf32>
    %c0_17 = arith.constant 0 : index
    %c0_18 = arith.constant 0 : index
    %31 = vector.load %arg8[%c0_17, %c0_18] : memref<8x2xf32, #tpu.memory_space<vmem>>, vector<8x2xf32>
    tpu.vector_store %arg8[%c0_17, %c0_18], %30 {strides = array<i32>} : memref<8x2xf32, #tpu.memory_space<vmem>>, vector<8x2xf32>,
    return
  }
  func.func @transform_0(%arg0: i32) -> (i32, i32) {
    %c0_i32 = arith.constant 0 : i32
    %c0_i32_0 = arith.constant 0 : i32
    %c0_i32_1 = arith.constant 0 : i32
    return %c0_i32, %c0_i32_0 : i32, i32
  }
  func.func @transform_1(%arg0: i32) -> (i32, i32) {
    %c0_i32 = arith.constant 0 : i32
    %c0_i32_0 = arith.constant 0 : i32
    %c0_i32_1 = arith.constant 0 : i32
    return %c0_i32, %c0_i32_0 : i32, i32
  }
  func.func @transform_2(%arg0: i32) -> (i32, i32) {
    %c0_i32 = arith.constant 0 : i32
    %c0_i32_0 = arith.constant 0 : i32
    %c0_i32_1 = arith.constant 0 : i32
    return %c0_i32, %c0_i32_0 : i32, i32
  }
  func.func @transform_3(%arg0: i32) -> (i32, i32) {
    %c0_i32 = arith.constant 0 : i32
    %c0_i32_0 = arith.constant 0 : i32
    %c0_i32_1 = arith.constant 0 : i32
    return %c0_i32, %c0_i32_0 : i32, i32
  }
  func.func @transform_4(%arg0: i32) -> (i32, i32) {
    %c0_i32 = arith.constant 0 : i32
    %c0_i32_0 = arith.constant 0 : i32
    %c0_i32_1 = arith.constant 0 : i32
    return %c0_i32, %c0_i32_0 : i32, i32
  }
  func.func @transform_5(%arg0: i32) -> (i32, i32) {
    %c0_i32 = arith.constant 0 : i32
    %c0_i32_0 = arith.constant 0 : i32
    %c0_i32_1 = arith.constant 0 : i32
    return %c0_i32, %c0_i32_0 : i32, i32
  }
  func.func @transform_6(%arg0: i32) -> (i32, i32) {
    %c0_i32 = arith.constant 0 : i32
    %c0_i32_0 = arith.constant 0 : i32
    %c0_i32_1 = arith.constant 0 : i32
    return %c0_i32, %c0_i32_0 : i32, i32
  }
  func.func @transform_7(%arg0: i32) -> (i32, i32) {
    %c0_i32 = arith.constant 0 : i32
    %c0_i32_0 = arith.constant 0 : i32
    %c0_i32_1 = arith.constant 0 : i32
    return %c0_i32, %c0_i32_0 : i32, i32
  }
}

</mosaic_0001>

<llo_original>
// kernel: neurosparse_forward.5
$region0: #{neurosparse_forward.5}
  #allocation0 [shape = 'u32[]', space=smem, size = 0x4, offset = 0x4, fixed_abs, tag = 'smem constant byte address 0x4 - core index']
  #allocation1 [shape = 'u32[144,128]{1,0:T(1,128)}', space=vmem, size = 0x12000, scoped, tag = 'internal scratch']
  %s0 = inlined_call_operand.vmem [shape: f32[8,16,16], index: 0, kind: input, shape index: {}]
  %s1 = inlined_call_operand.vmem [shape: f32[8,16,16], index: 1, kind: output, shape index: {}]
  %s2 = sld [smem:[#allocation0]]
  $region37: #{neurosparse_forward.5} parent=0
    _
  %s4 = ssub.s32 1, %s2
  %s5 = scalar_select 0, %s4, %s2
  loop: start=0, step=1, limit=4
  $region2: #{neurosparse_forward.5} parent=0 // loop_pre_header
    _
  $region3: #{neurosparse_forward.5} parent=0 // loop_header
    %s7 = sphi 0, %s11
    %p8 = scmp.ge.s32.totalorder %s7, 4
    %s17 = sphi 0, %s19
    %s20 = sphi 0, %s17
    %s21 = sphi 0, %s20
    %s37 = sphi 0, %s21
    %s43 = sphi 0, %s45
    %s46 = sphi 0, %s43
    %s47 = sphi 0, %s46
    %s63 = sphi 0, %s47
  $region4: #{neurosparse_forward.5} parent=0 // loop_header_branch
    %10 = sbr.rel (%p8) target = $region8
  $region5: #{neurosparse_forward.5} parent=0 // loop_body
    %s12 = ssub.s32 %s7, 1
    %s13 = ssub.s32 %s7, 2
    %s14 = sadd.s32 %s7, 1
    %s15 = ssub.s32 %s7, %s14
    %p16 = scmp.eq.s32.totalorder %s15, 0
    %s18 = sadd.s32 %s17, 1
    %s19 = scalar_select %p16, %s17, %s18
    %p22 = pneg %p16
    %p23 = scmp.eq.s32.totalorder %s7, 1
    %p24 = por %p22, %p23
    %p25 = scmp.ne.s32.totalorder %s17, %s20
    %p26 = scmp.eq.s32.totalorder %s7, 0
    %p27 = por %p25, %p26
    %p28 = scmp.ne.s32.totalorder %s17, %s20
    %p29 = scmp.eq.s32.totalorder %s12, 1
    %p30 = por %p28, %p29
    %p31 = scmp.ne.s32.totalorder %s20, %s21
    %p32 = scmp.eq.s32.totalorder %s12, 0
    %p33 = por %p31, %p32
    %p34 = scmp.ne.s32.totalorder %s20, %s21
    %p35 = scmp.eq.s32.totalorder %s13, 1
    %p36 = por %p34, %p35
    %p38 = scmp.ne.s32.totalorder %s21, %s37
    %p39 = scmp.eq.s32.totalorder %s13, 0
    %p40 = por %p38, %p39
    %s41 = ssub.s32 %s7, %s14
    %p42 = scmp.eq.s32.totalorder %s41, 0
    %s44 = sadd.s32 %s43, 1
    %s45 = scalar_select %p42, %s43, %s44
    %p48 = pneg %p42
    %p49 = scmp.eq.s32.totalorder %s7, 1
    %p50 = por %p48, %p49
    %p51 = scmp.ne.s32.totalorder %s43, %s46
    %p52 = scmp.eq.s32.totalorder %s7, 0
    %p53 = por %p51, %p52
    %p54 = scmp.ne.s32.totalorder %s43, %s46
    %p55 = scmp.eq.s32.totalorder %s12, 1
    %p56 = por %p54, %p55
    %p57 = scmp.ne.s32.totalorder %s46, %s47
    %p58 = scmp.eq.s32.totalorder %s12, 0
    %p59 = por %p57, %p58
    %p60 = scmp.ne.s32.totalorder %s46, %s47
    %p61 = scmp.eq.s32.totalorder %s13, 1
    %p62 = por %p60, %p61
    %p64 = scmp.ne.s32.totalorder %s47, %s63
    %p65 = scmp.eq.s32.totalorder %s13, 0
    %p66 = por %p64, %p65
    %p67 = scmp.le.s32.totalorder 1, %s7
    %p68 = scmp.lt.s32.totalorder %s7, 3
    %p69 = pnand %p67, %p68
    %p70 = pneg %p69
    // Predicated region
    $region9: #{neurosparse_forward.5} parent=5 // pred_check
      _
    $region10: #{neurosparse_forward.5} parent=5 // pred_check_branch
      %72 = sbr.rel (%p69) target = $region12
    $region11: #{neurosparse_forward.5} parent=5 // pred_region
      %s73 = ssub.s32 %s7, 1
    $region12: #{neurosparse_forward.5} parent=5 // pred_fallthru
      _
    %p74 = scmp.lt.s32.totalorder %s7, 2
    // Predicated region
    $region13: #{neurosparse_forward.5} parent=5 // pred_check
      %p75 = pneg %p74
    $region14: #{neurosparse_forward.5} parent=5 // pred_check_branch
      %77 = sbr.rel (%p75) target = $region16
    $region15: #{neurosparse_forward.5} parent=5 // pred_region
      // Predicated region
      $region17: #{neurosparse_forward.5} parent=15 // pred_check
        %p78 = pneg %p27
      $region18: #{neurosparse_forward.5} parent=15 // pred_check_branch
        %80 = sbr.rel (%p78) target = $region20
      $region19: #{neurosparse_forward.5} parent=15 // pred_region
        %s81 = smul.u32 4, %s7
        %p82 = scmp.lt.s32.totalorder %s81, 7
        %s83 = scalar_select %p82, %s81, 7
        %s84 = smul.addr %s83, 2
        %s85 = smul.addr %s84, 8
        %s86 = scalar_lea.vmem %s0, %s85
        %s87 = smul.u32 4, %s7
      $region20: #{neurosparse_forward.5} parent=15 // pred_fallthru
        _
    $region16: #{neurosparse_forward.5} parent=5 // pred_fallthru
      _
    %p88 = scmp.le.s32.totalorder 1, %s7
    %p89 = scmp.lt.s32.totalorder %s7, 3
    %p90 = pnand %p88, %p89
    %p91 = pneg %p90
    // Predicated region
    $region21: #{neurosparse_forward.5} parent=5 // pred_check
      _
    $region22: #{neurosparse_forward.5} parent=5 // pred_check_branch
      %93 = sbr.rel (%p90) target = $region24
    $region23: #{neurosparse_forward.5} parent=5 // pred_region
      %s94 = ssub.s32 %s7, 1
      %s95 = smul.u32 4, %s12
      %p96 = scmp.lt.s32.totalorder %s95, 7
      %s97 = scalar_select %p96, %s95, 7
      %s98 = smul.addr %s97, 2
      %s99 = smul.addr %s98, 8
      %s100 = scalar_lea.vmem %s0, %s99
      %p101 = pneg %p33
      %p102 = pneg %p30
      %p103 = pneg %p59
      %p104 = pneg %p56
      %s105 = smul.u32 4, %s12
      %p106 = scmp.lt.s32.totalorder %s105, 7
      %s107 = scalar_select %p106, %s105, 7
      %s108 = smul.addr %s107, 2
      %s109 = smul.addr %s108, 8
      %s110 = scalar_lea.vmem %s1, %s109
      %s111 = smul.u32 4, %s12
      %p112 = scmp.lt.s32.totalorder %s111, 7
      %s113 = scalar_select %p112, %s111, 7
      %s114 = smul.addr %s113, 2
      %s115 = smul.addr %s114, 8
      %s116 = scalar_lea.vmem %s0, %s115
      %s117 = smul.u32 4, %s12
      %s118 = smul.u32 4, %s12
      %p119 = scmp.lt.s32.totalorder %s118, 7
      %s120 = scalar_select %p119, %s118, 7
      %s121 = smul.addr %s120, 2
      %s122 = smul.addr %s121, 8
      %s123 = scalar_lea.vmem %s1, %s122
      %s124 = smul.u32 4, %s12
      %v126 = vld [vmem:[%s116] sm:$0xff]
      %v127 = vld [vmem:[%s116 + $0x8] sm:$0xff]
      %v128 = vld [vmem:[%s116 + $0x10] sm:$0xff]
      %v129 = vld [vmem:[%s116 + $0x18] sm:$0xff]
      %v130 = vld [vmem:[%s116 + $0x20] sm:$0xff]
      %v131 = vld [vmem:[%s116 + $0x28] sm:$0xff]
      %v132 = vld [vmem:[%s116 + $0x30] sm:$0xff]
      %v133 = vld [vmem:[%s116 + $0x38] sm:$0xff]
      %v134 = vpack.c.bf16 %v127, %v126
      %v135 = vpack.c.bf16 %v129, %v128
      %v136 = vpack.c.bf16 %v131, %v130
      %v137 = vpack.c.bf16 %v133, %v132
      %vm138 = vcmask 130048
      %v140 = vsel %vm138, %v134, 0
      %142 = vmatprep.subr.bf16.mxu0 0
      %143 = vmatpush1.bf16.xpose.msra.mxu0 %v140
      %144 = vmatprep.subr.bf16.mxu0 0
      %145 = vmatpush1.bf16.xpose.msra.mxu0 0
      %146 = vmatprep.subr.bf16.mxu0 0
      %147 = vmatpush1.bf16.xpose.msra.mxu0 0
      %148 = vmatprep.subr.bf16.mxu0 0
      %149 = vmatpush1.bf16.xpose.msra.mxu0 0
      %150 = vmatprep.subr.bf16.mxu0 0
      %151 = vmatpush1.bf16.xpose.msra.mxu0 0
      %152 = vmatprep.subr.bf16.mxu0 0
      %153 = vmatpush1.bf16.xpose.msra.mxu0 0
      %154 = vmatprep.subr.bf16.mxu0 0
      %155 = vmatpush1.bf16.xpose.msra.mxu0 0
      %156 = vmatprep.subr.bf16.mxu0 0
      %157 = vmatpush1.bf16.xpose.msra.mxu0 0
      %158 = vmatprep.subr.bf16.mxu0 0
      %159 = vmatpush1.bf16.xpose.msra.mxu0 0
      %160 = vmatprep.subr.bf16.mxu0 0
      %161 = vmatpush1.bf16.xpose.msra.mxu0 0
      %162 = vmatprep.subr.bf16.mxu0 0
      %163 = vmatpush1.bf16.xpose.msra.mxu0 0
      %164 = vmatprep.subr.bf16.mxu0 0
      %165 = vmatpush1.bf16.xpose.msra.mxu0 0
      %166 = vmatprep.subr.bf16.mxu0 0
      %167 = vmatpush1.bf16.xpose.msra.mxu0 0
      %168 = vmatprep.subr.bf16.mxu0 0
      %169 = vmatpush1.bf16.xpose.msra.mxu0 0
      %170 = vmatprep.subr.bf16.mxu0 0
      %171 = vmatpush1.bf16.xpose.msra.mxu0 0
      %172 = vmatprep.subr.bf16.mxu0 0
      %173 = vmatpush1.bf16.xpose.msra.mxu0 0
      %174 = vmatprep.mubr.bf16.mxu0 0
      %175 = vmatmul.mubr.bf16.gmra.mrb[0].mxu0 %v140
      %v176 = vpop.f32.mrb[0].mxu0
      %v177 = vadd.f32 0.0, %v176
      %v178 = vpop.f32.mrb[0].mxu0
      %v179 = vpop.f32.mrb[0].mxu0
      %v180 = vadd.f32 0.0, %v179
      %v181 = vpop.f32.mrb[0].mxu0
      %182 = vdwg.mxu0
      %v184 = vsel %vm138, %v135, 0
      %186 = vmatprep.subr.bf16.mxu0 0
      %187 = vmatpush1.bf16.xpose.msra.mxu0 %v184
      %188 = vmatprep.subr.bf16.mxu0 0
      %189 = vmatpush1.bf16.xpose.msra.mxu0 0
      %190 = vmatprep.subr.bf16.mxu0 0
      %191 = vmatpush1.bf16.xpose.msra.mxu0 0
      %192 = vmatprep.subr.bf16.mxu0 0
      %193 = vmatpush1.bf16.xpose.msra.mxu0 0
      %194 = vmatprep.subr.bf16.mxu0 0
      %195 = vmatpush1.bf16.xpose.msra.mxu0 0
      %196 = vmatprep.subr.bf16.mxu0 0
      %197 = vmatpush1.bf16.xpose.msra.mxu0 0
      %198 = vmatprep.subr.bf16.mxu0 0
      %199 = vmatpush1.bf16.xpose.msra.mxu0 0
      %200 = vmatprep.subr.bf16.mxu0 0
      %201 = vmatpush1.bf16.xpose.msra.mxu0 0
      %202 = vmatprep.subr.bf16.mxu0 0
      %203 = vmatpush1.bf16.xpose.msra.mxu0 0
      %204 = vmatprep.subr.bf16.mxu0 0
      %205 = vmatpush1.bf16.xpose.msra.mxu0 0
      %206 = vmatprep.subr.bf16.mxu0 0
      %207 = vmatpush1.bf16.xpose.msra.mxu0 0
      %208 = vmatprep.subr.bf16.mxu0 0
      %209 = vmatpush1.bf16.xpose.msra.mxu0 0
      %210 = vmatprep.subr.bf16.mxu0 0
      %211 = vmatpush1.bf16.xpose.msra.mxu0 0
      %212 = vmatprep.subr.bf16.mxu0 0
      %213 = vmatpush1.bf16.xpose.msra.mxu0 0
      %214 = vmatprep.subr.bf16.mxu0 0
      %215 = vmatpush1.bf16.xpose.msra.mxu0 0
      %216 = vmatprep.subr.bf16.mxu0 0
      %217 = vmatpush1.bf16.xpose.msra.mxu0 0
      %218 = vmatprep.mubr.bf16.mxu0 0
      %219 = vmatmul.mubr.bf16.gmra.mrb[0].mxu0 %v184
      %v220 = vpop.f32.mrb[0].mxu0
      %v221 = vadd.f32 0.0, %v220
      %v222 = vpop.f32.mrb[0].mxu0
      %v223 = vpop.f32.mrb[0].mxu0
      %v224 = vadd.f32 0.0, %v223
      %v225 = vpop.f32.mrb[0].mxu0
      %226 = vdwg.mxu0
      %v228 = vsel %vm138, %v136, 0
      %230 = vmatprep.subr.bf16.mxu0 0
      %231 = vmatpush1.bf16.xpose.msra.mxu0 %v228
      %232 = vmatprep.subr.bf16.mxu0 0
      %233 = vmatpush1.bf16.xpose.msra.mxu0 0
      %234 = vmatprep.subr.bf16.mxu0 0
      %235 = vmatpush1.bf16.xpose.msra.mxu0 0
      %236 = vmatprep.subr.bf16.mxu0 0
      %237 = vmatpush1.bf16.xpose.msra.mxu0 0
      %238 = vmatprep.subr.bf16.mxu0 0
      %239 = vmatpush1.bf16.xpose.msra.mxu0 0
      %240 = vmatprep.subr.bf16.mxu0 0
      %241 = vmatpush1.bf16.xpose.msra.mxu0 0
      %242 = vmatprep.subr.bf16.mxu0 0
      %243 = vmatpush1.bf16.xpose.msra.mxu0 0
      %244 = vmatprep.subr.bf16.mxu0 0
      %245 = vmatpush1.bf16.xpose.msra.mxu0 0
      %246 = vmatprep.subr.bf16.mxu0 0
      %247 = vmatpush1.bf16.xpose.msra.mxu0 0
      %248 = vmatprep.subr.bf16.mxu0 0
      %249 = vmatpush1.bf16.xpose.msra.mxu0 0
      %250 = vmatprep.subr.bf16.mxu0 0
      %251 = vmatpush1.bf16.xpose.msra.mxu0 0
      %252 = vmatprep.subr.bf16.mxu0 0
      %253 = vmatpush1.bf16.xpose.msra.mxu0 0
      %254 = vmatprep.subr.bf16.mxu0 0
      %255 = vmatpush1.bf16.xpose.msra.mxu0 0
      %256 = vmatprep.subr.bf16.mxu0 0
      %257 = vmatpush1.bf16.xpose.msra.mxu0 0
      %258 = vmatprep.subr.bf16.mxu0 0
      %259 = vmatpush1.bf16.xpose.msra.mxu0 0
      %260 = vmatprep.subr.bf16.mxu0 0
      %261 = vmatpush1.bf16.xpose.msra.mxu0 0
      %262 = vmatprep.mubr.bf16.mxu0 0
      %263 = vmatmul.mubr.bf16.gmra.mrb[0].mxu0 %v228
      %v264 = vpop.f32.mrb[0].mxu0
      %v265 = vadd.f32 0.0, %v264
      %v266 = vpop.f32.mrb[0].mxu0
      %v267 = vpop.f32.mrb[0].mxu0
      %v268 = vadd.f32 0.0, %v267
      %v269 = vpop.f32.mrb[0].mxu0
      %270 = vdwg.mxu0
      %v272 = vsel %vm138, %v137, 0
      %274 = vmatprep.subr.bf16.mxu0 0
      %275 = vmatpush1.bf16.xpose.msra.mxu0 %v272
      %276 = vmatprep.subr.bf16.mxu0 0
      %277 = vmatpush1.bf16.xpose.msra.mxu0 0
      %278 = vmatprep.subr.bf16.mxu0 0
      %279 = vmatpush1.bf16.xpose.msra.mxu0 0
      %280 = vmatprep.subr.bf16.mxu0 0
      %281 = vmatpush1.bf16.xpose.msra.mxu0 0
      %282 = vmatprep.subr.bf16.mxu0 0
      %283 = vmatpush1.bf16.xpose.msra.mxu0 0
      %284 = vmatprep.subr.bf16.mxu0 0
      %285 = vmatpush1.bf16.xpose.msra.mxu0 0
      %286 = vmatprep.subr.bf16.mxu0 0
      %287 = vmatpush1.bf16.xpose.msra.mxu0 0
      %288 = vmatprep.subr.bf16.mxu0 0
      %289 = vmatpush1.bf16.xpose.msra.mxu0 0
      %290 = vmatprep.subr.bf16.mxu0 0
      %291 = vmatpush1.bf16.xpose.msra.mxu0 0
      %292 = vmatprep.subr.bf16.mxu0 0
      %293 = vmatpush1.bf16.xpose.msra.mxu0 0
      %294 = vmatprep.subr.bf16.mxu0 0
      %295 = vmatpush1.bf16.xpose.msra.mxu0 0
      %296 = vmatprep.subr.bf16.mxu0 0
      %297 = vmatpush1.bf16.xpose.msra.mxu0 0
      %298 = vmatprep.subr.bf16.mxu0 0
      %299 = vmatpush1.bf16.xpose.msra.mxu0 0
      %300 = vmatprep.subr.bf16.mxu0 0
      %301 = vmatpush1.bf16.xpose.msra.mxu0 0
      %302 = vmatprep.subr.bf16.mxu0 0
      %303 = vmatpush1.bf16.xpose.msra.mxu0 0
      %304 = vmatprep.subr.bf16.mxu0 0
      %305 = vmatpush1.bf16.xpose.msra.mxu0 0
      %306 = vmatprep.mubr.bf16.mxu0 0
      %307 = vmatmul.mubr.bf16.gmra.mrb[0].mxu0 %v272
      %v308 = vpop.f32.mrb[0].mxu0
      %v309 = vadd.f32 0.0, %v308
      %v310 = vpop.f32.mrb[0].mxu0
      %v311 = vpop.f32.mrb[0].mxu0
      %v312 = vadd.f32 0.0, %v311
      %v313 = vpop.f32.mrb[0].mxu0
      %314 = vdwg.mxu0
      %315 = vst.msk [vmem:[%s123] sm:$0xff] %vm138, %v177
      %316 = vst.msk [vmem:[%s123 + $0x8] sm:$0xff] %vm138, %v180
      %317 = vst.msk [vmem:[%s123 + $0x10] sm:$0xff] %vm138, %v221
      %318 = vst.msk [vmem:[%s123 + $0x18] sm:$0xff] %vm138, %v224
      %319 = vst.msk [vmem:[%s123 + $0x20] sm:$0xff] %vm138, %v265
      %320 = vst.msk [vmem:[%s123 + $0x28] sm:$0xff] %vm138, %v268
      %321 = vst.msk [vmem:[%s123 + $0x30] sm:$0xff] %vm138, %v309
      %322 = vst.msk [vmem:[%s123 + $0x38] sm:$0xff] %vm138, %v312
      %s323 = smul.u32 4, %s12
      %p324 = scmp.lt.s32.totalorder %s323, 7
      %s325 = scalar_select %p324, %s323, 7
      %s326 = smul.addr %s325, 2
      %s327 = smul.addr %s326, 8
      %s328 = scalar_lea.vmem %s1, %s327
      // Predicated region
      $region25: #{neurosparse_forward.5} parent=23 // pred_check
        %p329 = pneg %p56
      $region26: #{neurosparse_forward.5} parent=23 // pred_check_branch
        %331 = sbr.rel (%p329) target = $region28
      $region27: #{neurosparse_forward.5} parent=23 // pred_region
        %s332 = smul.u32 4, %s12
      $region28: #{neurosparse_forward.5} parent=23 // pred_fallthru
        _
    $region24: #{neurosparse_forward.5} parent=5 // pred_fallthru
      _
    %p333 = scmp.le.s32.totalorder 2, %s7
    // Predicated region
    $region29: #{neurosparse_forward.5} parent=5 // pred_check
      %p334 = pneg %p333
    $region30: #{neurosparse_forward.5} parent=5 // pred_check_branch
      %336 = sbr.rel (%p334) target = $region32
    $region31: #{neurosparse_forward.5} parent=5 // pred_region
      %s337 = ssub.s32 %s7, 2
      // Predicated region
      $region33: #{neurosparse_forward.5} parent=31 // pred_check
        %p338 = pneg %p62
      $region34: #{neurosparse_forward.5} parent=31 // pred_check_branch
        %340 = sbr.rel (%p338) target = $region36
      $region35: #{neurosparse_forward.5} parent=31 // pred_region
        %s341 = smul.u32 4, %s13
        %p342 = scmp.lt.s32.totalorder %s341, 7
        %s343 = scalar_select %p342, %s341, 7
        %s344 = smul.addr %s343, 2
        %s345 = smul.addr %s344, 8
        %s346 = scalar_lea.vmem %s1, %s345
      $region36: #{neurosparse_forward.5} parent=31 // pred_fallthru
        _
    $region32: #{neurosparse_forward.5} parent=5 // pred_fallthru
      _
  $region6: #{neurosparse_forward.5} parent=0 // loop_footer
    %s11 = sadd.s32 1, %s7
  $region7: #{neurosparse_forward.5} parent=0 // loop_footer_branch
    %6 = sbr.rel target = $region3
  $region8: #{neurosparse_forward.5} parent=0 // loop_exit
    _

// kernel: neurosparse_forward.4
$region0: #{neurosparse_forward.4}
  #allocation0 [shape = 'u32[]', space=smem, size = 0x4, offset = 0x4, fixed_abs, tag = 'smem constant byte address 0x4 - core index']
  #allocation1 [shape = 'u32[144,128]{1,0:T(1,128)}', space=vmem, size = 0x12000, scoped, tag = 'internal scratch']
  %s0 = inlined_call_operand.vmem [shape: bf16[8,16,16], index: 0, kind: input, shape index: {}]
  %s1 = inlined_call_operand.vmem [shape: f32[8,16,128], index: 1, kind: input, shape index: {}]
  %s2 = inlined_call_operand.vmem [shape: bf16[128,128], index: 2, kind: input, shape index: {}]
  %s3 = inlined_call_operand.vmem [shape: f32[1,128], index: 3, kind: input, shape index: {}]
  %s4 = inlined_call_operand.vmem [shape: bf16[128,128], index: 4, kind: input, shape index: {}]
  %s5 = inlined_call_operand.vmem [shape: f32[1,128], index: 5, kind: input, shape index: {}]
  %s6 = inlined_call_operand.vmem [shape: bf16[128,128], index: 6, kind: input, shape index: {}]
  %s7 = inlined_call_operand.vmem [shape: f32[1,128], index: 7, kind: input, shape index: {}]
  %s8 = inlined_call_operand.vmem [shape: bf16[128,128], index: 8, kind: input, shape index: {}]
  %s9 = inlined_call_operand.vmem [shape: f32[1,128], index: 9, kind: input, shape index: {}]
  %s10 = inlined_call_operand.vmem [shape: bf16[128,128], index: 10, kind: input, shape index: {}]
  %s11 = inlined_call_operand.vmem [shape: f32[1,128], index: 11, kind: input, shape index: {}]
  %s12 = inlined_call_operand.vmem [shape: f32[8,16,128], index: 12, kind: output, shape index: {}]
  %s13 = sld [smem:[#allocation0]]
  $region81: #{neurosparse_forward.4} parent=0
    _
  %s15 = ssub.s32 1, %s13
  %s16 = scalar_select 0, %s15, %s13
  loop: start=0, step=1, limit=4
  $region2: #{neurosparse_forward.4} parent=0 // loop_pre_header
    _
  $region3: #{neurosparse_forward.4} parent=0 // loop_header
    %s18 = sphi 0, %s22
    %p19 = scmp.ge.s32.totalorder %s18, 4
    %s28 = sphi 0, %s30
    %s31 = sphi 0, %s28
    %s32 = sphi 0, %s31
    %s48 = sphi 0, %s32
    %s54 = sphi 0, %s56
    %s57 = sphi 0, %s54
    %s58 = sphi 0, %s57
    %s74 = sphi 0, %s58
    %s78 = sphi 0, %s78
    %s80 = sphi 0, %s78
    %s81 = sphi 0, %s80
    %s95 = sphi 0, %s81
    %s99 = sphi 0, %s99
    %s101 = sphi 0, %s99
    %s102 = sphi 0, %s101
    %s116 = sphi 0, %s102
    %s120 = sphi 0, %s120
    %s122 = sphi 0, %s120
    %s123 = sphi 0, %s122
    %s137 = sphi 0, %s123
    %s141 = sphi 0, %s141
    %s143 = sphi 0, %s141
    %s144 = sphi 0, %s143
    %s158 = sphi 0, %s144
    %s162 = sphi 0, %s162
    %s164 = sphi 0, %s162
    %s165 = sphi 0, %s164
    %s179 = sphi 0, %s165
    %s183 = sphi 0, %s183
    %s185 = sphi 0, %s183
    %s186 = sphi 0, %s185
    %s200 = sphi 0, %s186
    %s204 = sphi 0, %s204
    %s206 = sphi 0, %s204
    %s207 = sphi 0, %s206
    %s221 = sphi 0, %s207
    %s225 = sphi 0, %s225
    %s227 = sphi 0, %s225
    %s228 = sphi 0, %s227
    %s242 = sphi 0, %s228
    %s246 = sphi 0, %s246
    %s248 = sphi 0, %s246
    %s249 = sphi 0, %s248
    %s263 = sphi 0, %s249
    %s267 = sphi 0, %s267
    %s269 = sphi 0, %s267
    %s270 = sphi 0, %s269
    %s284 = sphi 0, %s270
    %s290 = sphi 0, %s292
    %s293 = sphi 0, %s290
    %s294 = sphi 0, %s293
    %s310 = sphi 0, %s294
  $region4: #{neurosparse_forward.4} parent=0 // loop_header_branch
    %21 = sbr.rel (%p19) target = $region8
  $region5: #{neurosparse_forward.4} parent=0 // loop_body
    %s23 = ssub.s32 %s18, 1
    %s24 = ssub.s32 %s18, 2
    %s25 = sadd.s32 %s18, 1
    %s26 = ssub.s32 %s18, %s25
    %p27 = scmp.eq.s32.totalorder %s26, 0
    %s29 = sadd.s32 %s28, 1
    %s30 = scalar_select %p27, %s28, %s29
    %p33 = pneg %p27
    %p34 = scmp.eq.s32.totalorder %s18, 1
    %p35 = por %p33, %p34
    %p36 = scmp.ne.s32.totalorder %s28, %s31
    %p37 = scmp.eq.s32.totalorder %s18, 0
    %p38 = por %p36, %p37
    %p39 = scmp.ne.s32.totalorder %s28, %s31
    %p40 = scmp.eq.s32.totalorder %s23, 1
    %p41 = por %p39, %p40
    %p42 = scmp.ne.s32.totalorder %s31, %s32
    %p43 = scmp.eq.s32.totalorder %s23, 0
    %p44 = por %p42, %p43
    %p45 = scmp.ne.s32.totalorder %s31, %s32
    %p46 = scmp.eq.s32.totalorder %s24, 1
    %p47 = por %p45, %p46
    %p49 = scmp.ne.s32.totalorder %s32, %s48
    %p50 = scmp.eq.s32.totalorder %s24, 0
    %p51 = por %p49, %p50
    %s52 = ssub.s32 %s18, %s25
    %p53 = scmp.eq.s32.totalorder %s52, 0
    %s55 = sadd.s32 %s54, 1
    %s56 = scalar_select %p53, %s54, %s55
    %p59 = pneg %p53
    %p60 = scmp.eq.s32.totalorder %s18, 1
    %p61 = por %p59, %p60
    %p62 = scmp.ne.s32.totalorder %s54, %s57
    %p63 = scmp.eq.s32.totalorder %s18, 0
    %p64 = por %p62, %p63
    %p65 = scmp.ne.s32.totalorder %s54, %s57
    %p66 = scmp.eq.s32.totalorder %s23, 1
    %p67 = por %p65, %p66
    %p68 = scmp.ne.s32.totalorder %s57, %s58
    %p69 = scmp.eq.s32.totalorder %s23, 0
    %p70 = por %p68, %p69
    %p71 = scmp.ne.s32.totalorder %s57, %s58
    %p72 = scmp.eq.s32.totalorder %s24, 1
    %p73 = por %p71, %p72
    %p75 = scmp.ne.s32.totalorder %s58, %s74
    %p76 = scmp.eq.s32.totalorder %s24, 0
    %p77 = por %p75, %p76
    %s79 = sadd.s32 %s78, 1
    %p82 = scmp.eq.s32.totalorder %s18, 1
    %p83 = scmp.ne.s32.totalorder %s78, %s80
    %p84 = scmp.eq.s32.totalorder %s18, 0
    %p85 = por %p83, %p84
    %p86 = scmp.ne.s32.totalorder %s78, %s80
    %p87 = scmp.eq.s32.totalorder %s23, 1
    %p88 = por %p86, %p87
    %p89 = scmp.ne.s32.totalorder %s80, %s81
    %p90 = scmp.eq.s32.totalorder %s23, 0
    %p91 = por %p89, %p90
    %p92 = scmp.ne.s32.totalorder %s80, %s81
    %p93 = scmp.eq.s32.totalorder %s24, 1
    %p94 = por %p92, %p93
    %p96 = scmp.ne.s32.totalorder %s81, %s95
    %p97 = scmp.eq.s32.totalorder %s24, 0
    %p98 = por %p96, %p97
    %s100 = sadd.s32 %s99, 1
    %p103 = scmp.eq.s32.totalorder %s18, 1
    %p104 = scmp.ne.s32.totalorder %s99, %s101
    %p105 = scmp.eq.s32.totalorder %s18, 0
    %p106 = por %p104, %p105
    %p107 = scmp.ne.s32.totalorder %s99, %s101
    %p108 = scmp.eq.s32.totalorder %s23, 1
    %p109 = por %p107, %p108
    %p110 = scmp.ne.s32.totalorder %s101, %s102
    %p111 = scmp.eq.s32.totalorder %s23, 0
    %p112 = por %p110, %p111
    %p113 = scmp.ne.s32.totalorder %s101, %s102
    %p114 = scmp.eq.s32.totalorder %s24, 1
    %p115 = por %p113, %p114
    %p117 = scmp.ne.s32.totalorder %s102, %s116
    %p118 = scmp.eq.s32.totalorder %s24, 0
    %p119 = por %p117, %p118
    %s121 = sadd.s32 %s120, 1
    %p124 = scmp.eq.s32.totalorder %s18, 1
    %p125 = scmp.ne.s32.totalorder %s120, %s122
    %p126 = scmp.eq.s32.totalorder %s18, 0
    %p127 = por %p125, %p126
    %p128 = scmp.ne.s32.totalorder %s120, %s122
    %p129 = scmp.eq.s32.totalorder %s23, 1
    %p130 = por %p128, %p129
    %p131 = scmp.ne.s32.totalorder %s122, %s123
    %p132 = scmp.eq.s32.totalorder %s23, 0
    %p133 = por %p131, %p132
    %p134 = scmp.ne.s32.totalorder %s122, %s123
    %p135 = scmp.eq.s32.totalorder %s24, 1
    %p136 = por %p134, %p135
    %p138 = scmp.ne.s32.totalorder %s123, %s137
    %p139 = scmp.eq.s32.totalorder %s24, 0
    %p140 = por %p138, %p139
    %s142 = sadd.s32 %s141, 1
    %p145 = scmp.eq.s32.totalorder %s18, 1
    %p146 = scmp.ne.s32.totalorder %s141, %s143
    %p147 = scmp.eq.s32.totalorder %s18, 0
    %p148 = por %p146, %p147
    %p149 = scmp.ne.s32.totalorder %s141, %s143
    %p150 = scmp.eq.s32.totalorder %s23, 1
    %p151 = por %p149, %p150
    %p152 = scmp.ne.s32.totalorder %s143, %s144
    %p153 = scmp.eq.s32.totalorder %s23, 0
    %p154 = por %p152, %p153
    %p155 = scmp.ne.s32.totalorder %s143, %s144
    %p156 = scmp.eq.s32.totalorder %s24, 1
    %p157 = por %p155, %p156
    %p159 = scmp.ne.s32.totalorder %s144, %s158
    %p160 = scmp.eq.s32.totalorder %s24, 0
    %p161 = por %p159, %p160
    %s163 = sadd.s32 %s162, 1
    %p166 = scmp.eq.s32.totalorder %s18, 1
    %p167 = scmp.ne.s32.totalorder %s162, %s164
    %p168 = scmp.eq.s32.totalorder %s18, 0
    %p169 = por %p167, %p168
    %p170 = scmp.ne.s32.totalorder %s162, %s164
    %p171 = scmp.eq.s32.totalorder %s23, 1
    %p172 = por %p170, %p171
    %p173 = scmp.ne.s32.totalorder %s164, %s165
    %p174 = scmp.eq.s32.totalorder %s23, 0
    %p175 = por %p173, %p174
    %p176 = scmp.ne.s32.totalorder %s164, %s165
    %p177 = scmp.eq.s32.totalorder %s24, 1
    %p178 = por %p176, %p177
    %p180 = scmp.ne.s32.totalorder %s165, %s179
    %p181 = scmp.eq.s32.totalorder %s24, 0
    %p182 = por %p180, %p181
    %s184 = sadd.s32 %s183, 1
    %p187 = scmp.eq.s32.totalorder %s18, 1
    %p188 = scmp.ne.s32.totalorder %s183, %s185
    %p189 = scmp.eq.s32.totalorder %s18, 0
    %p190 = por %p188, %p189
    %p191 = scmp.ne.s32.totalorder %s183, %s185
    %p192 = scmp.eq.s32.totalorder %s23, 1
    %p193 = por %p191, %p192
    %p194 = scmp.ne.s32.totalorder %s185, %s186
    %p195 = scmp.eq.s32.totalorder %s23, 0
    %p196 = por %p194, %p195
    %p197 = scmp.ne.s32.totalorder %s185, %s186
    %p198 = scmp.eq.s32.totalorder %s24, 1
    %p199 = por %p197, %p198
    %p201 = scmp.ne.s32.totalorder %s186, %s200
    %p202 = scmp.eq.s32.totalorder %s24, 0
    %p203 = por %p201, %p202
    %s205 = sadd.s32 %s204, 1
    %p208 = scmp.eq.s32.totalorder %s18, 1
    %p209 = scmp.ne.s32.totalorder %s204, %s206
    %p210 = scmp.eq.s32.totalorder %s18, 0
    %p211 = por %p209, %p210
    %p212 = scmp.ne.s32.totalorder %s204, %s206
    %p213 = scmp.eq.s32.totalorder %s23, 1
    %p214 = por %p212, %p213
    %p215 = scmp.ne.s32.totalorder %s206, %s207
    %p216 = scmp.eq.s32.totalorder %s23, 0
    %p217 = por %p215, %p216
    %p218 = scmp.ne.s32.totalorder %s206, %s207
    %p219 = scmp.eq.s32.totalorder %s24, 1
    %p220 = por %p218, %p219
    %p222 = scmp.ne.s32.totalorder %s207, %s221
    %p223 = scmp.eq.s32.totalorder %s24, 0
    %p224 = por %p222, %p223
    %s226 = sadd.s32 %s225, 1
    %p229 = scmp.eq.s32.totalorder %s18, 1
    %p230 = scmp.ne.s32.totalorder %s225, %s227
    %p231 = scmp.eq.s32.totalorder %s18, 0
    %p232 = por %p230, %p231
    %p233 = scmp.ne.s32.totalorder %s225, %s227
    %p234 = scmp.eq.s32.totalorder %s23, 1
    %p235 = por %p233, %p234
    %p236 = scmp.ne.s32.totalorder %s227, %s228
    %p237 = scmp.eq.s32.totalorder %s23, 0
    %p238 = por %p236, %p237
    %p239 = scmp.ne.s32.totalorder %s227, %s228
    %p240 = scmp.eq.s32.totalorder %s24, 1
    %p241 = por %p239, %p240
    %p243 = scmp.ne.s32.totalorder %s228, %s242
    %p244 = scmp.eq.s32.totalorder %s24, 0
    %p245 = por %p243, %p244
    %s247 = sadd.s32 %s246, 1
    %p250 = scmp.eq.s32.totalorder %s18, 1
    %p251 = scmp.ne.s32.totalorder %s246, %s248
    %p252 = scmp.eq.s32.totalorder %s18, 0
    %p253 = por %p251, %p252
    %p254 = scmp.ne.s32.totalorder %s246, %s248
    %p255 = scmp.eq.s32.totalorder %s23, 1
    %p256 = por %p254, %p255
    %p257 = scmp.ne.s32.totalorder %s248, %s249
    %p258 = scmp.eq.s32.totalorder %s23, 0
    %p259 = por %p257, %p258
    %p260 = scmp.ne.s32.totalorder %s248, %s249
    %p261 = scmp.eq.s32.totalorder %s24, 1
    %p262 = por %p260, %p261
    %p264 = scmp.ne.s32.totalorder %s249, %s263
    %p265 = scmp.eq.s32.totalorder %s24, 0
    %p266 = por %p264, %p265
    %s268 = sadd.s32 %s267, 1
    %p271 = scmp.eq.s32.totalorder %s18, 1
    %p272 = scmp.ne.s32.totalorder %s267, %s269
    %p273 = scmp.eq.s32.totalorder %s18, 0
    %p274 = por %p272, %p273
    %p275 = scmp.ne.s32.totalorder %s267, %s269
    %p276 = scmp.eq.s32.totalorder %s23, 1
    %p277 = por %p275, %p276
    %p278 = scmp.ne.s32.totalorder %s269, %s270
    %p279 = scmp.eq.s32.totalorder %s23, 0
    %p280 = por %p278, %p279
    %p281 = scmp.ne.s32.totalorder %s269, %s270
    %p282 = scmp.eq.s32.totalorder %s24, 1
    %p283 = por %p281, %p282
    %p285 = scmp.ne.s32.totalorder %s270, %s284
    %p286 = scmp.eq.s32.totalorder %s24, 0
    %p287 = por %p285, %p286
    %s288 = ssub.s32 %s18, %s25
    %p289 = scmp.eq.s32.totalorder %s288, 0
    %s291 = sadd.s32 %s290, 1
    %s292 = scalar_select %p289, %s290, %s291
    %p295 = pneg %p289
    %p296 = scmp.eq.s32.totalorder %s18, 1
    %p297 = por %p295, %p296
    %p298 = scmp.ne.s32.totalorder %s290, %s293
    %p299 = scmp.eq.s32.totalorder %s18, 0
    %p300 = por %p298, %p299
    %p301 = scmp.ne.s32.totalorder %s290, %s293
    %p302 = scmp.eq.s32.totalorder %s23, 1
    %p303 = por %p301, %p302
    %p304 = scmp.ne.s32.totalorder %s293, %s294
    %p305 = scmp.eq.s32.totalorder %s23, 0
    %p306 = por %p304, %p305
    %p307 = scmp.ne.s32.totalorder %s293, %s294
    %p308 = scmp.eq.s32.totalorder %s24, 1
    %p309 = por %p307, %p308
    %p311 = scmp.ne.s32.totalorder %s294, %s310
    %p312 = scmp.eq.s32.totalorder %s24, 0
    %p313 = por %p311, %p312
    %p314 = scmp.le.s32.totalorder 1, %s18
    %p315 = scmp.lt.s32.totalorder %s18, 3
    %p316 = pnand %p314, %p315
    %p317 = pneg %p316
    // Predicated region
    $region9: #{neurosparse_forward.4} parent=5 // pred_check
      _
    $region10: #{neurosparse_forward.4} parent=5 // pred_check_branch
      %319 = sbr.rel (%p316) target = $region12
    $region11: #{neurosparse_forward.4} parent=5 // pred_region
      %s320 = ssub.s32 %s18, 1
      // Predicated region
      $region13: #{neurosparse_forward.4} parent=11 // pred_check
        %p321 = pneg %p91
      $region14: #{neurosparse_forward.4} parent=11 // pred_check_branch
        %323 = sbr.rel (%p321) target = $region16
      $region15: #{neurosparse_forward.4} parent=11 // pred_region
        _
      $region16: #{neurosparse_forward.4} parent=11 // pred_fallthru
        _
      // Predicated region
      $region17: #{neurosparse_forward.4} parent=11 // pred_check
        %p324 = pneg %p112
      $region18: #{neurosparse_forward.4} parent=11 // pred_check_branch
        %326 = sbr.rel (%p324) target = $region20
      $region19: #{neurosparse_forward.4} parent=11 // pred_region
        _
      $region20: #{neurosparse_forward.4} parent=11 // pred_fallthru
        _
      // Predicated region
      $region21: #{neurosparse_forward.4} parent=11 // pred_check
        %p327 = pneg %p133
      $region22: #{neurosparse_forward.4} parent=11 // pred_check_branch
        %329 = sbr.rel (%p327) target = $region24
      $region23: #{neurosparse_forward.4} parent=11 // pred_region
        _
      $region24: #{neurosparse_forward.4} parent=11 // pred_fallthru
        _
      // Predicated region
      $region25: #{neurosparse_forward.4} parent=11 // pred_check
        %p330 = pneg %p154
      $region26: #{neurosparse_forward.4} parent=11 // pred_check_branch
        %332 = sbr.rel (%p330) target = $region28
      $region27: #{neurosparse_forward.4} parent=11 // pred_region
        _
      $region28: #{neurosparse_forward.4} parent=11 // pred_fallthru
        _
      // Predicated region
      $region29: #{neurosparse_forward.4} parent=11 // pred_check
        %p333 = pneg %p175
      $region30: #{neurosparse_forward.4} parent=11 // pred_check_branch
        %335 = sbr.rel (%p333) target = $region32
      $region31: #{neurosparse_forward.4} parent=11 // pred_region
        _
      $region32: #{neurosparse_forward.4} parent=11 // pred_fallthru
        _
      // Predicated region
      $region33: #{neurosparse_forward.4} parent=11 // pred_check
        %p336 = pneg %p196
      $region34: #{neurosparse_forward.4} parent=11 // pred_check_branch
        %338 = sbr.rel (%p336) target = $region36
      $region35: #{neurosparse_forward.4} parent=11 // pred_region
        _
      $region36: #{neurosparse_forward.4} parent=11 // pred_fallthru
        _
      // Predicated region
      $region37: #{neurosparse_forward.4} parent=11 // pred_check
        %p339 = pneg %p217
      $region38: #{neurosparse_forward.4} parent=11 // pred_check_branch
        %341 = sbr.rel (%p339) target = $region40
      $region39: #{neurosparse_forward.4} parent=11 // pred_region
        _
      $region40: #{neurosparse_forward.4} parent=11 // pred_fallthru
        _
      // Predicated region
      $region41: #{neurosparse_forward.4} parent=11 // pred_check
        %p342 = pneg %p238
      $region42: #{neurosparse_forward.4} parent=11 // pred_check_branch
        %344 = sbr.rel (%p342) target = $region44
      $region43: #{neurosparse_forward.4} parent=11 // pred_region
        _
      $region44: #{neurosparse_forward.4} parent=11 // pred_fallthru
        _
      // Predicated region
      $region45: #{neurosparse_forward.4} parent=11 // pred_check
        %p345 = pneg %p259
      $region46: #{neurosparse_forward.4} parent=11 // pred_check_branch
        %347 = sbr.rel (%p345) target = $region48
      $region47: #{neurosparse_forward.4} parent=11 // pred_region
        _
      $region48: #{neurosparse_forward.4} parent=11 // pred_fallthru
        _
      // Predicated region
      $region49: #{neurosparse_forward.4} parent=11 // pred_check
        %p348 = pneg %p280
      $region50: #{neurosparse_forward.4} parent=11 // pred_check_branch
        %350 = sbr.rel (%p348) target = $region52
      $region51: #{neurosparse_forward.4} parent=11 // pred_region
        _
      $region52: #{neurosparse_forward.4} parent=11 // pred_fallthru
        _
    $region12: #{neurosparse_forward.4} parent=5 // pred_fallthru
      _
    %p351 = scmp.lt.s32.totalorder %s18, 2
    // Predicated region
    $region53: #{neurosparse_forward.4} parent=5 // pred_check
      %p352 = pneg %p351
    $region54: #{neurosparse_forward.4} parent=5 // pred_check_branch
      %354 = sbr.rel (%p352) target = $region56
    $region55: #{neurosparse_forward.4} parent=5 // pred_region
      // Predicated region
      $region57: #{neurosparse_forward.4} parent=55 // pred_check
        %p355 = pneg %p38
      $region58: #{neurosparse_forward.4} parent=55 // pred_check_branch
        %357 = sbr.rel (%p355) target = $region60
      $region59: #{neurosparse_forward.4} parent=55 // pred_region
        %s358 = smul.u32 4, %s18
        %p359 = scmp.lt.s32.totalorder %s358, 7
        %s360 = scalar_select %p359, %s358, 7
        %s361 = smul.addr %s360, 2
        %s362 = smul.addr %s361, 4
        %s363 = scalar_lea.vmem %s0, %s362
        %s364 = smul.u32 4, %s18
      $region60: #{neurosparse_forward.4} parent=55 // pred_fallthru
        _
      // Predicated region
      $region61: #{neurosparse_forward.4} parent=55 // pred_check
        %p365 = pneg %p64
      $region62: #{neurosparse_forward.4} parent=55 // pred_check_branch
        %367 = sbr.rel (%p365) target = $region64
      $region63: #{neurosparse_forward.4} parent=55 // pred_region
        %s368 = smul.u32 4, %s18
        %p369 = scmp.lt.s32.totalorder %s368, 7
        %s370 = scalar_select %p369, %s368, 7
        %s371 = smul.addr %s370, 2
        %s372 = smul.addr %s371, 8
        %s373 = scalar_lea.vmem %s1, %s372
        %s374 = smul.u32 4, %s18
      $region64: #{neurosparse_forward.4} parent=55 // pred_fallthru
        _
    $region56: #{neurosparse_forward.4} parent=5 // pred_fallthru
      _
    %p375 = scmp.le.s32.totalorder 1, %s18
    %p376 = scmp.lt.s32.totalorder %s18, 3
    %p377 = pnand %p375, %p376
    %p378 = pneg %p377
    // Predicated region
    $region65: #{neurosparse_forward.4} parent=5 // pred_check
      _
    $region66: #{neurosparse_forward.4} parent=5 // pred_check_branch
      %380 = sbr.rel (%p377) target = $region68
    $region67: #{neurosparse_forward.4} parent=5 // pred_region
      %s381 = ssub.s32 %s18, 1
      %s382 = smul.u32 4, %s23
      %p383 = scmp.lt.s32.totalorder %s382, 7
      %s384 = scalar_select %p383, %s382, 7
      %s385 = smul.addr %s384, 2
      %s386 = smul.addr %s385, 4
      %s387 = scalar_lea.vmem %s0, %s386
      %p388 = pneg %p44
      %p389 = pneg %p41
      %s390 = smul.u32 4, %s23
      %p391 = scmp.lt.s32.totalorder %s390, 7
      %s392 = scalar_select %p391, %s390, 7
      %s393 = smul.addr %s392, 2
      %s394 = smul.addr %s393, 8
      %s395 = scalar_lea.vmem %s1, %s394
      %p396 = pneg %p70
      %p397 = pneg %p67
      %p398 = pneg %p91
      %p399 = pneg %p88
      %p400 = pneg %p112
      %p401 = pneg %p109
      %p402 = pneg %p133
      %p403 = pneg %p130
      %p404 = pneg %p154
      %p405 = pneg %p151
      %p406 = pneg %p175
      %p407 = pneg %p172
      %p408 = pneg %p196
      %p409 = pneg %p193
      %p410 = pneg %p217
      %p411 = pneg %p214
      %p412 = pneg %p238
      %p413 = pneg %p235
      %p414 = pneg %p259
      %p415 = pneg %p256
      %p416 = pneg %p280
      %p417 = pneg %p277
      %p418 = pneg %p306
      %p419 = pneg %p303
      %s420 = smul.u32 4, %s23
      %p421 = scmp.lt.s32.totalorder %s420, 7
      %s422 = scalar_select %p421, %s420, 7
      %s423 = smul.addr %s422, 2
      %s424 = smul.addr %s423, 8
      %s425 = scalar_lea.vmem %s12, %s424
      %s426 = smul.u32 4, %s23
      %p427 = scmp.lt.s32.totalorder %s426, 7
      %s428 = scalar_select %p427, %s426, 7
      %s429 = smul.addr %s428, 2
      %s430 = smul.addr %s429, 4
      %s431 = scalar_lea.vmem %s0, %s430
      %s432 = smul.u32 4, %s23
      %s433 = smul.u32 4, %s23
      %p434 = scmp.lt.s32.totalorder %s433, 7
      %s435 = scalar_select %p434, %s433, 7
      %s436 = smul.addr %s435, 2
      %s437 = smul.addr %s436, 8
      %s438 = scalar_lea.vmem %s1, %s437
      %s439 = smul.u32 4, %s23
      %s440 = smul.u32 4, %s23
      %p441 = scmp.lt.s32.totalorder %s440, 7
      %s442 = scalar_select %p441, %s440, 7
      %s443 = smul.addr %s442, 2
      %s444 = smul.addr %s443, 8
      %s445 = scalar_lea.vmem %s12, %s444
      %s446 = smul.u32 4, %s23
      %v448 = vld [vmem:[%s431] sm:$0xf]
      %v449 = vld [vmem:[%s431 + $0x4] sm:$0xf]
      %v450 = vld [vmem:[%s431 + $0x8] sm:$0xf]
      %v451 = vld [vmem:[%s431 + $0xc] sm:$0xf]
      %v452 = vld [vmem:[%s431 + $0x10] sm:$0xf]
      %v453 = vld [vmem:[%s431 + $0x14] sm:$0xf]
      %v454 = vld [vmem:[%s431 + $0x18] sm:$0xf]
      %v455 = vld [vmem:[%s431 + $0x1c] sm:$0xf]
      %v456 = vld [vmem:[%s438] sm:$0xff]
      %v457 = vld [vmem:[%s438 + $0x8] sm:$0xff]
      %v458 = vld [vmem:[%s438 + $0x10] sm:$0xff]
      %v459 = vld [vmem:[%s438 + $0x18] sm:$0xff]
      %v460 = vld [vmem:[%s438 + $0x20] sm:$0xff]
      %v461 = vld [vmem:[%s438 + $0x28] sm:$0xff]
      %v462 = vld [vmem:[%s438 + $0x30] sm:$0xff]
      %v463 = vld [vmem:[%s438 + $0x38] sm:$0xff]
      %v464 = vpack.c.bf16 %v457, %v456
      %v465 = vpack.c.bf16 %v459, %v458
      %v466 = vpack.c.bf16 %v461, %v460
      %v467 = vpack.c.bf16 %v463, %v462
      %v470 = vunpack.c.l.b16 %v448
      %v471 = vunpack.c.l.b16 %v449
      %v472 = vpack.c.b16 %v471, %v470
      %vm473 = vcmask 130048
      %v475 = vsel %vm473, %v472, 0
      %477 = vmatprep.subr.bf16.mxu0 0
      %478 = vmatpush1.bf16.msra.mxu0 %v464
      %479 = vmatprep.subr.bf16.mxu0 0
      %480 = vmatpush1.bf16.msra.mxu0 0
      %481 = vmatprep.subr.bf16.mxu0 0
      %482 = vmatpush1.bf16.msra.mxu0 0
      %483 = vmatprep.subr.bf16.mxu0 0
      %484 = vmatpush1.bf16.msra.mxu0 0
      %485 = vmatprep.subr.bf16.mxu0 0
      %486 = vmatpush1.bf16.msra.mxu0 0
      %487 = vmatprep.subr.bf16.mxu0 0
      %488 = vmatpush1.bf16.msra.mxu0 0
      %489 = vmatprep.subr.bf16.mxu0 0
      %490 = vmatpush1.bf16.msra.mxu0 0
      %491 = vmatprep.subr.bf16.mxu0 0
      %492 = vmatpush1.bf16.msra.mxu0 0
      %493 = vmatprep.subr.bf16.mxu0 0
      %494 = vmatpush1.bf16.msra.mxu0 0
      %495 = vmatprep.subr.bf16.mxu0 0
      %496 = vmatpush1.bf16.msra.mxu0 0
      %497 = vmatprep.subr.bf16.mxu0 0
      %498 = vmatpush1.bf16.msra.mxu0 0
      %499 = vmatprep.subr.bf16.mxu0 0
      %500 = vmatpush1.bf16.msra.mxu0 0
      %501 = vmatprep.subr.bf16.mxu0 0
      %502 = vmatpush1.bf16.msra.mxu0 0
      %503 = vmatprep.subr.bf16.mxu0 0
      %504 = vmatpush1.bf16.msra.mxu0 0
      %505 = vmatprep.subr.bf16.mxu0 0
      %506 = vmatpush1.bf16.msra.mxu0 0
      %507 = vmatprep.subr.bf16.mxu0 0
      %508 = vmatpush1.bf16.msra.mxu0 0
      %509 = vmatprep.mubr.bf16.mxu0 0
      %510 = vmatmul.mubr.bf16.gmra.mrb[0].mxu0 %v475
      %v511 = vpop.f32.mrb[0].mxu0
      %v512 = vadd.f32 %v456, %v511
      %v513 = vpop.f32.mrb[0].mxu0
      %v514 = vpop.f32.mrb[0].mxu0
      %v515 = vadd.f32 %v457, %v514
      %v516 = vpop.f32.mrb[0].mxu0
      %517 = vdwg.mxu0
      %v520 = vunpack.c.l.b16 %v450
      %v521 = vunpack.c.l.b16 %v451
      %v522 = vpack.c.b16 %v521, %v520
      %v524 = vsel %vm473, %v522, 0
      %526 = vmatprep.subr.bf16.mxu0 0
      %527 = vmatpush1.bf16.msra.mxu0 %v465
      %528 = vmatprep.subr.bf16.mxu0 0
      %529 = vmatpush1.bf16.msra.mxu0 0
      %530 = vmatprep.subr.bf16.mxu0 0
      %531 = vmatpush1.bf16.msra.mxu0 0
      %532 = vmatprep.subr.bf16.mxu0 0
      %533 = vmatpush1.bf16.msra.mxu0 0
      %534 = vmatprep.subr.bf16.mxu0 0
      %535 = vmatpush1.bf16.msra.mxu0 0
      %536 = vmatprep.subr.bf16.mxu0 0
      %537 = vmatpush1.bf16.msra.mxu0 0
      %538 = vmatprep.subr.bf16.mxu0 0
      %539 = vmatpush1.bf16.msra.mxu0 0
      %540 = vmatprep.subr.bf16.mxu0 0
      %541 = vmatpush1.bf16.msra.mxu0 0
      %542 = vmatprep.subr.bf16.mxu0 0
      %543 = vmatpush1.bf16.msra.mxu0 0
      %544 = vmatprep.subr.bf16.mxu0 0
      %545 = vmatpush1.bf16.msra.mxu0 0
      %546 = vmatprep.subr.bf16.mxu0 0
      %547 = vmatpush1.bf16.msra.mxu0 0
      %548 = vmatprep.subr.bf16.mxu0 0
      %549 = vmatpush1.bf16.msra.mxu0 0
      %550 = vmatprep.subr.bf16.mxu0 0
      %551 = vmatpush1.bf16.msra.mxu0 0
      %552 = vmatprep.subr.bf16.mxu0 0
      %553 = vmatpush1.bf16.msra.mxu0 0
      %554 = vmatprep.subr.bf16.mxu0 0
      %555 = vmatpush1.bf16.msra.mxu0 0
      %556 = vmatprep.subr.bf16.mxu0 0
      %557 = vmatpush1.bf16.msra.mxu0 0
      %558 = vmatprep.mubr.bf16.mxu0 0
      %559 = vmatmul.mubr.bf16.gmra.mrb[0].mxu0 %v524
      %v560 = vpop.f32.mrb[0].mxu0
      %v561 = vadd.f32 %v458, %v560
      %v562 = vpop.f32.mrb[0].mxu0
      %v563 = vpop.f32.mrb[0].mxu0
      %v564 = vadd.f32 %v459, %v563
      %v565 = vpop.f32.mrb[0].mxu0
      %566 = vdwg.mxu0
      %v569 = vunpack.c.l.b16 %v452
      %v570 = vunpack.c.l.b16 %v453
      %v571 = vpack.c.b16 %v570, %v569
      %v573 = vsel %vm473, %v571, 0
      %575 = vmatprep.subr.bf16.mxu0 0
      %576 = vmatpush1.bf16.msra.mxu0 %v466
      %577 = vmatprep.subr.bf16.mxu0 0
      %578 = vmatpush1.bf16.msra.mxu0 0
      %579 = vmatprep.subr.bf16.mxu0 0
      %580 = vmatpush1.bf16.msra.mxu0 0
      %581 = vmatprep.subr.bf16.mxu0 0
      %582 = vmatpush1.bf16.msra.mxu0 0
      %583 = vmatprep.subr.bf16.mxu0 0
      %584 = vmatpush1.bf16.msra.mxu0 0
      %585 = vmatprep.subr.bf16.mxu0 0
      %586 = vmatpush1.bf16.msra.mxu0 0
      %587 = vmatprep.subr.bf16.mxu0 0
      %588 = vmatpush1.bf16.msra.mxu0 0
      %589 = vmatprep.subr.bf16.mxu0 0
      %590 = vmatpush1.bf16.msra.mxu0 0
      %591 = vmatprep.subr.bf16.mxu0 0
      %592 = vmatpush1.bf16.msra.mxu0 0
      %593 = vmatprep.subr.bf16.mxu0 0
      %594 = vmatpush1.bf16.msra.mxu0 0
      %595 = vmatprep.subr.bf16.mxu0 0
      %596 = vmatpush1.bf16.msra.mxu0 0
      %597 = vmatprep.subr.bf16.mxu0 0
      %598 = vmatpush1.bf16.msra.mxu0 0
      %599 = vmatprep.subr.bf16.mxu0 0
      %600 = vmatpush1.bf16.msra.mxu0 0
      %601 = vmatprep.subr.bf16.mxu0 0
      %602 = vmatpush1.bf16.msra.mxu0 0
      %603 = vmatprep.subr.bf16.mxu0 0
      %604 = vmatpush1.bf16.msra.mxu0 0
      %605 = vmatprep.subr.bf16.mxu0 0
      %606 = vmatpush1.bf16.msra.mxu0 0
      %607 = vmatprep.mubr.bf16.mxu0 0
      %608 = vmatmul.mubr.bf16.gmra.mrb[0].mxu0 %v573
      %v609 = vpop.f32.mrb[0].mxu0
      %v610 = vadd.f32 %v460, %v609
      %v611 = vpop.f32.mrb[0].mxu0
      %v612 = vpop.f32.mrb[0].mxu0
      %v613 = vadd.f32 %v461, %v612
      %v614 = vpop.f32.mrb[0].mxu0
      %615 = vdwg.mxu0
      %v618 = vunpack.c.l.b16 %v454
      %v619 = vunpack.c.l.b16 %v455
      %v620 = vpack.c.b16 %v619, %v618
      %v622 = vsel %vm473, %v620, 0
      %624 = vmatprep.subr.bf16.mxu0 0
      %625 = vmatpush1.bf16.msra.mxu0 %v467
      %626 = vmatprep.subr.bf16.mxu0 0
      %627 = vmatpush1.bf16.msra.mxu0 0
      %628 = vmatprep.subr.bf16.mxu0 0
      %629 = vmatpush1.bf16.msra.mxu0 0
      %630 = vmatprep.subr.bf16.mxu0 0
      %631 = vmatpush1.bf16.msra.mxu0 0
      %632 = vmatprep.subr.bf16.mxu0 0
      %633 = vmatpush1.bf16.msra.mxu0 0
      %634 = vmatprep.subr.bf16.mxu0 0
      %635 = vmatpush1.bf16.msra.mxu0 0
      %636 = vmatprep.subr.bf16.mxu0 0
      %637 = vmatpush1.bf16.msra.mxu0 0
      %638 = vmatprep.subr.bf16.mxu0 0
      %639 = vmatpush1.bf16.msra.mxu0 0
      %640 = vmatprep.subr.bf16.mxu0 0
      %641 = vmatpush1.bf16.msra.mxu0 0
      %642 = vmatprep.subr.bf16.mxu0 0
      %643 = vmatpush1.bf16.msra.mxu0 0
      %644 = vmatprep.subr.bf16.mxu0 0
      %645 = vmatpush1.bf16.msra.mxu0 0
      %646 = vmatprep.subr.bf16.mxu0 0
      %647 = vmatpush1.bf16.msra.mxu0 0
      %648 = vmatprep.subr.bf16.mxu0 0
      %649 = vmatpush1.bf16.msra.mxu0 0
      %650 = vmatprep.subr.bf16.mxu0 0
      %651 = vmatpush1.bf16.msra.mxu0 0
      %652 = vmatprep.subr.bf16.mxu0 0
      %653 = vmatpush1.bf16.msra.mxu0 0
      %654 = vmatprep.subr.bf16.mxu0 0
      %655 = vmatpush1.bf16.msra.mxu0 0
      %656 = vmatprep.mubr.bf16.mxu0 0
      %657 = vmatmul.mubr.bf16.gmra.mrb[0].mxu0 %v622
      %v658 = vpop.f32.mrb[0].mxu0
      %v659 = vadd.f32 %v462, %v658
      %v660 = vpop.f32.mrb[0].mxu0
      %v661 = vpop.f32.mrb[0].mxu0
      %v662 = vadd.f32 %v463, %v661
      %v663 = vpop.f32.mrb[0].mxu0
      %664 = vdwg.mxu0
      %v665 = vld [vmem:[%s2] sm:$0xf]
      %v666 = vld [vmem:[%s2 + $0x4] sm:$0xf]
      %v667 = vld [vmem:[%s2 + $0x8] sm:$0xf]
      %v668 = vld [vmem:[%s2 + $0xc] sm:$0xf]
      %v669 = vld [vmem:[%s2 + $0x10] sm:$0xf]
      %v670 = vld [vmem:[%s2 + $0x14] sm:$0xf]
      %v671 = vld [vmem:[%s2 + $0x18] sm:$0xf]
      %v672 = vld [vmem:[%s2 + $0x1c] sm:$0xf]
      %v673 = vld [vmem:[%s2 + $0x20] sm:$0xf]
      %v674 = vld [vmem:[%s2 + $0x24] sm:$0xf]
      %v675 = vld [vmem:[%s2 + $0x28] sm:$0xf]
      %v676 = vld [vmem:[%s2 + $0x2c] sm:$0xf]
      %v677 = vld [vmem:[%s2 + $0x30] sm:$0xf]
      %v678 = vld [vmem:[%s2 + $0x34] sm:$0xf]
      %v679 = vld [vmem:[%s2 + $0x38] sm:$0xf]
      %v680 = vld [vmem:[%s2 + $0x3c] sm:$0xf]
      %v681 = vpack.c.bf16 %v515, %v512
      %v682 = vpack.c.bf16 %v564, %v561
      %v683 = vpack.c.bf16 %v613, %v610
      %v684 = vpack.c.bf16 %v662, %v659
      %v701 = vunpack.c.l.b16 %v665
      %v702 = vunpack.c.l.b16 %v666
      %v703 = vunpack.c.l.b16 %v667
      %v704 = vunpack.c.l.b16 %v668
      %v705 = vunpack.c.l.b16 %v669
      %v706 = vunpack.c.l.b16 %v670
      %v707 = vunpack.c.l.b16 %v671
      %v708 = vunpack.c.l.b16 %v672
      %v709 = vunpack.c.l.b16 %v673
      %v710 = vunpack.c.l.b16 %v674
      %v711 = vunpack.c.l.b16 %v675
      %v712 = vunpack.c.l.b16 %v676
      %v713 = vunpack.c.l.b16 %v677
      %v714 = vunpack.c.l.b16 %v678
      %v715 = vunpack.c.l.b16 %v679
      %v716 = vunpack.c.l.b16 %v680
      %v717 = vpack.c.b16 %v702, %v701
      %v718 = vpack.c.b16 %v704, %v703
      %v719 = vpack.c.b16 %v706, %v705
      %v720 = vpack.c.b16 %v708, %v707
      %v721 = vpack.c.b16 %v710, %v709
      %v722 = vpack.c.b16 %v712, %v711
      %v723 = vpack.c.b16 %v714, %v713
      %v724 = vpack.c.b16 %v716, %v715
      %733 = vmatprep.subr.bf16.mxu0 0
      %734 = vmatpush1.bf16.msra.mxu0 %v717
      %735 = vmatprep.subr.bf16.mxu0 0
      %736 = vmatpush1.bf16.msra.mxu0 %v718
      %737 = vmatprep.subr.bf16.mxu0 0
      %738 = vmatpush1.bf16.msra.mxu0 %v719
      %739 = vmatprep.subr.bf16.mxu0 0
      %740 = vmatpush1.bf16.msra.mxu0 %v720
      %741 = vmatprep.subr.bf16.mxu0 0
      %742 = vmatpush1.bf16.msra.mxu0 %v721
      %743 = vmatprep.subr.bf16.mxu0 0
      %744 = vmatpush1.bf16.msra.mxu0 %v722
      %745 = vmatprep.subr.bf16.mxu0 0
      %746 = vmatpush1.bf16.msra.mxu0 %v723
      %747 = vmatprep.subr.bf16.mxu0 0
      %748 = vmatpush1.bf16.msra.mxu0 %v724
      %749 = vmatprep.subr.bf16.mxu0 0
      %750 = vmatpush1.bf16.msra.mxu0 0
      %751 = vmatprep.subr.bf16.mxu0 0
      %752 = vmatpush1.bf16.msra.mxu0 0
      %753 = vmatprep.subr.bf16.mxu0 0
      %754 = vmatpush1.bf16.msra.mxu0 0
      %755 = vmatprep.subr.bf16.mxu0 0
      %756 = vmatpush1.bf16.msra.mxu0 0
      %757 = vmatprep.subr.bf16.mxu0 0
      %758 = vmatpush1.bf16.msra.mxu0 0
      %759 = vmatprep.subr.bf16.mxu0 0
      %760 = vmatpush1.bf16.msra.mxu0 0
      %761 = vmatprep.subr.bf16.mxu0 0
      %762 = vmatpush1.bf16.msra.mxu0 0
      %763 = vmatprep.subr.bf16.mxu0 0
      %764 = vmatpush1.bf16.msra.mxu0 0
      %765 = vmatprep.mubr.bf16.mxu0 0
      %766 = vmatmul.mubr.bf16.gmra.mrb[0].mxu0 %v681
      %v767 = vpop.f32.mrb[0].mxu0
      %v768 = vadd.f32 0.0, %v767
      %v769 = vpop.f32.mrb[0].mxu0
      %v770 = vpop.f32.mrb[0].mxu0
      %v771 = vadd.f32 0.0, %v770
      %v772 = vpop.f32.mrb[0].mxu0
      %773 = vmatprep.mubr.bf16.mxu0 0
      %774 = vmatmul.mubr.bf16.gmra.mrb[0].mxu0 %v682
      %v775 = vpop.f32.mrb[0].mxu0
      %v776 = vadd.f32 0.0, %v775
      %v777 = vpop.f32.mrb[0].mxu0
      %v778 = vpop.f32.mrb[0].mxu0
      %v779 = vadd.f32 0.0, %v778
      %v780 = vpop.f32.mrb[0].mxu0
      %781 = vmatprep.mubr.bf16.mxu0 0
      %782 = vmatmul.mubr.bf16.gmra.mrb[0].mxu0 %v683
      %v783 = vpop.f32.mrb[0].mxu0
      %v784 = vadd.f32 0.0, %v783
      %v785 = vpop.f32.mrb[0].mxu0
      %v786 = vpop.f32.mrb[0].mxu0
      %v787 = vadd.f32 0.0, %v786
      %v788 = vpop.f32.mrb[0].mxu0
      %789 = vmatprep.mubr.bf16.mxu0 0
      %790 = vmatmul.mubr.bf16.gmra.mrb[0].mxu0 %v684
      %v791 = vpop.f32.mrb[0].mxu0
      %v792 = vadd.f32 0.0, %v791
      %v793 = vpop.f32.mrb[0].mxu0
      %v794 = vpop.f32.mrb[0].mxu0
      %v795 = vadd.f32 0.0, %v794
      %v796 = vpop.f32.mrb[0].mxu0
      %797 = vdwg.mxu0
      %v798 = vld [vmem:[%s3] sm:$0x1]
      %v800 = vlaneseq
      %v801 = vshrl.u32 %v800, 7
      %v802 = vsub.s32 0, %v801
      %v803 = vrot.slane %v798, %v802
      %v805 = vadd.f32 %v768, %v803
      %v806 = vadd.f32 %v771, %v803
      %v807 = vadd.f32 %v776, %v803
      %v808 = vadd.f32 %v779, %v803
      %v809 = vadd.f32 %v784, %v803
      %v810 = vadd.f32 %v787, %v803
      %v811 = vadd.f32 %v792, %v803
      %v812 = vadd.f32 %v795, %v803
      %v813 = vmax.f32 %v805, 0.0
      %v814 = vmax.f32 %v806, 0.0
      %v815 = vmax.f32 %v807, 0.0
      %v816 = vmax.f32 %v808, 0.0
      %v817 = vmax.f32 %v809, 0.0
      %v818 = vmax.f32 %v810, 0.0
      %v819 = vmax.f32 %v811, 0.0
      %v820 = vmax.f32 %v812, 0.0
      %v821 = vld [vmem:[%s4] sm:$0xf]
      %v822 = vld [vmem:[%s4 + $0x4] sm:$0xf]
      %v823 = vld [vmem:[%s4 + $0x8] sm:$0xf]
      %v824 = vld [vmem:[%s4 + $0xc] sm:$0xf]
      %v825 = vld [vmem:[%s4 + $0x10] sm:$0xf]
      %v826 = vld [vmem:[%s4 + $0x14] sm:$0xf]
      %v827 = vld [vmem:[%s4 + $0x18] sm:$0xf]
      %v828 = vld [vmem:[%s4 + $0x1c] sm:$0xf]
      %v829 = vld [vmem:[%s4 + $0x20] sm:$0xf]
      %v830 = vld [vmem:[%s4 + $0x24] sm:$0xf]
      %v831 = vld [vmem:[%s4 + $0x28] sm:$0xf]
      %v832 = vld [vmem:[%s4 + $0x2c] sm:$0xf]
      %v833 = vld [vmem:[%s4 + $0x30] sm:$0xf]
      %v834 = vld [vmem:[%s4 + $0x34] sm:$0xf]
      %v835 = vld [vmem:[%s4 + $0x38] sm:$0xf]
      %v836 = vld [vmem:[%s4 + $0x3c] sm:$0xf]
      %v837 = vpack.c.bf16 %v814, %v813
      %v838 = vpack.c.bf16 %v816, %v815
      %v839 = vpack.c.bf16 %v818, %v817
      %v840 = vpack.c.bf16 %v820, %v819
      %v857 = vunpack.c.l.b16 %v821
      %v858 = vunpack.c.l.b16 %v822
      %v859 = vunpack.c.l.b16 %v823
      %v860 = vunpack.c.l.b16 %v824
      %v861 = vunpack.c.l.b16 %v825
      %v862 = vunpack.c.l.b16 %v826
      %v863 = vunpack.c.l.b16 %v827
      %v864 = vunpack.c.l.b16 %v828
      %v865 = vunpack.c.l.b16 %v829
      %v866 = vunpack.c.l.b16 %v830
      %v867 = vunpack.c.l.b16 %v831
      %v868 = vunpack.c.l.b16 %v832
      %v869 = vunpack.c.l.b16 %v833
      %v870 = vunpack.c.l.b16 %v834
      %v871 = vunpack.c.l.b16 %v835
      %v872 = vunpack.c.l.b16 %v836
      %v873 = vpack.c.b16 %v858, %v857
      %v874 = vpack.c.b16 %v860, %v859
      %v875 = vpack.c.b16 %v862, %v861
      %v876 = vpack.c.b16 %v864, %v863
      %v877 = vpack.c.b16 %v866, %v865
      %v878 = vpack.c.b16 %v868, %v867
      %v879 = vpack.c.b16 %v870, %v869
      %v880 = vpack.c.b16 %v872, %v871
      %889 = vmatprep.subr.bf16.mxu0 0
      %890 = vmatpush1.bf16.msra.mxu0 %v873
      %891 = vmatprep.subr.bf16.mxu0 0
      %892 = vmatpush1.bf16.msra.mxu0 %v874
      %893 = vmatprep.subr.bf16.mxu0 0
      %894 = vmatpush1.bf16.msra.mxu0 %v875
      %895 = vmatprep.subr.bf16.mxu0 0
      %896 = vmatpush1.bf16.msra.mxu0 %v876
      %897 = vmatprep.subr.bf16.mxu0 0
      %898 = vmatpush1.bf16.msra.mxu0 %v877
      %899 = vmatprep.subr.bf16.mxu0 0
      %900 = vmatpush1.bf16.msra.mxu0 %v878
      %901 = vmatprep.subr.bf16.mxu0 0
      %902 = vmatpush1.bf16.msra.mxu0 %v879
      %903 = vmatprep.subr.bf16.mxu0 0
      %904 = vmatpush1.bf16.msra.mxu0 %v880
      %905 = vmatprep.subr.bf16.mxu0 0
      %906 = vmatpush1.bf16.msra.mxu0 0
      %907 = vmatprep.subr.bf16.mxu0 0
      %908 = vmatpush1.bf16.msra.mxu0 0
      %909 = vmatprep.subr.bf16.mxu0 0
      %910 = vmatpush1.bf16.msra.mxu0 0
      %911 = vmatprep.subr.bf16.mxu0 0
      %912 = vmatpush1.bf16.msra.mxu0 0
      %913 = vmatprep.subr.bf16.mxu0 0
      %914 = vmatpush1.bf16.msra.mxu0 0
      %915 = vmatprep.subr.bf16.mxu0 0
      %916 = vmatpush1.bf16.msra.mxu0 0
      %917 = vmatprep.subr.bf16.mxu0 0
      %918 = vmatpush1.bf16.msra.mxu0 0
      %919 = vmatprep.subr.bf16.mxu0 0
      %920 = vmatpush1.bf16.msra.mxu0 0
      %921 = vmatprep.mubr.bf16.mxu0 0
      %922 = vmatmul.mubr.bf16.gmra.mrb[0].mxu0 %v837
      %v923 = vpop.f32.mrb[0].mxu0
      %v924 = vadd.f32 0.0, %v923
      %v925 = vpop.f32.mrb[0].mxu0
      %v926 = vpop.f32.mrb[0].mxu0
      %v927 = vadd.f32 0.0, %v926
      %v928 = vpop.f32.mrb[0].mxu0
      %929 = vmatprep.mubr.bf16.mxu0 0
      %930 = vmatmul.mubr.bf16.gmra.mrb[0].mxu0 %v838
      %v931 = vpop.f32.mrb[0].mxu0
      %v932 = vadd.f32 0.0, %v931
      %v933 = vpop.f32.mrb[0].mxu0
      %v934 = vpop.f32.mrb[0].mxu0
      %v935 = vadd.f32 0.0, %v934
      %v936 = vpop.f32.mrb[0].mxu0
      %937 = vmatprep.mubr.bf16.mxu0 0
      %938 = vmatmul.mubr.bf16.gmra.mrb[0].mxu0 %v839
      %v939 = vpop.f32.mrb[0].mxu0
      %v940 = vadd.f32 0.0, %v939
      %v941 = vpop.f32.mrb[0].mxu0
      %v942 = vpop.f32.mrb[0].mxu0
      %v943 = vadd.f32 0.0, %v942
      %v944 = vpop.f32.mrb[0].mxu0
      %945 = vmatprep.mubr.bf16.mxu0 0
      %946 = vmatmul.mubr.bf16.gmra.mrb[0].mxu0 %v840
      %v947 = vpop.f32.mrb[0].mxu0
      %v948 = vadd.f32 0.0, %v947
      %v949 = vpop.f32.mrb[0].mxu0
      %v950 = vpop.f32.mrb[0].mxu0
      %v951 = vadd.f32 0.0, %v950
      %v952 = vpop.f32.mrb[0].mxu0
      %953 = vdwg.mxu0
      %v954 = vld [vmem:[%s5] sm:$0x1]
      %v956 = vlaneseq
      %v957 = vshrl.u32 %v956, 7
      %v958 = vsub.s32 0, %v957
      %v959 = vrot.slane %v954, %v958
      %v961 = vadd.f32 %v924, %v959
      %v962 = vadd.f32 %v927, %v959
      %v963 = vadd.f32 %v932, %v959
      %v964 = vadd.f32 %v935, %v959
      %v965 = vadd.f32 %v940, %v959
      %v966 = vadd.f32 %v943, %v959
      %v967 = vadd.f32 %v948, %v959
      %v968 = vadd.f32 %v951, %v959
      %v969 = vmax.f32 %v961, 0.0
      %v970 = vmax.f32 %v962, 0.0
      %v971 = vmax.f32 %v963, 0.0
      %v972 = vmax.f32 %v964, 0.0
      %v973 = vmax.f32 %v965, 0.0
      %v974 = vmax.f32 %v966, 0.0
      %v975 = vmax.f32 %v967, 0.0
      %v976 = vmax.f32 %v968, 0.0
      %v977 = vpack.c.bf16 %v970, %v969
      %v978 = vpack.c.bf16 %v972, %v971
      %v979 = vpack.c.bf16 %v974, %v973
      %v980 = vpack.c.bf16 %v976, %v975
      %981 = vmatprep.subr.bf16.mxu0 0
      %982 = vmatpush1.bf16.msra.mxu0 %v977
      %983 = vmatprep.subr.bf16.mxu0 0
      %984 = vmatpush1.bf16.msra.mxu0 0
      %985 = vmatprep.subr.bf16.mxu0 0
      %986 = vmatpush1.bf16.msra.mxu0 0
      %987 = vmatprep.subr.bf16.mxu0 0
      %988 = vmatpush1.bf16.msra.mxu0 0
      %989 = vmatprep.subr.bf16.mxu0 0
      %990 = vmatpush1.bf16.msra.mxu0 0
      %991 = vmatprep.subr.bf16.mxu0 0
      %992 = vmatpush1.bf16.msra.mxu0 0
      %993 = vmatprep.subr.bf16.mxu0 0
      %994 = vmatpush1.bf16.msra.mxu0 0
      %995 = vmatprep.subr.bf16.mxu0 0
      %996 = vmatpush1.bf16.msra.mxu0 0
      %997 = vmatprep.subr.bf16.mxu0 0
      %998 = vmatpush1.bf16.msra.mxu0 0
      %999 = vmatprep.subr.bf16.mxu0 0
      %1000 = vmatpush1.bf16.msra.mxu0 0
      %1001 = vmatprep.subr.bf16.mxu0 0
      %1002 = vmatpush1.bf16.msra.mxu0 0
      %1003 = vmatprep.subr.bf16.mxu0 0
      %1004 = vmatpush1.bf16.msra.mxu0 0
      %1005 = vmatprep.subr.bf16.mxu0 0
      %1006 = vmatpush1.bf16.msra.mxu0 0
      %1007 = vmatprep.subr.bf16.mxu0 0
      %1008 = vmatpush1.bf16.msra.mxu0 0
      %1009 = vmatprep.subr.bf16.mxu0 0
      %1010 = vmatpush1.bf16.msra.mxu0 0
      %1011 = vmatprep.subr.bf16.mxu0 0
      %1012 = vmatpush1.bf16.msra.mxu0 0
      %1013 = vmatprep.mubr.bf16.mxu0 0
      %1014 = vmatmul.mubr.bf16.gmra.mrb[0].mxu0 %v475
      %v1015 = vpop.f32.mrb[0].mxu0
      %v1016 = vadd.f32 %v969, %v1015
      %v1017 = vpop.f32.mrb[0].mxu0
      %v1018 = vpop.f32.mrb[0].mxu0
      %v1019 = vadd.f32 %v970, %v1018
      %v1020 = vpop.f32.mrb[0].mxu0
      %1021 = vdwg.mxu0
      %1022 = vmatprep.subr.bf16.mxu0 0
      %1023 = vmatpush1.bf16.msra.mxu0 %v978
      %1024 = vmatprep.subr.bf16.mxu0 0
      %1025 = vmatpush1.bf16.msra.mxu0 0
      %1026 = vmatprep.subr.bf16.mxu0 0
      %1027 = vmatpush1.bf16.msra.mxu0 0
      %1028 = vmatprep.subr.bf16.mxu0 0
      %1029 = vmatpush1.bf16.msra.mxu0 0
      %1030 = vmatprep.subr.bf16.mxu0 0
      %1031 = vmatpush1.bf16.msra.mxu0 0
      %1032 = vmatprep.subr.bf16.mxu0 0
      %1033 = vmatpush1.bf16.msra.mxu0 0
      %1034 = vmatprep.subr.bf16.mxu0 0
      %1035 = vmatpush1.bf16.msra.mxu0 0
      %1036 = vmatprep.subr.bf16.mxu0 0
      %1037 = vmatpush1.bf16.msra.mxu0 0
      %1038 = vmatprep.subr.bf16.mxu0 0
      %1039 = vmatpush1.bf16.msra.mxu0 0
      %1040 = vmatprep.subr.bf16.mxu0 0
      %1041 = vmatpush1.bf16.msra.mxu0 0
      %1042 = vmatprep.subr.bf16.mxu0 0
      %1043 = vmatpush1.bf16.msra.mxu0 0
      %1044 = vmatprep.subr.bf16.mxu0 0
      %1045 = vmatpush1.bf16.msra.mxu0 0
      %1046 = vmatprep.subr.bf16.mxu0 0
      %1047 = vmatpush1.bf16.msra.mxu0 0
      %1048 = vmatprep.subr.bf16.mxu0 0
      %1049 = vmatpush1.bf16.msra.mxu0 0
      %1050 = vmatprep.subr.bf16.mxu0 0
      %1051 = vmatpush1.bf16.msra.mxu0 0
      %1052 = vmatprep.subr.bf16.mxu0 0
      %1053 = vmatpush1.bf16.msra.mxu0 0
      %1054 = vmatprep.mubr.bf16.mxu0 0
      %1055 = vmatmul.mubr.bf16.gmra.mrb[0].mxu0 %v524
      %v1056 = vpop.f32.mrb[0].mxu0
      %v1057 = vadd.f32 %v971, %v1056
      %v1058 = vpop.f32.mrb[0].mxu0
      %v1059 = vpop.f32.mrb[0].mxu0
      %v1060 = vadd.f32 %v972, %v1059
      %v1061 = vpop.f32.mrb[0].mxu0
      %1062 = vdwg.mxu0
      %1063 = vmatprep.subr.bf16.mxu0 0
      %1064 = vmatpush1.bf16.msra.mxu0 %v979
      %1065 = vmatprep.subr.bf16.mxu0 0
      %1066 = vmatpush1.bf16.msra.mxu0 0
      %1067 = vmatprep.subr.bf16.mxu0 0
      %1068 = vmatpush1.bf16.msra.mxu0 0
      %1069 = vmatprep.subr.bf16.mxu0 0
      %1070 = vmatpush1.bf16.msra.mxu0 0
      %1071 = vmatprep.subr.bf16.mxu0 0
      %1072 = vmatpush1.bf16.msra.mxu0 0
      %1073 = vmatprep.subr.bf16.mxu0 0
      %1074 = vmatpush1.bf16.msra.mxu0 0
      %1075 = vmatprep.subr.bf16.mxu0 0
      %1076 = vmatpush1.bf16.msra.mxu0 0
      %1077 = vmatprep.subr.bf16.mxu0 0
      %1078 = vmatpush1.bf16.msra.mxu0 0
      %1079 = vmatprep.subr.bf16.mxu0 0
      %1080 = vmatpush1.bf16.msra.mxu0 0
      %1081 = vmatprep.subr.bf16.mxu0 0
      %1082 = vmatpush1.bf16.msra.mxu0 0
      %1083 = vmatprep.subr.bf16.mxu0 0
      %1084 = vmatpush1.bf16.msra.mxu0 0
      %1085 = vmatprep.subr.bf16.mxu0 0
      %1086 = vmatpush1.bf16.msra.mxu0 0
      %1087 = vmatprep.subr.bf16.mxu0 0
      %1088 = vmatpush1.bf16.msra.mxu0 0
      %1089 = vmatprep.subr.bf16.mxu0 0
      %1090 = vmatpush1.bf16.msra.mxu0 0
      %1091 = vmatprep.subr.bf16.mxu0 0
      %1092 = vmatpush1.bf16.msra.mxu0 0
      %1093 = vmatprep.subr.bf16.mxu0 0
      %1094 = vmatpush1.bf16.msra.mxu0 0
      %1095 = vmatprep.mubr.bf16.mxu0 0
      %1096 = vmatmul.mubr.bf16.gmra.mrb[0].mxu0 %v573
      %v1097 = vpop.f32.mrb[0].mxu0
      %v1098 = vadd.f32 %v973, %v1097
      %v1099 = vpop.f32.mrb[0].mxu0
      %v1100 = vpop.f32.mrb[0].mxu0
      %v1101 = vadd.f32 %v974, %v1100
      %v1102 = vpop.f32.mrb[0].mxu0
      %1103 = vdwg.mxu0
      %1104 = vmatprep.subr.bf16.mxu0 0
      %1105 = vmatpush1.bf16.msra.mxu0 %v980
      %1106 = vmatprep.subr.bf16.mxu0 0
      %1107 = vmatpush1.bf16.msra.mxu0 0
      %1108 = vmatprep.subr.bf16.mxu0 0
      %1109 = vmatpush1.bf16.msra.mxu0 0
      %1110 = vmatprep.subr.bf16.mxu0 0
      %1111 = vmatpush1.bf16.msra.mxu0 0
      %1112 = vmatprep.subr.bf16.mxu0 0
      %1113 = vmatpush1.bf16.msra.mxu0 0
      %1114 = vmatprep.subr.bf16.mxu0 0
      %1115 = vmatpush1.bf16.msra.mxu0 0
      %1116 = vmatprep.subr.bf16.mxu0 0
      %1117 = vmatpush1.bf16.msra.mxu0 0
      %1118 = vmatprep.subr.bf16.mxu0 0
      %1119 = vmatpush1.bf16.msra.mxu0 0
      %1120 = vmatprep.subr.bf16.mxu0 0
      %1121 = vmatpush1.bf16.msra.mxu0 0
      %1122 = vmatprep.subr.bf16.mxu0 0
      %1123 = vmatpush1.bf16.msra.mxu0 0
      %1124 = vmatprep.subr.bf16.mxu0 0
      %1125 = vmatpush1.bf16.msra.mxu0 0
      %1126 = vmatprep.subr.bf16.mxu0 0
      %1127 = vmatpush1.bf16.msra.mxu0 0
      %1128 = vmatprep.subr.bf16.mxu0 0
      %1129 = vmatpush1.bf16.msra.mxu0 0
      %1130 = vmatprep.subr.bf16.mxu0 0
      %1131 = vmatpush1.bf16.msra.mxu0 0
      %1132 = vmatprep.subr.bf16.mxu0 0
      %1133 = vmatpush1.bf16.msra.mxu0 0
      %1134 = vmatprep.subr.bf16.mxu0 0
      %1135 = vmatpush1.bf16.msra.mxu0 0
      %1136 = vmatprep.mubr.bf16.mxu0 0
      %1137 = vmatmul.mubr.bf16.gmra.mrb[0].mxu0 %v622
      %v1138 = vpop.f32.mrb[0].mxu0
      %v1139 = vadd.f32 %v975, %v1138
      %v1140 = vpop.f32.mrb[0].mxu0
      %v1141 = vpop.f32.mrb[0].mxu0
      %v1142 = vadd.f32 %v976, %v1141
      %v1143 = vpop.f32.mrb[0].mxu0
      %1144 = vdwg.mxu0
      %v1145 = vld [vmem:[%s6] sm:$0xf]
      %v1146 = vld [vmem:[%s6 + $0x4] sm:$0xf]
      %v1147 = vld [vmem:[%s6 + $0x8] sm:$0xf]
      %v1148 = vld [vmem:[%s6 + $0xc] sm:$0xf]
      %v1149 = vld [vmem:[%s6 + $0x10] sm:$0xf]
      %v1150 = vld [vmem:[%s6 + $0x14] sm:$0xf]
      %v1151 = vld [vmem:[%s6 + $0x18] sm:$0xf]
      %v1152 = vld [vmem:[%s6 + $0x1c] sm:$0xf]
      %v1153 = vld [vmem:[%s6 + $0x20] sm:$0xf]
      %v1154 = vld [vmem:[%s6 + $0x24] sm:$0xf]
      %v1155 = vld [vmem:[%s6 + $0x28] sm:$0xf]
      %v1156 = vld [vmem:[%s6 + $0x2c] sm:$0xf]
      %v1157 = vld [vmem:[%s6 + $0x30] sm:$0xf]
      %v1158 = vld [vmem:[%s6 + $0x34] sm:$0xf]
      %v1159 = vld [vmem:[%s6 + $0x38] sm:$0xf]
      %v1160 = vld [vmem:[%s6 + $0x3c] sm:$0xf]
      %v1161 = vpack.c.bf16 %v1019, %v1016
      %v1162 = vpack.c.bf16 %v1060, %v1057
      %v1163 = vpack.c.bf16 %v1101, %v1098
      %v1164 = vpack.c.bf16 %v1142, %v1139
      %v1181 = vunpack.c.l.b16 %v1145
      %v1182 = vunpack.c.l.b16 %v1146
      %v1183 = vunpack.c.l.b16 %v1147
      %v1184 = vunpack.c.l.b16 %v1148
      %v1185 = vunpack.c.l.b16 %v1149
      %v1186 = vunpack.c.l.b16 %v1150
      %v1187 = vunpack.c.l.b16 %v1151
      %v1188 = vunpack.c.l.b16 %v1152
      %v1189 = vunpack.c.l.b16 %v1153
      %v1190 = vunpack.c.l.b16 %v1154
      %v1191 = vunpack.c.l.b16 %v1155
      %v1192 = vunpack.c.l.b16 %v1156
      %v1193 = vunpack.c.l.b16 %v1157
      %v1194 = vunpack.c.l.b16 %v1158
      %v1195 = vunpack.c.l.b16 %v1159
      %v1196 = vunpack.c.l.b16 %v1160
      %v1197 = vpack.c.b16 %v1182, %v1181
      %v1198 = vpack.c.b16 %v1184, %v1183
      %v1199 = vpack.c.b16 %v1186, %v1185
      %v1200 = vpack.c.b16 %v1188, %v1187
      %v1201 = vpack.c.b16 %v1190, %v1189
      %v1202 = vpack.c.b16 %v1192, %v1191
      %v1203 = vpack.c.b16 %v1194, %v1193
      %v1204 = vpack.c.b16 %v1196, %v1195
      %1213 = vmatprep.subr.bf16.mxu0 0
      %1214 = vmatpush1.bf16.msra.mxu0 %v1197
      %1215 = vmatprep.subr.bf16.mxu0 0
      %1216 = vmatpush1.bf16.msra.mxu0 %v1198
      %1217 = vmatprep.subr.bf16.mxu0 0
      %1218 = vmatpush1.bf16.msra.mxu0 %v1199
      %1219 = vmatprep.subr.bf16.mxu0 0
      %1220 = vmatpush1.bf16.msra.mxu0 %v1200
      %1221 = vmatprep.subr.bf16.mxu0 0
      %1222 = vmatpush1.bf16.msra.mxu0 %v1201
      %1223 = vmatprep.subr.bf16.mxu0 0
      %1224 = vmatpush1.bf16.msra.mxu0 %v1202
      %1225 = vmatprep.subr.bf16.mxu0 0
      %1226 = vmatpush1.bf16.msra.mxu0 %v1203
      %1227 = vmatprep.subr.bf16.mxu0 0
      %1228 = vmatpush1.bf16.msra.mxu0 %v1204
      %1229 = vmatprep.subr.bf16.mxu0 0
      %1230 = vmatpush1.bf16.msra.mxu0 0
      %1231 = vmatprep.subr.bf16.mxu0 0
      %1232 = vmatpush1.bf16.msra.mxu0 0
      %1233 = vmatprep.subr.bf16.mxu0 0
      %1234 = vmatpush1.bf16.msra.mxu0 0
      %1235 = vmatprep.subr.bf16.mxu0 0
      %1236 = vmatpush1.bf16.msra.mxu0 0
      %1237 = vmatprep.subr.bf16.mxu0 0
      %1238 = vmatpush1.bf16.msra.mxu0 0
      %1239 = vmatprep.subr.bf16.mxu0 0
      %1240 = vmatpush1.bf16.msra.mxu0 0
      %1241 = vmatprep.subr.bf16.mxu0 0
      %1242 = vmatpush1.bf16.msra.mxu0 0
      %1243 = vmatprep.subr.bf16.mxu0 0
      %1244 = vmatpush1.bf16.msra.mxu0 0
      %1245 = vmatprep.mubr.bf16.mxu0 0
      %1246 = vmatmul.mubr.bf16.gmra.mrb[0].mxu0 %v1161
      %v1247 = vpop.f32.mrb[0].mxu0
      %v1248 = vadd.f32 0.0, %v1247
      %v1249 = vpop.f32.mrb[0].mxu0
      %v1250 = vpop.f32.mrb[0].mxu0
      %v1251 = vadd.f32 0.0, %v1250
      %v1252 = vpop.f32.mrb[0].mxu0
      %1253 = vmatprep.mubr.bf16.mxu0 0
      %1254 = vmatmul.mubr.bf16.gmra.mrb[0].mxu0 %v1162
      %v1255 = vpop.f32.mrb[0].mxu0
      %v1256 = vadd.f32 0.0, %v1255
      %v1257 = vpop.f32.mrb[0].mxu0
      %v1258 = vpop.f32.mrb[0].mxu0
      %v1259 = vadd.f32 0.0, %v1258
      %v1260 = vpop.f32.mrb[0].mxu0
      %1261 = vmatprep.mubr.bf16.mxu0 0
      %1262 = vmatmul.mubr.bf16.gmra.mrb[0].mxu0 %v1163
      %v1263 = vpop.f32.mrb[0].mxu0
      %v1264 = vadd.f32 0.0, %v1263
      %v1265 = vpop.f32.mrb[0].mxu0
      %v1266 = vpop.f32.mrb[0].mxu0
      %v1267 = vadd.f32 0.0, %v1266
      %v1268 = vpop.f32.mrb[0].mxu0
      %1269 = vmatprep.mubr.bf16.mxu0 0
      %1270 = vmatmul.mubr.bf16.gmra.mrb[0].mxu0 %v1164
      %v1271 = vpop.f32.mrb[0].mxu0
      %v1272 = vadd.f32 0.0, %v1271
      %v1273 = vpop.f32.mrb[0].mxu0
      %v1274 = vpop.f32.mrb[0].mxu0
      %v1275 = vadd.f32 0.0, %v1274
      %v1276 = vpop.f32.mrb[0].mxu0
      %1277 = vdwg.mxu0
      %v1278 = vld [vmem:[%s7] sm:$0x1]
      %v1280 = vlaneseq
      %v1281 = vshrl.u32 %v1280, 7
      %v1282 = vsub.s32 0, %v1281
      %v1283 = vrot.slane %v1278, %v1282
      %v1285 = vadd.f32 %v1248, %v1283
      %v1286 = vadd.f32 %v1251, %v1283
      %v1287 = vadd.f32 %v1256, %v1283
      %v1288 = vadd.f32 %v1259, %v1283
      %v1289 = vadd.f32 %v1264, %v1283
      %v1290 = vadd.f32 %v1267, %v1283
      %v1291 = vadd.f32 %v1272, %v1283
      %v1292 = vadd.f32 %v1275, %v1283
      %v1293 = vmax.f32 %v1285, 0.0
      %v1294 = vmax.f32 %v1286, 0.0
      %v1295 = vmax.f32 %v1287, 0.0
      %v1296 = vmax.f32 %v1288, 0.0
      %v1297 = vmax.f32 %v1289, 0.0
      %v1298 = vmax.f32 %v1290, 0.0
      %v1299 = vmax.f32 %v1291, 0.0
      %v1300 = vmax.f32 %v1292, 0.0
      %v1301 = vld [vmem:[%s8] sm:$0xf]
      %v1302 = vld [vmem:[%s8 + $0x4] sm:$0xf]
      %v1303 = vld [vmem:[%s8 + $0x8] sm:$0xf]
      %v1304 = vld [vmem:[%s8 + $0xc] sm:$0xf]
      %v1305 = vld [vmem:[%s8 + $0x10] sm:$0xf]
      %v1306 = vld [vmem:[%s8 + $0x14] sm:$0xf]
      %v1307 = vld [vmem:[%s8 + $0x18] sm:$0xf]
      %v1308 = vld [vmem:[%s8 + $0x1c] sm:$0xf]
      %v1309 = vld [vmem:[%s8 + $0x20] sm:$0xf]
      %v1310 = vld [vmem:[%s8 + $0x24] sm:$0xf]
      %v1311 = vld [vmem:[%s8 + $0x28] sm:$0xf]
      %v1312 = vld [vmem:[%s8 + $0x2c] sm:$0xf]
      %v1313 = vld [vmem:[%s8 + $0x30] sm:$0xf]
      %v1314 = vld [vmem:[%s8 + $0x34] sm:$0xf]
      %v1315 = vld [vmem:[%s8 + $0x38] sm:$0xf]
      %v1316 = vld [vmem:[%s8 + $0x3c] sm:$0xf]
      %v1317 = vpack.c.bf16 %v1294, %v1293
      %v1318 = vpack.c.bf16 %v1296, %v1295
      %v1319 = vpack.c.bf16 %v1298, %v1297
      %v1320 = vpack.c.bf16 %v1300, %v1299
      %v1337 = vunpack.c.l.b16 %v1301
      %v1338 = vunpack.c.l.b16 %v1302
      %v1339 = vunpack.c.l.b16 %v1303
      %v1340 = vunpack.c.l.b16 %v1304
      %v1341 = vunpack.c.l.b16 %v1305
      %v1342 = vunpack.c.l.b16 %v1306
      %v1343 = vunpack.c.l.b16 %v1307
      %v1344 = vunpack.c.l.b16 %v1308
      %v1345 = vunpack.c.l.b16 %v1309
      %v1346 = vunpack.c.l.b16 %v1310
      %v1347 = vunpack.c.l.b16 %v1311
      %v1348 = vunpack.c.l.b16 %v1312
      %v1349 = vunpack.c.l.b16 %v1313
      %v1350 = vunpack.c.l.b16 %v1314
      %v1351 = vunpack.c.l.b16 %v1315
      %v1352 = vunpack.c.l.b16 %v1316
      %v1353 = vpack.c.b16 %v1338, %v1337
      %v1354 = vpack.c.b16 %v1340, %v1339
      %v1355 = vpack.c.b16 %v1342, %v1341
      %v1356 = vpack.c.b16 %v1344, %v1343
      %v1357 = vpack.c.b16 %v1346, %v1345
      %v1358 = vpack.c.b16 %v1348, %v1347
      %v1359 = vpack.c.b16 %v1350, %v1349
      %v1360 = vpack.c.b16 %v1352, %v1351
      %1369 = vmatprep.subr.bf16.mxu0 0
      %1370 = vmatpush1.bf16.msra.mxu0 %v1353
      %1371 = vmatprep.subr.bf16.mxu0 0
      %1372 = vmatpush1.bf16.msra.mxu0 %v1354
      %1373 = vmatprep.subr.bf16.mxu0 0
      %1374 = vmatpush1.bf16.msra.mxu0 %v1355
      %1375 = vmatprep.subr.bf16.mxu0 0
      %1376 = vmatpush1.bf16.msra.mxu0 %v1356
      %1377 = vmatprep.subr.bf16.mxu0 0
      %1378 = vmatpush1.bf16.msra.mxu0 %v1357
      %1379 = vmatprep.subr.bf16.mxu0 0
      %1380 = vmatpush1.bf16.msra.mxu0 %v1358
      %1381 = vmatprep.subr.bf16.mxu0 0
      %1382 = vmatpush1.bf16.msra.mxu0 %v1359
      %1383 = vmatprep.subr.bf16.mxu0 0
      %1384 = vmatpush1.bf16.msra.mxu0 %v1360
      %1385 = vmatprep.subr.bf16.mxu0 0
      %1386 = vmatpush1.bf16.msra.mxu0 0
      %1387 = vmatprep.subr.bf16.mxu0 0
      %1388 = vmatpush1.bf16.msra.mxu0 0
      %1389 = vmatprep.subr.bf16.mxu0 0
      %1390 = vmatpush1.bf16.msra.mxu0 0
      %1391 = vmatprep.subr.bf16.mxu0 0
      %1392 = vmatpush1.bf16.msra.mxu0 0
      %1393 = vmatprep.subr.bf16.mxu0 0
      %1394 = vmatpush1.bf16.msra.mxu0 0
      %1395 = vmatprep.subr.bf16.mxu0 0
      %1396 = vmatpush1.bf16.msra.mxu0 0
      %1397 = vmatprep.subr.bf16.mxu0 0
      %1398 = vmatpush1.bf16.msra.mxu0 0
      %1399 = vmatprep.subr.bf16.mxu0 0
      %1400 = vmatpush1.bf16.msra.mxu0 0
      %1401 = vmatprep.mubr.bf16.mxu0 0
      %1402 = vmatmul.mubr.bf16.gmra.mrb[0].mxu0 %v1317
      %v1403 = vpop.f32.mrb[0].mxu0
      %v1404 = vadd.f32 0.0, %v1403
      %v1405 = vpop.f32.mrb[0].mxu0
      %v1406 = vpop.f32.mrb[0].mxu0
      %v1407 = vadd.f32 0.0, %v1406
      %v1408 = vpop.f32.mrb[0].mxu0
      %1409 = vmatprep.mubr.bf16.mxu0 0
      %1410 = vmatmul.mubr.bf16.gmra.mrb[0].mxu0 %v1318
      %v1411 = vpop.f32.mrb[0].mxu0
      %v1412 = vadd.f32 0.0, %v1411
      %v1413 = vpop.f32.mrb[0].mxu0
      %v1414 = vpop.f32.mrb[0].mxu0
      %v1415 = vadd.f32 0.0, %v1414
      %v1416 = vpop.f32.mrb[0].mxu0
      %1417 = vmatprep.mubr.bf16.mxu0 0
      %1418 = vmatmul.mubr.bf16.gmra.mrb[0].mxu0 %v1319
      %v1419 = vpop.f32.mrb[0].mxu0
      %v1420 = vadd.f32 0.0, %v1419
      %v1421 = vpop.f32.mrb[0].mxu0
      %v1422 = vpop.f32.mrb[0].mxu0
      %v1423 = vadd.f32 0.0, %v1422
      %v1424 = vpop.f32.mrb[0].mxu0
      %1425 = vmatprep.mubr.bf16.mxu0 0
      %1426 = vmatmul.mubr.bf16.gmra.mrb[0].mxu0 %v1320
      %v1427 = vpop.f32.mrb[0].mxu0
      %v1428 = vadd.f32 0.0, %v1427
      %v1429 = vpop.f32.mrb[0].mxu0
      %v1430 = vpop.f32.mrb[0].mxu0
      %v1431 = vadd.f32 0.0, %v1430
      %v1432 = vpop.f32.mrb[0].mxu0
      %1433 = vdwg.mxu0
      %v1434 = vld [vmem:[%s9] sm:$0x1]
      %v1436 = vlaneseq
      %v1437 = vshrl.u32 %v1436, 7
      %v1438 = vsub.s32 0, %v1437
      %v1439 = vrot.slane %v1434, %v1438
      %v1441 = vadd.f32 %v1404, %v1439
      %v1442 = vadd.f32 %v1407, %v1439
      %v1443 = vadd.f32 %v1412, %v1439
      %v1444 = vadd.f32 %v1415, %v1439
      %v1445 = vadd.f32 %v1420, %v1439
      %v1446 = vadd.f32 %v1423, %v1439
      %v1447 = vadd.f32 %v1428, %v1439
      %v1448 = vadd.f32 %v1431, %v1439
      %v1449 = vunpack.c.l.bf16 %v448
      %v1450 = vunpack.c.l.bf16 %v449
      %v1451 = vunpack.c.l.bf16 %v450
      %v1452 = vunpack.c.l.bf16 %v451
      %v1453 = vunpack.c.l.bf16 %v452
      %v1454 = vunpack.c.l.bf16 %v453
      %v1455 = vunpack.c.l.bf16 %v454
      %v1456 = vunpack.c.l.bf16 %v455
      %v1457 = vsel %vm473, %v1449, 0.0
      %1458 = vadd.xlane.f32.xlu0 %v1457
      %v1459 = vpop.xlane.xlu0 %1458
      %v1460 = vsel %vm473, %v1450, 0.0
      %1461 = vadd.xlane.f32.xlu0 %v1460
      %v1462 = vpop.xlane.xlu0 %1461
      %v1463 = vsel %vm473, %v1451, 0.0
      %1464 = vadd.xlane.f32.xlu0 %v1463
      %v1465 = vpop.xlane.xlu0 %1464
      %v1466 = vsel %vm473, %v1452, 0.0
      %1467 = vadd.xlane.f32.xlu0 %v1466
      %v1468 = vpop.xlane.xlu0 %1467
      %v1469 = vsel %vm473, %v1453, 0.0
      %1470 = vadd.xlane.f32.xlu0 %v1469
      %v1471 = vpop.xlane.xlu0 %1470
      %v1472 = vsel %vm473, %v1454, 0.0
      %1473 = vadd.xlane.f32.xlu0 %v1472
      %v1474 = vpop.xlane.xlu0 %1473
      %v1475 = vsel %vm473, %v1455, 0.0
      %1476 = vadd.xlane.f32.xlu0 %v1475
      %v1477 = vpop.xlane.xlu0 %1476
      %v1478 = vsel %vm473, %v1456, 0.0
      %1479 = vadd.xlane.f32.xlu0 %v1478
      %v1480 = vpop.xlane.xlu0 %1479
      %v1481 = vadd.f32 %v1459, 1.0
      %v1482 = vadd.f32 %v1462, 1.0
      %v1483 = vadd.f32 %v1465, 1.0
      %v1484 = vadd.f32 %v1468, 1.0
      %v1485 = vadd.f32 %v1471, 1.0
      %v1486 = vadd.f32 %v1474, 1.0
      %v1487 = vadd.f32 %v1477, 1.0
      %v1488 = vadd.f32 %v1480, 1.0
      %v1489 = vrsqrt.pop %v1481
      %v1490 = vrsqrt.pop %v1482
      %v1491 = vrsqrt.pop %v1483
      %v1492 = vrsqrt.pop %v1484
      %v1493 = vrsqrt.pop %v1485
      %v1494 = vrsqrt.pop %v1486
      %v1495 = vrsqrt.pop %v1487
      %v1496 = vrsqrt.pop %v1488
      %v1497 = vld [vmem:[%s10] sm:$0xf]
      %v1498 = vld [vmem:[%s10 + $0x4] sm:$0xf]
      %v1499 = vld [vmem:[%s10 + $0x8] sm:$0xf]
      %v1500 = vld [vmem:[%s10 + $0xc] sm:$0xf]
      %v1501 = vld [vmem:[%s10 + $0x10] sm:$0xf]
      %v1502 = vld [vmem:[%s10 + $0x14] sm:$0xf]
      %v1503 = vld [vmem:[%s10 + $0x18] sm:$0xf]
      %v1504 = vld [vmem:[%s10 + $0x1c] sm:$0xf]
      %v1505 = vld [vmem:[%s10 + $0x20] sm:$0xf]
      %v1506 = vld [vmem:[%s10 + $0x24] sm:$0xf]
      %v1507 = vld [vmem:[%s10 + $0x28] sm:$0xf]
      %v1508 = vld [vmem:[%s10 + $0x2c] sm:$0xf]
      %v1509 = vld [vmem:[%s10 + $0x30] sm:$0xf]
      %v1510 = vld [vmem:[%s10 + $0x34] sm:$0xf]
      %v1511 = vld [vmem:[%s10 + $0x38] sm:$0xf]
      %v1512 = vld [vmem:[%s10 + $0x3c] sm:$0xf]
      %v1513 = vpack.c.bf16 %v1442, %v1441
      %v1514 = vpack.c.bf16 %v1444, %v1443
      %v1515 = vpack.c.bf16 %v1446, %v1445
      %v1516 = vpack.c.bf16 %v1448, %v1447
      %v1533 = vunpack.c.l.b16 %v1497
      %v1534 = vunpack.c.l.b16 %v1498
      %v1535 = vunpack.c.l.b16 %v1499
      %v1536 = vunpack.c.l.b16 %v1500
      %v1537 = vunpack.c.l.b16 %v1501
      %v1538 = vunpack.c.l.b16 %v1502
      %v1539 = vunpack.c.l.b16 %v1503
      %v1540 = vunpack.c.l.b16 %v1504
      %v1541 = vunpack.c.l.b16 %v1505
      %v1542 = vunpack.c.l.b16 %v1506
      %v1543 = vunpack.c.l.b16 %v1507
      %v1544 = vunpack.c.l.b16 %v1508
      %v1545 = vunpack.c.l.b16 %v1509
      %v1546 = vunpack.c.l.b16 %v1510
      %v1547 = vunpack.c.l.b16 %v1511
      %v1548 = vunpack.c.l.b16 %v1512
      %v1549 = vpack.c.b16 %v1534, %v1533
      %v1550 = vpack.c.b16 %v1536, %v1535
      %v1551 = vpack.c.b16 %v1538, %v1537
      %v1552 = vpack.c.b16 %v1540, %v1539
      %v1553 = vpack.c.b16 %v1542, %v1541
      %v1554 = vpack.c.b16 %v1544, %v1543
      %v1555 = vpack.c.b16 %v1546, %v1545
      %v1556 = vpack.c.b16 %v1548, %v1547
      %1565 = vmatprep.subr.bf16.mxu0 0
      %1566 = vmatpush1.bf16.msra.mxu0 %v1549
      %1567 = vmatprep.subr.bf16.mxu0 0
      %1568 = vmatpush1.bf16.msra.mxu0 %v1550
      %1569 = vmatprep.subr.bf16.mxu0 0
      %1570 = vmatpush1.bf16.msra.mxu0 %v1551
      %1571 = vmatprep.subr.bf16.mxu0 0
      %1572 = vmatpush1.bf16.msra.mxu0 %v1552
      %1573 = vmatprep.subr.bf16.mxu0 0
      %1574 = vmatpush1.bf16.msra.mxu0 %v1553
      %1575 = vmatprep.subr.bf16.mxu0 0
      %1576 = vmatpush1.bf16.msra.mxu0 %v1554
      %1577 = vmatprep.subr.bf16.mxu0 0
      %1578 = vmatpush1.bf16.msra.mxu0 %v1555
      %1579 = vmatprep.subr.bf16.mxu0 0
      %1580 = vmatpush1.bf16.msra.mxu0 %v1556
      %1581 = vmatprep.subr.bf16.mxu0 0
      %1582 = vmatpush1.bf16.msra.mxu0 0
      %1583 = vmatprep.subr.bf16.mxu0 0
      %1584 = vmatpush1.bf16.msra.mxu0 0
      %1585 = vmatprep.subr.bf16.mxu0 0
      %1586 = vmatpush1.bf16.msra.mxu0 0
      %1587 = vmatprep.subr.bf16.mxu0 0
      %1588 = vmatpush1.bf16.msra.mxu0 0
      %1589 = vmatprep.subr.bf16.mxu0 0
      %1590 = vmatpush1.bf16.msra.mxu0 0
      %1591 = vmatprep.subr.bf16.mxu0 0
      %1592 = vmatpush1.bf16.msra.mxu0 0
      %1593 = vmatprep.subr.bf16.mxu0 0
      %1594 = vmatpush1.bf16.msra.mxu0 0
      %1595 = vmatprep.subr.bf16.mxu0 0
      %1596 = vmatpush1.bf16.msra.mxu0 0
      %1597 = vmatprep.mubr.bf16.mxu0 0
      %1598 = vmatmul.mubr.bf16.gmra.mrb[0].mxu0 %v1513
      %v1599 = vpop.f32.mrb[0].mxu0
      %v1600 = vadd.f32 0.0, %v1599
      %v1601 = vpop.f32.mrb[0].mxu0
      %v1602 = vpop.f32.mrb[0].mxu0
      %v1603 = vadd.f32 0.0, %v1602
      %v1604 = vpop.f32.mrb[0].mxu0
      %1605 = vmatprep.mubr.bf16.mxu0 0
      %1606 = vmatmul.mubr.bf16.gmra.mrb[0].mxu0 %v1514
      %v1607 = vpop.f32.mrb[0].mxu0
      %v1608 = vadd.f32 0.0, %v1607
      %v1609 = vpop.f32.mrb[0].mxu0
      %v1610 = vpop.f32.mrb[0].mxu0
      %v1611 = vadd.f32 0.0, %v1610
      %v1612 = vpop.f32.mrb[0].mxu0
      %1613 = vmatprep.mubr.bf16.mxu0 0
      %1614 = vmatmul.mubr.bf16.gmra.mrb[0].mxu0 %v1515
      %v1615 = vpop.f32.mrb[0].mxu0
      %v1616 = vadd.f32 0.0, %v1615
      %v1617 = vpop.f32.mrb[0].mxu0
      %v1618 = vpop.f32.mrb[0].mxu0
      %v1619 = vadd.f32 0.0, %v1618
      %v1620 = vpop.f32.mrb[0].mxu0
      %1621 = vmatprep.mubr.bf16.mxu0 0
      %1622 = vmatmul.mubr.bf16.gmra.mrb[0].mxu0 %v1516
      %v1623 = vpop.f32.mrb[0].mxu0
      %v1624 = vadd.f32 0.0, %v1623
      %v1625 = vpop.f32.mrb[0].mxu0
      %v1626 = vpop.f32.mrb[0].mxu0
      %v1627 = vadd.f32 0.0, %v1626
      %v1628 = vpop.f32.mrb[0].mxu0
      %1629 = vdwg.mxu0
      %v1630 = vmul.f32 %v1489, %v1600
      %v1631 = vmul.f32 %v1490, %v1603
      %v1632 = vmul.f32 %v1491, %v1608
      %v1633 = vmul.f32 %v1492, %v1611
      %v1634 = vmul.f32 %v1493, %v1616
      %v1635 = vmul.f32 %v1494, %v1619
      %v1636 = vmul.f32 %v1495, %v1624
      %v1637 = vmul.f32 %v1496, %v1627
      %v1638 = vpack.c.bf16 %v1631, %v1630
      %v1639 = vpack.c.bf16 %v1633, %v1632
      %v1640 = vpack.c.bf16 %v1635, %v1634
      %v1641 = vpack.c.bf16 %v1637, %v1636
      %1642 = vmatprep.subr.bf16.mxu0 0
      %1643 = vmatpush1.bf16.msra.mxu0 %v1638
      %1644 = vmatprep.subr.bf16.mxu0 0
      %1645 = vmatpush1.bf16.msra.mxu0 0
      %1646 = vmatprep.subr.bf16.mxu0 0
      %1647 = vmatpush1.bf16.msra.mxu0 0
      %1648 = vmatprep.subr.bf16.mxu0 0
      %1649 = vmatpush1.bf16.msra.mxu0 0
      %1650 = vmatprep.subr.bf16.mxu0 0
      %1651 = vmatpush1.bf16.msra.mxu0 0
      %1652 = vmatprep.subr.bf16.mxu0 0
      %1653 = vmatpush1.bf16.msra.mxu0 0
      %1654 = vmatprep.subr.bf16.mxu0 0
      %1655 = vmatpush1.bf16.msra.mxu0 0
      %1656 = vmatprep.subr.bf16.mxu0 0
      %1657 = vmatpush1.bf16.msra.mxu0 0
      %1658 = vmatprep.subr.bf16.mxu0 0
      %1659 = vmatpush1.bf16.msra.mxu0 0
      %1660 = vmatprep.subr.bf16.mxu0 0
      %1661 = vmatpush1.bf16.msra.mxu0 0
      %1662 = vmatprep.subr.bf16.mxu0 0
      %1663 = vmatpush1.bf16.msra.mxu0 0
      %1664 = vmatprep.subr.bf16.mxu0 0
      %1665 = vmatpush1.bf16.msra.mxu0 0
      %1666 = vmatprep.subr.bf16.mxu0 0
      %1667 = vmatpush1.bf16.msra.mxu0 0
      %1668 = vmatprep.subr.bf16.mxu0 0
      %1669 = vmatpush1.bf16.msra.mxu0 0
      %1670 = vmatprep.subr.bf16.mxu0 0
      %1671 = vmatpush1.bf16.msra.mxu0 0
      %1672 = vmatprep.subr.bf16.mxu0 0
      %1673 = vmatpush1.bf16.msra.mxu0 0
      %1674 = vmatprep.mubr.bf16.mxu0 0
      %1675 = vmatmul.mubr.bf16.gmra.mrb[0].mxu0 %v475
      %v1676 = vpop.f32.mrb[0].mxu0
      %v1677 = vadd.f32 0.0, %v1676
      %v1678 = vpop.f32.mrb[0].mxu0
      %v1679 = vpop.f32.mrb[0].mxu0
      %v1680 = vadd.f32 0.0, %v1679
      %v1681 = vpop.f32.mrb[0].mxu0
      %1682 = vdwg.mxu0
      %1683 = vmatprep.subr.bf16.mxu0 0
      %1684 = vmatpush1.bf16.msra.mxu0 %v1639
      %1685 = vmatprep.subr.bf16.mxu0 0
      %1686 = vmatpush1.bf16.msra.mxu0 0
      %1687 = vmatprep.subr.bf16.mxu0 0
      %1688 = vmatpush1.bf16.msra.mxu0 0
      %1689 = vmatprep.subr.bf16.mxu0 0
      %1690 = vmatpush1.bf16.msra.mxu0 0
      %1691 = vmatprep.subr.bf16.mxu0 0
      %1692 = vmatpush1.bf16.msra.mxu0 0
      %1693 = vmatprep.subr.bf16.mxu0 0
      %1694 = vmatpush1.bf16.msra.mxu0 0
      %1695 = vmatprep.subr.bf16.mxu0 0
      %1696 = vmatpush1.bf16.msra.mxu0 0
      %1697 = vmatprep.subr.bf16.mxu0 0
      %1698 = vmatpush1.bf16.msra.mxu0 0
      %1699 = vmatprep.subr.bf16.mxu0 0
      %1700 = vmatpush1.bf16.msra.mxu0 0
      %1701 = vmatprep.subr.bf16.mxu0 0
      %1702 = vmatpush1.bf16.msra.mxu0 0
      %1703 = vmatprep.subr.bf16.mxu0 0
      %1704 = vmatpush1.bf16.msra.mxu0 0
      %1705 = vmatprep.subr.bf16.mxu0 0
      %1706 = vmatpush1.bf16.msra.mxu0 0
      %1707 = vmatprep.subr.bf16.mxu0 0
      %1708 = vmatpush1.bf16.msra.mxu0 0
      %1709 = vmatprep.subr.bf16.mxu0 0
      %1710 = vmatpush1.bf16.msra.mxu0 0
      %1711 = vmatprep.subr.bf16.mxu0 0
      %1712 = vmatpush1.bf16.msra.mxu0 0
      %1713 = vmatprep.subr.bf16.mxu0 0
      %1714 = vmatpush1.bf16.msra.mxu0 0
      %1715 = vmatprep.mubr.bf16.mxu0 0
      %1716 = vmatmul.mubr.bf16.gmra.mrb[0].mxu0 %v524
      %v1717 = vpop.f32.mrb[0].mxu0
      %v1718 = vadd.f32 0.0, %v1717
      %v1719 = vpop.f32.mrb[0].mxu0
      %v1720 = vpop.f32.mrb[0].mxu0
      %v1721 = vadd.f32 0.0, %v1720
      %v1722 = vpop.f32.mrb[0].mxu0
      %1723 = vdwg.mxu0
      %1724 = vmatprep.subr.bf16.mxu0 0
      %1725 = vmatpush1.bf16.msra.mxu0 %v1640
      %1726 = vmatprep.subr.bf16.mxu0 0
      %1727 = vmatpush1.bf16.msra.mxu0 0
      %1728 = vmatprep.subr.bf16.mxu0 0
      %1729 = vmatpush1.bf16.msra.mxu0 0
      %1730 = vmatprep.subr.bf16.mxu0 0
      %1731 = vmatpush1.bf16.msra.mxu0 0
      %1732 = vmatprep.subr.bf16.mxu0 0
      %1733 = vmatpush1.bf16.msra.mxu0 0
      %1734 = vmatprep.subr.bf16.mxu0 0
      %1735 = vmatpush1.bf16.msra.mxu0 0
      %1736 = vmatprep.subr.bf16.mxu0 0
      %1737 = vmatpush1.bf16.msra.mxu0 0
      %1738 = vmatprep.subr.bf16.mxu0 0
      %1739 = vmatpush1.bf16.msra.mxu0 0
      %1740 = vmatprep.subr.bf16.mxu0 0
      %1741 = vmatpush1.bf16.msra.mxu0 0
      %1742 = vmatprep.subr.bf16.mxu0 0
      %1743 = vmatpush1.bf16.msra.mxu0 0
      %1744 = vmatprep.subr.bf16.mxu0 0
      %1745 = vmatpush1.bf16.msra.mxu0 0
      %1746 = vmatprep.subr.bf16.mxu0 0
      %1747 = vmatpush1.bf16.msra.mxu0 0
      %1748 = vmatprep.subr.bf16.mxu0 0
      %1749 = vmatpush1.bf16.msra.mxu0 0
      %1750 = vmatprep.subr.bf16.mxu0 0
      %1751 = vmatpush1.bf16.msra.mxu0 0
      %1752 = vmatprep.subr.bf16.mxu0 0
      %1753 = vmatpush1.bf16.msra.mxu0 0
      %1754 = vmatprep.subr.bf16.mxu0 0
      %1755 = vmatpush1.bf16.msra.mxu0 0
      %1756 = vmatprep.mubr.bf16.mxu0 0
      %1757 = vmatmul.mubr.bf16.gmra.mrb[0].mxu0 %v573
      %v1758 = vpop.f32.mrb[0].mxu0
      %v1759 = vadd.f32 0.0, %v1758
      %v1760 = vpop.f32.mrb[0].mxu0
      %v1761 = vpop.f32.mrb[0].mxu0
      %v1762 = vadd.f32 0.0, %v1761
      %v1763 = vpop.f32.mrb[0].mxu0
      %1764 = vdwg.mxu0
      %1765 = vmatprep.subr.bf16.mxu0 0
      %1766 = vmatpush1.bf16.msra.mxu0 %v1641
      %1767 = vmatprep.subr.bf16.mxu0 0
      %1768 = vmatpush1.bf16.msra.mxu0 0
      %1769 = vmatprep.subr.bf16.mxu0 0
      %1770 = vmatpush1.bf16.msra.mxu0 0
      %1771 = vmatprep.subr.bf16.mxu0 0
      %1772 = vmatpush1.bf16.msra.mxu0 0
      %1773 = vmatprep.subr.bf16.mxu0 0
      %1774 = vmatpush1.bf16.msra.mxu0 0
      %1775 = vmatprep.subr.bf16.mxu0 0
      %1776 = vmatpush1.bf16.msra.mxu0 0
      %1777 = vmatprep.subr.bf16.mxu0 0
      %1778 = vmatpush1.bf16.msra.mxu0 0
      %1779 = vmatprep.subr.bf16.mxu0 0
      %1780 = vmatpush1.bf16.msra.mxu0 0
      %1781 = vmatprep.subr.bf16.mxu0 0
      %1782 = vmatpush1.bf16.msra.mxu0 0
      %1783 = vmatprep.subr.bf16.mxu0 0
      %1784 = vmatpush1.bf16.msra.mxu0 0
      %1785 = vmatprep.subr.bf16.mxu0 0
      %1786 = vmatpush1.bf16.msra.mxu0 0
      %1787 = vmatprep.subr.bf16.mxu0 0
      %1788 = vmatpush1.bf16.msra.mxu0 0
      %1789 = vmatprep.subr.bf16.mxu0 0
      %1790 = vmatpush1.bf16.msra.mxu0 0
      %1791 = vmatprep.subr.bf16.mxu0 0
      %1792 = vmatpush1.bf16.msra.mxu0 0
      %1793 = vmatprep.subr.bf16.mxu0 0
      %1794 = vmatpush1.bf16.msra.mxu0 0
      %1795 = vmatprep.subr.bf16.mxu0 0
      %1796 = vmatpush1.bf16.msra.mxu0 0
      %1797 = vmatprep.mubr.bf16.mxu0 0
      %1798 = vmatmul.mubr.bf16.gmra.mrb[0].mxu0 %v622
      %v1799 = vpop.f32.mrb[0].mxu0
      %v1800 = vadd.f32 0.0, %v1799
      %v1801 = vpop.f32.mrb[0].mxu0
      %v1802 = vpop.f32.mrb[0].mxu0
      %v1803 = vadd.f32 0.0, %v1802
      %v1804 = vpop.f32.mrb[0].mxu0
      %1805 = vdwg.mxu0
      %v1806 = vmul.f32 %v1489, %v1677
      %v1807 = vmul.f32 %v1490, %v1680
      %v1808 = vmul.f32 %v1491, %v1718
      %v1809 = vmul.f32 %v1492, %v1721
      %v1810 = vmul.f32 %v1493, %v1759
      %v1811 = vmul.f32 %v1494, %v1762
      %v1812 = vmul.f32 %v1495, %v1800
      %v1813 = vmul.f32 %v1496, %v1803
      %v1814 = vmul.f32 %v1489, %v1489
      %v1815 = vmul.f32 %v1490, %v1490
      %v1816 = vmul.f32 %v1491, %v1491
      %v1817 = vmul.f32 %v1492, %v1492
      %v1818 = vmul.f32 %v1493, %v1493
      %v1819 = vmul.f32 %v1494, %v1494
      %v1820 = vmul.f32 %v1495, %v1495
      %v1821 = vmul.f32 %v1496, %v1496
      %v1822 = vmul.f32 %v1814, %v1600
      %v1823 = vmul.f32 %v1815, %v1603
      %v1824 = vmul.f32 %v1816, %v1608
      %v1825 = vmul.f32 %v1817, %v1611
      %v1826 = vmul.f32 %v1818, %v1616
      %v1827 = vmul.f32 %v1819, %v1619
      %v1828 = vmul.f32 %v1820, %v1624
      %v1829 = vmul.f32 %v1821, %v1627
      %v1830 = vadd.f32 %v1806, %v1822
      %v1831 = vadd.f32 %v1807, %v1823
      %v1832 = vadd.f32 %v1808, %v1824
      %v1833 = vadd.f32 %v1809, %v1825
      %v1834 = vadd.f32 %v1810, %v1826
      %v1835 = vadd.f32 %v1811, %v1827
      %v1836 = vadd.f32 %v1812, %v1828
      %v1837 = vadd.f32 %v1813, %v1829
      %v1838 = vld [vmem:[%s11] sm:$0x1]
      %v1840 = vlaneseq
      %v1841 = vshrl.u32 %v1840, 7
      %v1842 = vsub.s32 0, %v1841
      %v1843 = vrot.slane %v1838, %v1842
      %v1845 = vadd.f32 %v1830, %v1843
      %v1846 = vadd.f32 %v1831, %v1843
      %v1847 = vadd.f32 %v1832, %v1843
      %v1848 = vadd.f32 %v1833, %v1843
      %v1849 = vadd.f32 %v1834, %v1843
      %v1850 = vadd.f32 %v1835, %v1843
      %v1851 = vadd.f32 %v1836, %v1843
      %v1852 = vadd.f32 %v1837, %v1843
      %v1853 = vmax.f32 %v1845, 0.0
      %v1854 = vmax.f32 %v1846, 0.0
      %v1855 = vmax.f32 %v1847, 0.0
      %v1856 = vmax.f32 %v1848, 0.0
      %v1857 = vmax.f32 %v1849, 0.0
      %v1858 = vmax.f32 %v1850, 0.0
      %v1859 = vmax.f32 %v1851, 0.0
      %v1860 = vmax.f32 %v1852, 0.0
      %1861 = vst [vmem:[%s445] sm:$0xff] %v1853
      %1862 = vst [vmem:[%s445 + $0x8] sm:$0xff] %v1854
      %1863 = vst [vmem:[%s445 + $0x10] sm:$0xff] %v1855
      %1864 = vst [vmem:[%s445 + $0x18] sm:$0xff] %v1856
      %1865 = vst [vmem:[%s445 + $0x20] sm:$0xff] %v1857
      %1866 = vst [vmem:[%s445 + $0x28] sm:$0xff] %v1858
      %1867 = vst [vmem:[%s445 + $0x30] sm:$0xff] %v1859
      %1868 = vst [vmem:[%s445 + $0x38] sm:$0xff] %v1860
      %s1869 = smul.u32 4, %s23
      %p1870 = scmp.lt.s32.totalorder %s1869, 7
      %s1871 = scalar_select %p1870, %s1869, 7
      %s1872 = smul.addr %s1871, 2
      %s1873 = smul.addr %s1872, 8
      %s1874 = scalar_lea.vmem %s12, %s1873
      // Predicated region
      $region69: #{neurosparse_forward.4} parent=67 // pred_check
        %p1875 = pneg %p303
      $region70: #{neurosparse_forward.4} parent=67 // pred_check_branch
        %1877 = sbr.rel (%p1875) target = $region72
      $region71: #{neurosparse_forward.4} parent=67 // pred_region
        %s1878 = smul.u32 4, %s23
      $region72: #{neurosparse_forward.4} parent=67 // pred_fallthru
        _
    $region68: #{neurosparse_forward.4} parent=5 // pred_fallthru
      _
    %p1879 = scmp.le.s32.totalorder 2, %s18
    // Predicated region
    $region73: #{neurosparse_forward.4} parent=5 // pred_check
      %p1880 = pneg %p1879
    $region74: #{neurosparse_forward.4} parent=5 // pred_check_branch
      %1882 = sbr.rel (%p1880) target = $region76
    $region75: #{neurosparse_forward.4} parent=5 // pred_region
      %s1883 = ssub.s32 %s18, 2
      // Predicated region
      $region77: #{neurosparse_forward.4} parent=75 // pred_check
        %p1884 = pneg %p309
      $region78: #{neurosparse_forward.4} parent=75 // pred_check_branch
        %1886 = sbr.rel (%p1884) target = $region80
      $region79: #{neurosparse_forward.4} parent=75 // pred_region
        %s1887 = smul.u32 4, %s24
        %p1888 = scmp.lt.s32.totalorder %s1887, 7
        %s1889 = scalar_select %p1888, %s1887, 7
        %s1890 = smul.addr %s1889, 2
        %s1891 = smul.addr %s1890, 8
        %s1892 = scalar_lea.vmem %s12, %s1891
      $region80: #{neurosparse_forward.4} parent=75 // pred_fallthru
        _
    $region76: #{neurosparse_forward.4} parent=5 // pred_fallthru
      _
  $region6: #{neurosparse_forward.4} parent=0 // loop_footer
    %s22 = sadd.s32 1, %s18
  $region7: #{neurosparse_forward.4} parent=0 // loop_footer_branch
    %17 = sbr.rel target = $region3
  $region8: #{neurosparse_forward.4} parent=0 // loop_exit
    _

// kernel: neurosparse_forward.6
$region0: #{neurosparse_forward.6}
  #allocation0 [shape = 'u32[]', space=smem, size = 0x4, offset = 0x4, fixed_abs, tag = 'smem constant byte address 0x4 - core index']
  #allocation1 [shape = 'u32[144,128]{1,0:T(1,128)}', space=vmem, size = 0x12000, scoped, tag = 'internal scratch']
  #allocation2 [shape = 'f32[8,128]{1,0:T(8,128)}', space=vmem, size = 0x1000, scoped, tag = 'scratch operand']
  %s0 = inlined_call_operand.vmem [shape: bf16[8,256], index: 0, kind: input, shape index: {}]
  %s1 = inlined_call_operand.vmem [shape: s8[8,256], index: 1, kind: input, shape index: {}]
  %s2 = inlined_call_operand.vmem [shape: bf16[256,128], index: 2, kind: input, shape index: {}]
  %s3 = inlined_call_operand.vmem [shape: f32[1,128], index: 3, kind: input, shape index: {}]
  %s4 = inlined_call_operand.vmem [shape: f32[1,128], index: 4, kind: input, shape index: {}]
  %s5 = inlined_call_operand.vmem [shape: f32[1,128], index: 5, kind: input, shape index: {}]
  %s6 = inlined_call_operand.vmem [shape: f32[8,128], index: 6, kind: output, shape index: {}]
  %s7 = sld [smem:[#allocation0]]
  $region42: #{neurosparse_forward.6} parent=0
    _
  %s9 = ssub.s32 1, %s7
  %s10 = scalar_select 0, %s9, %s7
  // Predicated region
  $region2: #{neurosparse_forward.6} parent=0 // pred_check
    _
  $region3: #{neurosparse_forward.6} parent=0 // pred_check_branch
    %12 = sbr.rel (0) target = $region5
  $region4: #{neurosparse_forward.6} parent=0 // pred_region
    _
  $region5: #{neurosparse_forward.6} parent=0 // pred_fallthru
    _
  // Predicated region
  $region6: #{neurosparse_forward.6} parent=0 // pred_check
    _
  $region7: #{neurosparse_forward.6} parent=0 // pred_check_branch
    %14 = sbr.rel (0) target = $region9
  $region8: #{neurosparse_forward.6} parent=0 // pred_region
    _
  $region9: #{neurosparse_forward.6} parent=0 // pred_fallthru
    _
  // Predicated region
  $region10: #{neurosparse_forward.6} parent=0 // pred_check
    _
  $region11: #{neurosparse_forward.6} parent=0 // pred_check_branch
    %16 = sbr.rel (0) target = $region13
  $region12: #{neurosparse_forward.6} parent=0 // pred_region
    _
  $region13: #{neurosparse_forward.6} parent=0 // pred_fallthru
    _
  // Predicated region
  $region14: #{neurosparse_forward.6} parent=0 // pred_check
    _
  $region15: #{neurosparse_forward.6} parent=0 // pred_check_branch
    %18 = sbr.rel (0) target = $region17
  $region16: #{neurosparse_forward.6} parent=0 // pred_region
    _
  $region17: #{neurosparse_forward.6} parent=0 // pred_fallthru
    _
  // Predicated region
  $region18: #{neurosparse_forward.6} parent=0 // pred_check
    _
  $region19: #{neurosparse_forward.6} parent=0 // pred_check_branch
    %20 = sbr.rel (0) target = $region21
  $region20: #{neurosparse_forward.6} parent=0 // pred_region
    _
  $region21: #{neurosparse_forward.6} parent=0 // pred_fallthru
    _
  // Predicated region
  $region22: #{neurosparse_forward.6} parent=0 // pred_check
    _
  $region23: #{neurosparse_forward.6} parent=0 // pred_check_branch
    %22 = sbr.rel (0) target = $region25
  $region24: #{neurosparse_forward.6} parent=0 // pred_region
    _
  $region25: #{neurosparse_forward.6} parent=0 // pred_fallthru
    _
  %p24 = scmp.eq.s32.totalorder 0, 0
  // Predicated region
  $region26: #{neurosparse_forward.6} parent=0 // pred_check
    %p25 = pneg %p24
  $region27: #{neurosparse_forward.6} parent=0 // pred_check_branch
    %27 = sbr.rel (%p25) target = $region29
  $region28: #{neurosparse_forward.6} parent=0 // pred_region
    %28 = vst [vmem:[#allocation2] sm:$0xff] 0.0
  $region29: #{neurosparse_forward.6} parent=0 // pred_fallthru
    _
  %v29 = vld [vmem:[%s1] sm:$0xf]
  %v30 = vunpack.c.l.s8.bf16 %v29
  %v31 = vld [vmem:[%s0] sm:$0xff]
  %v32 = vmul.bf16 %v31, %v30
  %v33 = vld [vmem:[#allocation2] sm:$0xff]
  %v34 = vld [vmem:[%s2] sm:$0xf]
  %v35 = vld [vmem:[%s2 + $0x4] sm:$0xf]
  %v36 = vld [vmem:[%s2 + $0x8] sm:$0xf]
  %v37 = vld [vmem:[%s2 + $0xc] sm:$0xf]
  %v38 = vld [vmem:[%s2 + $0x10] sm:$0xf]
  %v39 = vld [vmem:[%s2 + $0x14] sm:$0xf]
  %v40 = vld [vmem:[%s2 + $0x18] sm:$0xf]
  %v41 = vld [vmem:[%s2 + $0x1c] sm:$0xf]
  %v42 = vld [vmem:[%s2 + $0x20] sm:$0xf]
  %v43 = vld [vmem:[%s2 + $0x24] sm:$0xf]
  %v44 = vld [vmem:[%s2 + $0x28] sm:$0xf]
  %v45 = vld [vmem:[%s2 + $0x2c] sm:$0xf]
  %v46 = vld [vmem:[%s2 + $0x30] sm:$0xf]
  %v47 = vld [vmem:[%s2 + $0x34] sm:$0xf]
  %v48 = vld [vmem:[%s2 + $0x38] sm:$0xf]
  %v49 = vld [vmem:[%s2 + $0x3c] sm:$0xf]
  %v50 = vld [vmem:[%s2 + $0x40] sm:$0xf]
  %v51 = vld [vmem:[%s2 + $0x44] sm:$0xf]
  %v52 = vld [vmem:[%s2 + $0x48] sm:$0xf]
  %v53 = vld [vmem:[%s2 + $0x4c] sm:$0xf]
  %v54 = vld [vmem:[%s2 + $0x50] sm:$0xf]
  %v55 = vld [vmem:[%s2 + $0x54] sm:$0xf]
  %v56 = vld [vmem:[%s2 + $0x58] sm:$0xf]
  %v57 = vld [vmem:[%s2 + $0x5c] sm:$0xf]
  %v58 = vld [vmem:[%s2 + $0x60] sm:$0xf]
  %v59 = vld [vmem:[%s2 + $0x64] sm:$0xf]
  %v60 = vld [vmem:[%s2 + $0x68] sm:$0xf]
  %v61 = vld [vmem:[%s2 + $0x6c] sm:$0xf]
  %v62 = vld [vmem:[%s2 + $0x70] sm:$0xf]
  %v63 = vld [vmem:[%s2 + $0x74] sm:$0xf]
  %v64 = vld [vmem:[%s2 + $0x78] sm:$0xf]
  %v65 = vld [vmem:[%s2 + $0x7c] sm:$0xf]
  %v67 = vunpack.c.l.b16 %v32
  %v68 = vunpack.c.h.b16 %v32
  %v69 = vpack.c.b16 %v67, %v67
  %v70 = vpack.c.b16 %v68, %v68
  %v105 = vunpack.c.l.b16 %v34
  %v106 = vunpack.c.l.b16 %v35
  %v107 = vunpack.c.l.b16 %v36
  %v108 = vunpack.c.l.b16 %v37
  %v109 = vunpack.c.l.b16 %v38
  %v110 = vunpack.c.l.b16 %v39
  %v111 = vunpack.c.l.b16 %v40
  %v112 = vunpack.c.l.b16 %v41
  %v113 = vunpack.c.l.b16 %v42
  %v114 = vunpack.c.l.b16 %v43
  %v115 = vunpack.c.l.b16 %v44
  %v116 = vunpack.c.l.b16 %v45
  %v117 = vunpack.c.l.b16 %v46
  %v118 = vunpack.c.l.b16 %v47
  %v119 = vunpack.c.l.b16 %v48
  %v120 = vunpack.c.l.b16 %v49
  %v121 = vunpack.c.l.b16 %v50
  %v122 = vunpack.c.l.b16 %v51
  %v123 = vunpack.c.l.b16 %v52
  %v124 = vunpack.c.l.b16 %v53
  %v125 = vunpack.c.l.b16 %v54
  %v126 = vunpack.c.l.b16 %v55
  %v127 = vunpack.c.l.b16 %v56
  %v128 = vunpack.c.l.b16 %v57
  %v129 = vunpack.c.l.b16 %v58
  %v130 = vunpack.c.l.b16 %v59
  %v131 = vunpack.c.l.b16 %v60
  %v132 = vunpack.c.l.b16 %v61
  %v133 = vunpack.c.l.b16 %v62
  %v134 = vunpack.c.l.b16 %v63
  %v135 = vunpack.c.l.b16 %v64
  %v136 = vunpack.c.l.b16 %v65
  %v137 = vpack.c.b16 %v106, %v105
  %v138 = vpack.c.b16 %v108, %v107
  %v139 = vpack.c.b16 %v110, %v109
  %v140 = vpack.c.b16 %v112, %v111
  %v141 = vpack.c.b16 %v114, %v113
  %v142 = vpack.c.b16 %v116, %v115
  %v143 = vpack.c.b16 %v118, %v117
  %v144 = vpack.c.b16 %v120, %v119
  %v145 = vpack.c.b16 %v122, %v121
  %v146 = vpack.c.b16 %v124, %v123
  %v147 = vpack.c.b16 %v126, %v125
  %v148 = vpack.c.b16 %v128, %v127
  %v149 = vpack.c.b16 %v130, %v129
  %v150 = vpack.c.b16 %v132, %v131
  %v151 = vpack.c.b16 %v134, %v133
  %v152 = vpack.c.b16 %v136, %v135
  %169 = vmatprep.subr.bf16.mxu0 0
  %170 = vmatpush1.bf16.msra.mxu0 %v137
  %171 = vmatprep.subr.bf16.mxu0 0
  %172 = vmatpush1.bf16.msra.mxu0 %v138
  %173 = vmatprep.subr.bf16.mxu0 0
  %174 = vmatpush1.bf16.msra.mxu0 %v139
  %175 = vmatprep.subr.bf16.mxu0 0
  %176 = vmatpush1.bf16.msra.mxu0 %v140
  %177 = vmatprep.subr.bf16.mxu0 0
  %178 = vmatpush1.bf16.msra.mxu0 %v141
  %179 = vmatprep.subr.bf16.mxu0 0
  %180 = vmatpush1.bf16.msra.mxu0 %v142
  %181 = vmatprep.subr.bf16.mxu0 0
  %182 = vmatpush1.bf16.msra.mxu0 %v143
  %183 = vmatprep.subr.bf16.mxu0 0
  %184 = vmatpush1.bf16.msra.mxu0 %v144
  %185 = vmatprep.subr.bf16.mxu0 0
  %186 = vmatpush1.bf16.msra.mxu0 %v145
  %187 = vmatprep.subr.bf16.mxu0 0
  %188 = vmatpush1.bf16.msra.mxu0 %v146
  %189 = vmatprep.subr.bf16.mxu0 0
  %190 = vmatpush1.bf16.msra.mxu0 %v147
  %191 = vmatprep.subr.bf16.mxu0 0
  %192 = vmatpush1.bf16.msra.mxu0 %v148
  %193 = vmatprep.subr.bf16.mxu0 0
  %194 = vmatpush1.bf16.msra.mxu0 %v149
  %195 = vmatprep.subr.bf16.mxu0 0
  %196 = vmatpush1.bf16.msra.mxu0 %v150
  %197 = vmatprep.subr.bf16.mxu0 0
  %198 = vmatpush1.bf16.msra.mxu0 %v151
  %199 = vmatprep.subr.bf16.mxu0 0
  %200 = vmatpush1.bf16.msra.mxu0 %v152
  %201 = vmatprep.mubr.bf16.mxu0 %v70
  %202 = vmatmul.mubr.bf16.gmra.mrb[0].mxu0 %v69
  %v203 = vpop.f32.mrb[0].mxu0
  %v204 = vadd.f32 0.0, %v203
  %v205 = vpop.f32.mrb[0].mxu0
  %v206 = vpop.f32.mrb[0].mxu0
  %v207 = vpop.f32.mrb[0].mxu0
  %208 = vdwg.mxu0
  %v209 = vadd.f32 %v33, %v204
  %210 = vst [vmem:[#allocation2] sm:$0xff] %v209
  // Predicated region
  $region30: #{neurosparse_forward.6} parent=0 // pred_check
    %p211 = pneg %p24
  $region31: #{neurosparse_forward.6} parent=0 // pred_check_branch
    %213 = sbr.rel (%p211) target = $region33
  $region32: #{neurosparse_forward.6} parent=0 // pred_region
    %v214 = vld [vmem:[#allocation2] sm:$0xff]
    %v215 = vld [vmem:[%s3] sm:$0x1]
    %v217 = vlaneseq
    %v218 = vshrl.u32 %v217, 7
    %v219 = vsub.s32 0, %v218
    %v220 = vrot.slane %v215, %v219
    %v222 = vadd.f32 %v214, %v220
    %v223 = vmax.f32 %v222, 0.0
    %v224 = vld [vmem:[%s4] sm:$0x1]
    %v226 = vlaneseq
    %v227 = vshrl.u32 %v226, 7
    %v228 = vsub.s32 0, %v227
    %v229 = vrot.slane %v224, %v228
    %v231 = vmul.f32 %v223, %v229
    %v232 = vld [vmem:[%s5] sm:$0x1]
    %v234 = vlaneseq
    %v235 = vshrl.u32 %v234, 7
    %v236 = vsub.s32 0, %v235
    %v237 = vrot.slane %v232, %v236
    %v239 = vadd.f32 %v231, %v237
    %240 = vst [vmem:[%s6] sm:$0xff] %v239
  $region33: #{neurosparse_forward.6} parent=0 // pred_fallthru
    _
  // Predicated region
  $region34: #{neurosparse_forward.6} parent=0 // pred_check
    _
  $region35: #{neurosparse_forward.6} parent=0 // pred_check_branch
    %242 = sbr.rel (0) target = $region37
  $region36: #{neurosparse_forward.6} parent=0 // pred_region
    _
  $region37: #{neurosparse_forward.6} parent=0 // pred_fallthru
    _
  // Predicated region
  $region38: #{neurosparse_forward.6} parent=0 // pred_check
    _
  $region39: #{neurosparse_forward.6} parent=0 // pred_check_branch
    %244 = sbr.rel (0) target = $region41
  $region40: #{neurosparse_forward.6} parent=0 // pred_region
    _
  $region41: #{neurosparse_forward.6} parent=0 // pred_fallthru
    _

// kernel: neurosparse_forward.7
$region0: #{neurosparse_forward.7}
  #allocation0 [shape = 'u32[]', space=smem, size = 0x4, offset = 0x4, fixed_abs, tag = 'smem constant byte address 0x4 - core index']
  #allocation1 [shape = 'u32[144,128]{1,0:T(1,128)}', space=vmem, size = 0x12000, scoped, tag = 'internal scratch']
  %s0 = inlined_call_operand.vmem [shape: f32[8,128], index: 0, kind: input, shape index: {}]
  %s1 = inlined_call_operand.vmem [shape: bf16[128,256], index: 1, kind: input, shape index: {}]
  %s2 = inlined_call_operand.vmem [shape: f32[1,256], index: 2, kind: input, shape index: {}]
  %s3 = inlined_call_operand.vmem [shape: f32[1,256], index: 3, kind: input, shape index: {}]
  %s4 = inlined_call_operand.vmem [shape: f32[1,256], index: 4, kind: input, shape index: {}]
  %s5 = inlined_call_operand.vmem [shape: bf16[256,2], index: 5, kind: input, shape index: {}]
  %s6 = inlined_call_operand.vmem [shape: f32[1,2], index: 6, kind: input, shape index: {}]
  %s7 = inlined_call_operand.vmem [shape: f32[8,2], index: 7, kind: output, shape index: {}]
  %s8 = sld [smem:[#allocation0]]
  $region38: #{neurosparse_forward.7} parent=0
    _
  %s10 = ssub.s32 1, %s8
  %s11 = scalar_select 0, %s10, %s8
  // Predicated region
  $region2: #{neurosparse_forward.7} parent=0 // pred_check
    _
  $region3: #{neurosparse_forward.7} parent=0 // pred_check_branch
    %13 = sbr.rel (0) target = $region5
  $region4: #{neurosparse_forward.7} parent=0 // pred_region
    _
  $region5: #{neurosparse_forward.7} parent=0 // pred_fallthru
    _
  // Predicated region
  $region6: #{neurosparse_forward.7} parent=0 // pred_check
    _
  $region7: #{neurosparse_forward.7} parent=0 // pred_check_branch
    %15 = sbr.rel (0) target = $region9
  $region8: #{neurosparse_forward.7} parent=0 // pred_region
    _
  $region9: #{neurosparse_forward.7} parent=0 // pred_fallthru
    _
  // Predicated region
  $region10: #{neurosparse_forward.7} parent=0 // pred_check
    _
  $region11: #{neurosparse_forward.7} parent=0 // pred_check_branch
    %17 = sbr.rel (0) target = $region13
  $region12: #{neurosparse_forward.7} parent=0 // pred_region
    _
  $region13: #{neurosparse_forward.7} parent=0 // pred_fallthru
    _
  // Predicated region
  $region14: #{neurosparse_forward.7} parent=0 // pred_check
    _
  $region15: #{neurosparse_forward.7} parent=0 // pred_check_branch
    %19 = sbr.rel (0) target = $region17
  $region16: #{neurosparse_forward.7} parent=0 // pred_region
    _
  $region17: #{neurosparse_forward.7} parent=0 // pred_fallthru
    _
  // Predicated region
  $region18: #{neurosparse_forward.7} parent=0 // pred_check
    _
  $region19: #{neurosparse_forward.7} parent=0 // pred_check_branch
    %21 = sbr.rel (0) target = $region21
  $region20: #{neurosparse_forward.7} parent=0 // pred_region
    _
  $region21: #{neurosparse_forward.7} parent=0 // pred_fallthru
    _
  // Predicated region
  $region22: #{neurosparse_forward.7} parent=0 // pred_check
    _
  $region23: #{neurosparse_forward.7} parent=0 // pred_check_branch
    %23 = sbr.rel (0) target = $region25
  $region24: #{neurosparse_forward.7} parent=0 // pred_region
    _
  $region25: #{neurosparse_forward.7} parent=0 // pred_fallthru
    _
  // Predicated region
  $region26: #{neurosparse_forward.7} parent=0 // pred_check
    _
  $region27: #{neurosparse_forward.7} parent=0 // pred_check_branch
    %25 = sbr.rel (0) target = $region29
  $region28: #{neurosparse_forward.7} parent=0 // pred_region
    _
  $region29: #{neurosparse_forward.7} parent=0 // pred_fallthru
    _
  %v27 = vld [vmem:[%s0] sm:$0xff]
  %v28 = vpack.c.bf16 %v27, %v27
  %v29 = vld [vmem:[%s1] sm:$0xff]
  %v30 = vld [vmem:[%s1 + $0x8] sm:$0xff]
  %v31 = vld [vmem:[%s1 + $0x10] sm:$0xff]
  %v32 = vld [vmem:[%s1 + $0x18] sm:$0xff]
  %v33 = vld [vmem:[%s1 + $0x20] sm:$0xff]
  %v34 = vld [vmem:[%s1 + $0x28] sm:$0xff]
  %v35 = vld [vmem:[%s1 + $0x30] sm:$0xff]
  %v36 = vld [vmem:[%s1 + $0x38] sm:$0xff]
  %v37 = vld [vmem:[%s1 + $0x40] sm:$0xff]
  %v38 = vld [vmem:[%s1 + $0x48] sm:$0xff]
  %v39 = vld [vmem:[%s1 + $0x50] sm:$0xff]
  %v40 = vld [vmem:[%s1 + $0x58] sm:$0xff]
  %v41 = vld [vmem:[%s1 + $0x60] sm:$0xff]
  %v42 = vld [vmem:[%s1 + $0x68] sm:$0xff]
  %v43 = vld [vmem:[%s1 + $0x70] sm:$0xff]
  %v44 = vld [vmem:[%s1 + $0x78] sm:$0xff]
  %v45 = vld [vmem:[%s2] sm:$0x3]
  %v47 = vlaneseq
  %v48 = vshrl.u32 %v47, 7
  %v49 = vsub.s32 0, %v48
  %v50 = vrot.slane %v45, %v49
  %v51 = vlaneseq
  %v52 = vshrl.u32 %v51, 7
  %v53 = vsub.s32 1, %v52
  %v54 = vrot.slane %v45, %v53
  %v73 = vunpack.c.l.b16 %v29
  %v74 = vunpack.c.h.b16 %v29
  %v75 = vunpack.c.l.b16 %v30
  %v76 = vunpack.c.h.b16 %v30
  %v77 = vunpack.c.l.b16 %v31
  %v78 = vunpack.c.h.b16 %v31
  %v79 = vunpack.c.l.b16 %v32
  %v80 = vunpack.c.h.b16 %v32
  %v81 = vunpack.c.l.b16 %v33
  %v82 = vunpack.c.h.b16 %v33
  %v83 = vunpack.c.l.b16 %v34
  %v84 = vunpack.c.h.b16 %v34
  %v85 = vunpack.c.l.b16 %v35
  %v86 = vunpack.c.h.b16 %v35
  %v87 = vunpack.c.l.b16 %v36
  %v88 = vunpack.c.h.b16 %v36
  %v89 = vunpack.c.l.b16 %v37
  %v90 = vunpack.c.h.b16 %v37
  %v91 = vunpack.c.l.b16 %v38
  %v92 = vunpack.c.h.b16 %v38
  %v93 = vunpack.c.l.b16 %v39
  %v94 = vunpack.c.h.b16 %v39
  %v95 = vunpack.c.l.b16 %v40
  %v96 = vunpack.c.h.b16 %v40
  %v97 = vunpack.c.l.b16 %v41
  %v98 = vunpack.c.h.b16 %v41
  %v99 = vunpack.c.l.b16 %v42
  %v100 = vunpack.c.h.b16 %v42
  %v101 = vunpack.c.l.b16 %v43
  %v102 = vunpack.c.h.b16 %v43
  %v103 = vunpack.c.l.b16 %v44
  %v104 = vunpack.c.h.b16 %v44
  %v105 = vpack.c.b16 %v75, %v73
  %v106 = vpack.c.b16 %v76, %v74
  %v107 = vpack.c.b16 %v79, %v77
  %v108 = vpack.c.b16 %v80, %v78
  %v109 = vpack.c.b16 %v83, %v81
  %v110 = vpack.c.b16 %v84, %v82
  %v111 = vpack.c.b16 %v87, %v85
  %v112 = vpack.c.b16 %v88, %v86
  %v113 = vpack.c.b16 %v91, %v89
  %v114 = vpack.c.b16 %v92, %v90
  %v115 = vpack.c.b16 %v95, %v93
  %v116 = vpack.c.b16 %v96, %v94
  %v117 = vpack.c.b16 %v99, %v97
  %v118 = vpack.c.b16 %v100, %v98
  %v119 = vpack.c.b16 %v103, %v101
  %v120 = vpack.c.b16 %v104, %v102
  %137 = vmatprep.subr.bf16.mxu0 %v106
  %138 = vmatpush1.bf16.msra.mxu0 %v105
  %139 = vmatprep.subr.bf16.mxu0 %v108
  %140 = vmatpush1.bf16.msra.mxu0 %v107
  %141 = vmatprep.subr.bf16.mxu0 %v110
  %142 = vmatpush1.bf16.msra.mxu0 %v109
  %143 = vmatprep.subr.bf16.mxu0 %v112
  %144 = vmatpush1.bf16.msra.mxu0 %v111
  %145 = vmatprep.subr.bf16.mxu0 %v114
  %146 = vmatpush1.bf16.msra.mxu0 %v113
  %147 = vmatprep.subr.bf16.mxu0 %v116
  %148 = vmatpush1.bf16.msra.mxu0 %v115
  %149 = vmatprep.subr.bf16.mxu0 %v118
  %150 = vmatpush1.bf16.msra.mxu0 %v117
  %151 = vmatprep.subr.bf16.mxu0 %v120
  %152 = vmatpush1.bf16.msra.mxu0 %v119
  %153 = vmatprep.subr.bf16.mxu0 0
  %154 = vmatpush1.bf16.msra.mxu0 0
  %155 = vmatprep.subr.bf16.mxu0 0
  %156 = vmatpush1.bf16.msra.mxu0 0
  %157 = vmatprep.subr.bf16.mxu0 0
  %158 = vmatpush1.bf16.msra.mxu0 0
  %159 = vmatprep.subr.bf16.mxu0 0
  %160 = vmatpush1.bf16.msra.mxu0 0
  %161 = vmatprep.subr.bf16.mxu0 0
  %162 = vmatpush1.bf16.msra.mxu0 0
  %163 = vmatprep.subr.bf16.mxu0 0
  %164 = vmatpush1.bf16.msra.mxu0 0
  %165 = vmatprep.subr.bf16.mxu0 0
  %166 = vmatpush1.bf16.msra.mxu0 0
  %167 = vmatprep.subr.bf16.mxu0 0
  %168 = vmatpush1.bf16.msra.mxu0 0
  %169 = vmatprep.mubr.bf16.mxu0 0
  %170 = vmatmul.mubr.bf16.gmra.mrb[0].mxu0 %v28
  %v171 = vpop.f32.mrb[0].mxu0
  %v172 = vadd.f32 %v50, %v171
  %v173 = vpop.f32.mrb[0].mxu0
  %v174 = vadd.f32 %v54, %v173
  %v175 = vpop.f32.mrb[0].mxu0
  %v176 = vpop.f32.mrb[0].mxu0
  %177 = vdwg.mxu0
  %v178 = vmax.f32 %v172, 0.0
  %v179 = vmax.f32 %v174, 0.0
  %v180 = vld [vmem:[%s3] sm:$0x3]
  %v182 = vlaneseq
  %v183 = vshrl.u32 %v182, 7
  %v184 = vsub.s32 0, %v183
  %v185 = vrot.slane %v180, %v184
  %v186 = vlaneseq
  %v187 = vshrl.u32 %v186, 7
  %v188 = vsub.s32 1, %v187
  %v189 = vrot.slane %v180, %v188
  %v192 = vmul.f32 %v178, %v185
  %v193 = vmul.f32 %v179, %v189
  %v194 = vld [vmem:[%s4] sm:$0x3]
  %v196 = vlaneseq
  %v197 = vshrl.u32 %v196, 7
  %v198 = vsub.s32 0, %v197
  %v199 = vrot.slane %v194, %v198
  %v200 = vlaneseq
  %v201 = vshrl.u32 %v200, 7
  %v202 = vsub.s32 1, %v201
  %v203 = vrot.slane %v194, %v202
  %v206 = vadd.f32 %v192, %v199
  %v207 = vadd.f32 %v193, %v203
  %v208 = vpack.c.bf16 %v206, %v206
  %v209 = vpack.c.bf16 %v207, %v207
  %v210 = vld [vmem:[%s5] sm:$0xf]
  %v211 = vld [vmem:[%s5 + $0x4] sm:$0xf]
  %v212 = vld [vmem:[%s5 + $0x8] sm:$0xf]
  %v213 = vld [vmem:[%s5 + $0xc] sm:$0xf]
  %v214 = vld [vmem:[%s5 + $0x10] sm:$0xf]
  %v215 = vld [vmem:[%s5 + $0x14] sm:$0xf]
  %v216 = vld [vmem:[%s5 + $0x18] sm:$0xf]
  %v217 = vld [vmem:[%s5 + $0x1c] sm:$0xf]
  %v218 = vld [vmem:[%s5 + $0x20] sm:$0xf]
  %v219 = vld [vmem:[%s5 + $0x24] sm:$0xf]
  %v220 = vld [vmem:[%s5 + $0x28] sm:$0xf]
  %v221 = vld [vmem:[%s5 + $0x2c] sm:$0xf]
  %v222 = vld [vmem:[%s5 + $0x30] sm:$0xf]
  %v223 = vld [vmem:[%s5 + $0x34] sm:$0xf]
  %v224 = vld [vmem:[%s5 + $0x38] sm:$0xf]
  %v225 = vld [vmem:[%s5 + $0x3c] sm:$0xf]
  %v226 = vld [vmem:[%s5 + $0x40] sm:$0xf]
  %v227 = vld [vmem:[%s5 + $0x44] sm:$0xf]
  %v228 = vld [vmem:[%s5 + $0x48] sm:$0xf]
  %v229 = vld [vmem:[%s5 + $0x4c] sm:$0xf]
  %v230 = vld [vmem:[%s5 + $0x50] sm:$0xf]
  %v231 = vld [vmem:[%s5 + $0x54] sm:$0xf]
  %v232 = vld [vmem:[%s5 + $0x58] sm:$0xf]
  %v233 = vld [vmem:[%s5 + $0x5c] sm:$0xf]
  %v234 = vld [vmem:[%s5 + $0x60] sm:$0xf]
  %v235 = vld [vmem:[%s5 + $0x64] sm:$0xf]
  %v236 = vld [vmem:[%s5 + $0x68] sm:$0xf]
  %v237 = vld [vmem:[%s5 + $0x6c] sm:$0xf]
  %v238 = vld [vmem:[%s5 + $0x70] sm:$0xf]
  %v239 = vld [vmem:[%s5 + $0x74] sm:$0xf]
  %v240 = vld [vmem:[%s5 + $0x78] sm:$0xf]
  %v241 = vld [vmem:[%s5 + $0x7c] sm:$0xf]
  %v242 = vld [vmem:[%s6] sm:$0x1]
  %v244 = vlaneseq
  %v245 = vshrl.u32 %v244, 7
  %v246 = vsub.s32 0, %v245
  %v247 = vrot.slane %v242, %v246
  %v281 = vunpack.c.l.b16 %v210
  %v282 = vunpack.c.l.b16 %v211
  %v283 = vunpack.c.l.b16 %v212
  %v284 = vunpack.c.l.b16 %v213
  %v285 = vunpack.c.l.b16 %v214
  %v286 = vunpack.c.l.b16 %v215
  %v287 = vunpack.c.l.b16 %v216
  %v288 = vunpack.c.l.b16 %v217
  %v289 = vunpack.c.l.b16 %v218
  %v290 = vunpack.c.l.b16 %v219
  %v291 = vunpack.c.l.b16 %v220
  %v292 = vunpack.c.l.b16 %v221
  %v293 = vunpack.c.l.b16 %v222
  %v294 = vunpack.c.l.b16 %v223
  %v295 = vunpack.c.l.b16 %v224
  %v296 = vunpack.c.l.b16 %v225
  %v297 = vunpack.c.l.b16 %v226
  %v298 = vunpack.c.l.b16 %v227
  %v299 = vunpack.c.l.b16 %v228
  %v300 = vunpack.c.l.b16 %v229
  %v301 = vunpack.c.l.b16 %v230
  %v302 = vunpack.c.l.b16 %v231
  %v303 = vunpack.c.l.b16 %v232
  %v304 = vunpack.c.l.b16 %v233
  %v305 = vunpack.c.l.b16 %v234
  %v306 = vunpack.c.l.b16 %v235
  %v307 = vunpack.c.l.b16 %v236
  %v308 = vunpack.c.l.b16 %v237
  %v309 = vunpack.c.l.b16 %v238
  %v310 = vunpack.c.l.b16 %v239
  %v311 = vunpack.c.l.b16 %v240
  %v312 = vunpack.c.l.b16 %v241
  %v313 = vpack.c.b16 %v282, %v281
  %v314 = vpack.c.b16 %v284, %v283
  %v315 = vpack.c.b16 %v286, %v285
  %v316 = vpack.c.b16 %v288, %v287
  %v317 = vpack.c.b16 %v290, %v289
  %v318 = vpack.c.b16 %v292, %v291
  %v319 = vpack.c.b16 %v294, %v293
  %v320 = vpack.c.b16 %v296, %v295
  %v321 = vpack.c.b16 %v298, %v297
  %v322 = vpack.c.b16 %v300, %v299
  %v323 = vpack.c.b16 %v302, %v301
  %v324 = vpack.c.b16 %v304, %v303
  %v325 = vpack.c.b16 %v306, %v305
  %v326 = vpack.c.b16 %v308, %v307
  %v327 = vpack.c.b16 %v310, %v309
  %v328 = vpack.c.b16 %v312, %v311
  %345 = vmatprep.subr.bf16.mxu0 0
  %346 = vmatpush1.bf16.msra.mxu0 %v313
  %347 = vmatprep.subr.bf16.mxu0 0
  %348 = vmatpush1.bf16.msra.mxu0 %v314
  %349 = vmatprep.subr.bf16.mxu0 0
  %350 = vmatpush1.bf16.msra.mxu0 %v315
  %351 = vmatprep.subr.bf16.mxu0 0
  %352 = vmatpush1.bf16.msra.mxu0 %v316
  %353 = vmatprep.subr.bf16.mxu0 0
  %354 = vmatpush1.bf16.msra.mxu0 %v317
  %355 = vmatprep.subr.bf16.mxu0 0
  %356 = vmatpush1.bf16.msra.mxu0 %v318
  %357 = vmatprep.subr.bf16.mxu0 0
  %358 = vmatpush1.bf16.msra.mxu0 %v319
  %359 = vmatprep.subr.bf16.mxu0 0
  %360 = vmatpush1.bf16.msra.mxu0 %v320
  %361 = vmatprep.subr.bf16.mxu0 0
  %362 = vmatpush1.bf16.msra.mxu0 %v321
  %363 = vmatprep.subr.bf16.mxu0 0
  %364 = vmatpush1.bf16.msra.mxu0 %v322
  %365 = vmatprep.subr.bf16.mxu0 0
  %366 = vmatpush1.bf16.msra.mxu0 %v323
  %367 = vmatprep.subr.bf16.mxu0 0
  %368 = vmatpush1.bf16.msra.mxu0 %v324
  %369 = vmatprep.subr.bf16.mxu0 0
  %370 = vmatpush1.bf16.msra.mxu0 %v325
  %371 = vmatprep.subr.bf16.mxu0 0
  %372 = vmatpush1.bf16.msra.mxu0 %v326
  %373 = vmatprep.subr.bf16.mxu0 0
  %374 = vmatpush1.bf16.msra.mxu0 %v327
  %375 = vmatprep.subr.bf16.mxu0 0
  %376 = vmatpush1.bf16.msra.mxu0 %v328
  %377 = vmatprep.mubr.bf16.mxu0 %v209
  %378 = vmatmul.mubr.bf16.gmra.mrb[0].mxu0 %v208
  %v379 = vpop.f32.mrb[0].mxu0
  %v380 = vadd.f32 %v247, %v379
  %v381 = vpop.f32.mrb[0].mxu0
  %v382 = vpop.f32.mrb[0].mxu0
  %v383 = vpop.f32.mrb[0].mxu0
  %384 = vdwg.mxu0
  %vm385 = vcmask 15360
  %v386 = vsel %vm385, %v380, -inf
  %387 = vmax.xlane.f32.xlu0 %v386
  %v388 = vpop.xlane.xlu0 %387
  %v389 = vsub.f32 %v380, %v388
  %v390 = vmul.f32 %v389, 1.442695
  %v391 = vpow.pop %v390
  %v392 = vsel %vm385, %v391, 0.0
  %393 = vadd.xlane.f32.xlu0 %v392
  %v394 = vpop.xlane.xlu0 %393
  %v395 = vlog2.pop %v394
  %v396 = vmul.f32 %v395, 0.6931472
  %v397 = vsub.f32 %v389, %v396
  %398 = vst.msk [vmem:[%s7] sm:$0xff] %vm385, %v397
  // Predicated region
  $region30: #{neurosparse_forward.7} parent=0 // pred_check
    _
  $region31: #{neurosparse_forward.7} parent=0 // pred_check_branch
    %400 = sbr.rel (0) target = $region33
  $region32: #{neurosparse_forward.7} parent=0 // pred_region
    _
  $region33: #{neurosparse_forward.7} parent=0 // pred_fallthru
    _
  // Predicated region
  $region34: #{neurosparse_forward.7} parent=0 // pred_check
    _
  $region35: #{neurosparse_forward.7} parent=0 // pred_check_branch
    %402 = sbr.rel (0) target = $region37
  $region36: #{neurosparse_forward.7} parent=0 // pred_region
    _
  $region37: #{neurosparse_forward.7} parent=0 // pred_fallthru
    _

</llo_original>
